<compile_context>
chip_gen: v7x
topology: tpu7x:2x2x1
jax: 0.10.0
libtpu: 0.0.40
codegen_flags: <defaults>
</compile_context>

<pallas_src>
import numpy as np
import jax
import jax.numpy as jnp
from jax.experimental import pallas as pl
from jax.experimental.pallas import tpu as pltpu  # noqa: F401  (kept for TPU backend parity)

# ---- small-but-aligned shapes consistent with the module (hidden_size -> 128) ----
H = 128                 # hidden_size
FF = 4 * H              # MLP expansion (hidden_size * 4)
B = 8                   # batch
NUM_MLP = 4             # len(generator_layers)
NUM_CONTENT_TYPES = 5
EMB_ROWS = 8            # embedding table padded to a sublane multiple
LN_EPS = 1e-5           # PyTorch LayerNorm default

LAYOUT_H, LAYOUT_OUT = 512, 512
COLOR_H, COLOR_OUT = 256, 15          # reshaped to (B, 5, 3) outside the kernel
TYPO_H, TYPO_OUT = 128, 64
QUAL_H, QUAL_OUT = 64, 1

# fused first-layer head: [layout | color | typo | quality | pad] on the lane axis
LAY_OFF1 = 0
COL_OFF1 = LAYOUT_H
TYP_OFF1 = LAYOUT_H + COLOR_H
QUA_OFF1 = LAYOUT_H + COLOR_H + TYPO_H
HEAD1 = LAYOUT_H + COLOR_H + TYPO_H + QUAL_H     # 960
HEAD1_PAD = 1024

# fused small output slab: [color(15) | typo(64) | quality(1) | pad] -> 128 lanes
COL_OFF = 0
TYP_OFF = COLOR_OUT                               # 15
QUA_OFF = COLOR_OUT + TYPO_OUT                    # 79
SMALL_PAD = 128


def _content_generator_kernel(
    x_ref, ids_ref, emb_ref,
    bc_w_ref, bc_b_ref, ln_g_ref, ln_b_ref,
    mlp_w1_ref, mlp_b1_ref, mlp_w2_ref, mlp_b2_ref,
    head_w1_ref, head_b1_ref, lay_w2_ref, lay_b2_ref,
    small_w2_ref, small_b2_ref,
    layout_out_ref, small_out_ref,
):
    bf16 = jnp.bfloat16
    f32 = jnp.float32

    # ---- brand_conditioning: Linear -> LayerNorm -> ReLU  (Dropout = id in eval) ----
    x = x_ref[...]                                               # (B, H) f32
    h = jnp.dot(x.astype(bf16), bc_w_ref[...],
                preferred_element_type=f32) + bc_b_ref[...]
    mu = jnp.mean(h, axis=-1, keepdims=True)
    var = jnp.mean(jnp.square(h - mu), axis=-1, keepdims=True)
    h = (h - mu) * jax.lax.rsqrt(var + LN_EPS)
    h = h * ln_g_ref[...] + ln_b_ref[...]
    h = jnp.maximum(h, 0.0)

    # ---- content_type_embedding lookup: one-hot matmul (single tiny MXU pass) ----
    ids = ids_ref[...]                                           # (B, 1) int32
    row_iota = jax.lax.broadcasted_iota(jnp.int32, (B, EMB_ROWS), 1)
    onehot = (row_iota == ids).astype(f32)                       # (B, EMB_ROWS)
    emb = jnp.dot(onehot, emb_ref[...], preferred_element_type=f32)  # (B, H)

    c = h + emb                                                  # running activation (f32)

    # ---- 4 residual MLP blocks, statically unrolled (activation stays in vregs) ----
    # TODO(synk): OptimizedMLP body not given; assumed Linear(H,4H)->GELU->Linear(4H,H)
    # (tanh-approx GELU; use gelu(approximate=False) if erf-parity with nn.GELU needed).
    for l in range(NUM_MLP):
        y = jnp.dot(c.astype(bf16), mlp_w1_ref[l],
                    preferred_element_type=f32) + mlp_b1_ref[l]
        y = jax.nn.gelu(y)
        y = jnp.dot(y.astype(bf16), mlp_w2_ref[l],
                    preferred_element_type=f32) + mlp_b2_ref[l]
        c = y + c

    # ---- fused, lane-dense output heads ----
    cb = c.astype(bf16)
    # one lane-dense matmul for all four head first layers
    t = jnp.dot(cb, head_w1_ref[...],
                preferred_element_type=f32) + head_b1_ref[...]
    t = jnp.maximum(t, 0.0)
    tb = t.astype(bf16)
    # layout head second layer: (B, 512) lane-dense output
    layout_out_ref[...] = (
        jnp.dot(tb[:, :LAYOUT_H], lay_w2_ref[...],
                preferred_element_type=f32) + lay_b2_ref[...])
    # color + typo + quality second layers fused into one padded (B, 128) slab
    small = jnp.dot(tb, small_w2_ref[...],
                    preferred_element_type=f32) + small_b2_ref[...]
    col_idx = jax.lax.broadcasted_iota(jnp.int32, (B, SMALL_PAD), 1)
    small = jnp.where(col_idx == QUA_OFF, jax.nn.sigmoid(small), small)
    small_out_ref[...] = small


def _build_pallas_fn():
    # No grid, no BlockSpecs: every operand is a single full-array block resident
    # in VMEM for the whole call (total weight footprint ~2.3 MiB << VMEM budget
    # on v5e/v6e/v7x).  This removes all per-grid-step overhead.
    return pl.pallas_call(
        _content_generator_kernel,
        out_shape=(
            jax.ShapeDtypeStruct((B, LAYOUT_OUT), jnp.float32),
            jax.ShapeDtypeStruct((B, SMALL_PAD), jnp.float32),
        ),
    )


@jax.jit
def content_generator_forward(brand_profile, content_type_ids, params):
    """Fused forward pass. Returns dict mirroring the PyTorch module's outputs."""
    ids2d = content_type_ids.astype(jnp.int32).reshape(B, 1)
    layout, small = _build_pallas_fn()(
        brand_profile, ids2d, params["emb_table"],
        params["bc_w"], params["bc_b"], params["ln_g"], params["ln_b"],
        params["mlp_w1"], params["mlp_b1"], params["mlp_w2"], params["mlp_b2"],
        params["head_w1"], params["head_b1"],
        params["lay_w2"], params["lay_b2"],
        params["small_w2"], params["small_b2"],
    )
    return {
        "layout_features": layout,
        "color_scheme": small[:, COL_OFF:COL_OFF + COLOR_OUT].reshape(B, 5, 3),
        "typography_params": small[:, TYP_OFF:TYP_OFF + TYPO_OUT],
        "quality_score": small[:, QUA_OFF:QUA_OFF + QUAL_OUT],
    }


def init_params(key):
    """Deterministic PyTorch-like init, then pack into the fused/bf16 kernel layout."""
    ki = iter(jax.random.split(key, 40))

    def lin(fan_in, fan_out):
        kw, kb = jax.random.split(next(ki))
        bound = 1.0 / (fan_in ** 0.5)
        w = jax.random.uniform(kw, (fan_in, fan_out), jnp.float32, -bound, bound)
        b = jax.random.uniform(kb, (fan_out,), jnp.float32, -bound, bound)
        return w, b

    bc_w, bc_b = lin(H, H)
    emb = jax.random.normal(next(ki), (NUM_CONTENT_TYPES, H), jnp.float32)

    w1s, b1s, w2s, b2s = [], [], [], []
    for _ in range(NUM_MLP):
        w1, b1 = lin(H, FF)
        w2, b2 = lin(FF, H)
        w1s.append(w1); b1s.append(b1.reshape(1, FF))
        w2s.append(w2); b2s.append(b2.reshape(1, H))

    lay_w1, lay_b1 = lin(H, LAYOUT_H); lay_w2, lay_b2 = lin(LAYOUT_H, LAYOUT_OUT)
    col_w1, col_b1 = lin(H, COLOR_H);  col_w2, col_b2 = lin(COLOR_H, COLOR_OUT)
    typ_w1, typ_b1 = lin(H, TYPO_H);   typ_w2, typ_b2 = lin(TYPO_H, TYPO_OUT)
    qua_w1, qua_b1 = lin(H, QUAL_H);   qua_w2, qua_b2 = lin(QUAL_H, QUAL_OUT)

    # fused, zero-padded first head layer (lane-dense 128x1024)
    head_w1 = jnp.zeros((H, HEAD1_PAD), jnp.float32)
    head_w1 = head_w1.at[:, LAY_OFF1:LAY_OFF1 + LAYOUT_H].set(lay_w1)
    head_w1 = head_w1.at[:, COL_OFF1:COL_OFF1 + COLOR_H].set(col_w1)
    head_w1 = head_w1.at[:, TYP_OFF1:TYP_OFF1 + TYPO_H].set(typ_w1)
    head_w1 = head_w1.at[:, QUA_OFF1:QUA_OFF1 + QUAL_H].set(qua_w1)
    head_b1 = jnp.zeros((1, HEAD1_PAD), jnp.float32)
    head_b1 = head_b1.at[0, LAY_OFF1:LAY_OFF1 + LAYOUT_H].set(lay_b1)
    head_b1 = head_b1.at[0, COL_OFF1:COL_OFF1 + COLOR_H].set(col_b1)
    head_b1 = head_b1.at[0, TYP_OFF1:TYP_OFF1 + TYPO_H].set(typ_b1)
    head_b1 = head_b1.at[0, QUA_OFF1:QUA_OFF1 + QUAL_H].set(qua_b1)

    # block-structured fused second layer for the small heads (1024x128)
    small_w2 = jnp.zeros((HEAD1_PAD, SMALL_PAD), jnp.float32)
    small_w2 = small_w2.at[COL_OFF1:COL_OFF1 + COLOR_H,
                           COL_OFF:COL_OFF + COLOR_OUT].set(col_w2)
    small_w2 = small_w2.at[TYP_OFF1:TYP_OFF1 + TYPO_H,
                           TYP_OFF:TYP_OFF + TYPO_OUT].set(typ_w2)
    small_w2 = small_w2.at[QUA_OFF1:QUA_OFF1 + QUAL_H,
                           QUA_OFF:QUA_OFF + QUAL_OUT].set(qua_w2)
    small_b2 = jnp.zeros((1, SMALL_PAD), jnp.float32)
    small_b2 = small_b2.at[0, COL_OFF:COL_OFF + COLOR_OUT].set(col_b2)
    small_b2 = small_b2.at[0, TYP_OFF:TYP_OFF + TYPO_OUT].set(typ_b2)
    small_b2 = small_b2.at[0, QUA_OFF:QUA_OFF + QUAL_OUT].set(qua_b2)

    emb_table = jnp.zeros((EMB_ROWS, H), jnp.float32).at[:NUM_CONTENT_TYPES].set(emb)

    return {
        "bc_w": bc_w.astype(jnp.bfloat16),
        "bc_b": bc_b.reshape(1, H),
        "ln_g": jnp.ones((1, H), jnp.float32),
        "ln_b": jnp.zeros((1, H), jnp.float32),
        "emb_table": emb_table,
        "mlp_w1": jnp.stack(w1s).astype(jnp.bfloat16),   # (4, H, FF)
        "mlp_b1": jnp.stack(b1s),                        # (4, 1, FF)
        "mlp_w2": jnp.stack(w2s).astype(jnp.bfloat16),   # (4, FF, H)
        "mlp_b2": jnp.stack(b2s),                        # (4, 1, H)
        "head_w1": head_w1.astype(jnp.bfloat16),
        "head_b1": head_b1,
        "lay_w2": lay_w2.astype(jnp.bfloat16),
        "lay_b2": lay_b2.reshape(1, LAYOUT_OUT),
        "small_w2": small_w2.astype(jnp.bfloat16),
        "small_b2": small_b2,
    }


def _forward_reference(brand_profile, content_type_ids, p):
    """Plain-JAX reference with identical math (same bf16 cast points)."""
    bf16, f32 = jnp.bfloat16, jnp.float32
    h = jnp.dot(brand_profile.astype(bf16), p["bc_w"],
                preferred_element_type=f32) + p["bc_b"]
    mu = jnp.mean(h, axis=-1, keepdims=True)
    var = jnp.mean(jnp.square(h - mu), axis=-1, keepdims=True)
    h = (h - mu) * jax.lax.rsqrt(var + LN_EPS)
    h = h * p["ln_g"] + p["ln_b"]
    h = jnp.maximum(h, 0.0)
    c = h + p["emb_table"][content_type_ids]
    for l in range(NUM_MLP):
        y = jnp.dot(c.astype(bf16), p["mlp_w1"][l],
                    preferred_element_type=f32) + p["mlp_b1"][l]
        y = jax.nn.gelu(y)
        y = jnp.dot(y.astype(bf16), p["mlp_w2"][l],
                    preferred_element_type=f32) + p["mlp_b2"][l]
        c = y + c
    cb = c.astype(bf16)
    t = jnp.dot(cb, p["head_w1"], preferred_element_type=f32) + p["head_b1"]
    t = jnp.maximum(t, 0.0)
    tb = t.astype(bf16)
    layout = jnp.dot(tb[:, :LAYOUT_H], p["lay_w2"],
                     preferred_element_type=f32) + p["lay_b2"]
    small = jnp.dot(tb, p["small_w2"], preferred_element_type=f32) + p["small_b2"]
    return {
        "layout_features": layout,
        "color_scheme": small[:, COL_OFF:COL_OFF + COLOR_OUT].reshape(B, 5, 3),
        "typography_params": small[:, TYP_OFF:TYP_OFF + TYPO_OUT],
        "quality_score": jax.nn.sigmoid(small[:, QUA_OFF:QUA_OFF + QUAL_OUT]),
    }


if __name__ == "__main__":
    root = jax.random.PRNGKey(0)
    k_param, k_x, k_ids = jax.random.split(root, 3)

    params = init_params(k_param)
    brand_profile = jax.random.normal(k_x, (B, H), jnp.float32)
    content_type_ids = jax.random.randint(k_ids, (B,), 0, NUM_CONTENT_TYPES)

    outputs = content_generator_forward(brand_profile, content_type_ids, params)
    jax.block_until_ready(outputs)

    assert outputs["layout_features"].shape == (B, LAYOUT_OUT)
    assert outputs["color_scheme"].shape == (B, 5, 3)
    assert outputs["typography_params"].shape == (B, TYPO_OUT)
    assert outputs["quality_score"].shape == (B, QUAL_OUT)

    ref = _forward_reference(brand_profile, content_type_ids, params)
    for k in outputs:
        np.testing.assert_allclose(np.asarray(outputs[k]), np.asarray(ref[k]),
                                   rtol=0.1, atol=0.1)

    print("KERNEL_OK")
</pallas_src>

<mosaic_0001>
module attributes {stable_mosaic.version = 11 : i64} {
  func.func @_content_generator_kernel(%arg0: memref<8x128xf32, #tpu.memory_space<vmem>>, %arg1: memref<8x1xi32, #tpu.memory_space<vmem>>, %arg2: memref<8x128xf32, #tpu.memory_space<vmem>>, %arg3: memref<128x128xbf16, #tpu.memory_space<vmem>>, %arg4: memref<1x128xf32, #tpu.memory_space<vmem>>, %arg5: memref<1x128xf32, #tpu.memory_space<vmem>>, %arg6: memref<1x128xf32, #tpu.memory_space<vmem>>, %arg7: memref<4x128x512xbf16, #tpu.memory_space<vmem>>, %arg8: memref<4x1x512xf32, #tpu.memory_space<vmem>>, %arg9: memref<4x512x128xbf16, #tpu.memory_space<vmem>>, %arg10: memref<4x1x128xf32, #tpu.memory_space<vmem>>, %arg11: memref<128x1024xbf16, #tpu.memory_space<vmem>>, %arg12: memref<1x1024xf32, #tpu.memory_space<vmem>>, %arg13: memref<512x512xbf16, #tpu.memory_space<vmem>>, %arg14: memref<1x512xf32, #tpu.memory_space<vmem>>, %arg15: memref<1024x128xbf16, #tpu.memory_space<vmem>>, %arg16: memref<1x128xf32, #tpu.memory_space<vmem>>, %arg17: memref<8x512xf32, #tpu.memory_space<vmem>>, %arg18: memref<8x128xf32, #tpu.memory_space<vmem>>) attributes {dimension_semantics = [], scalar_prefetch = 0 : i64, scratch_operands = 0 : i64, tpu.core_type = #tpu.core_type<tc>} {
    %c0 = arith.constant 0 : index
    %c0_0 = arith.constant 0 : index
    %0 = vector.load %arg0[%c0, %c0_0] : memref<8x128xf32, #tpu.memory_space<vmem>>, vector<8x128xf32>
    %1 = arith.truncf %0 : vector<8x128xf32> to vector<8x128xbf16>
    %c0_1 = arith.constant 0 : index
    %c0_2 = arith.constant 0 : index
    %2 = vector.load %arg3[%c0_1, %c0_2] : memref<128x128xbf16, #tpu.memory_space<vmem>>, vector<128x128xbf16>
    %cst = arith.constant dense<0.000000e+00> : vector<8x128xf32>
    %3 = tpu.matmul %1, %2, %cst {dimension_numbers = #tpu.dot_dimension_numbers<[1], [0], [0], [1], [0, 0, 1, 1], [], []>} : vector<8x128xbf16>, vector<128x128xbf16>, vector<8x128xf32> -> vector<8x128xf32>
    %c0_3 = arith.constant 0 : index
    %c0_4 = arith.constant 0 : index
    %4 = vector.load %arg4[%c0_3, %c0_4] : memref<1x128xf32, #tpu.memory_space<vmem>>, vector<1x128xf32>
    %5 = vector.broadcast %4 : vector<1x128xf32> to vector<8x128xf32>
    %6 = arith.addf %3, %5 : vector<8x128xf32>
    %cst_5 = arith.constant dense<0.000000e+00> : vector<8xf32>
    %7 = vector.multi_reduction <add>, %6, %cst_5 [1] : vector<8x128xf32> to vector<8xf32>
    %8 = vector.shape_cast %7 : vector<8xf32> to vector<8x1xf32>
    %cst_6 = arith.constant 1.280000e+02 : f32
    %9 = vector.broadcast %cst_6 : f32 to vector<8x1xf32>
    %10 = arith.divf %8, %9 : vector<8x1xf32>
    %11 = vector.broadcast %10 : vector<8x1xf32> to vector<8x128xf32>
    %12 = arith.subf %6, %11 : vector<8x128xf32>
    %13 = arith.mulf %12, %12 : vector<8x128xf32>
    %cst_7 = arith.constant dense<0.000000e+00> : vector<8xf32>
    %14 = vector.multi_reduction <add>, %13, %cst_7 [1] : vector<8x128xf32> to vector<8xf32>
    %15 = vector.shape_cast %14 : vector<8xf32> to vector<8x1xf32>
    %cst_8 = arith.constant 1.280000e+02 : f32
    %16 = vector.broadcast %cst_8 : f32 to vector<8x1xf32>
    %17 = arith.divf %15, %16 : vector<8x1xf32>
    %18 = vector.broadcast %10 : vector<8x1xf32> to vector<8x128xf32>
    %19 = arith.subf %6, %18 : vector<8x128xf32>
    %cst_9 = arith.constant 9.99999974E-6 : f32
    %20 = vector.broadcast %cst_9 : f32 to vector<8x1xf32>
    %21 = arith.addf %17, %20 : vector<8x1xf32>
    %22 = math.rsqrt %21 : vector<8x1xf32>
    %23 = vector.broadcast %22 : vector<8x1xf32> to vector<8x128xf32>
    %24 = arith.mulf %19, %23 : vector<8x128xf32>
    %c0_10 = arith.constant 0 : index
    %c0_11 = arith.constant 0 : index
    %25 = vector.load %arg5[%c0_10, %c0_11] : memref<1x128xf32, #tpu.memory_space<vmem>>, vector<1x128xf32>
    %26 = vector.broadcast %25 : vector<1x128xf32> to vector<8x128xf32>
    %27 = arith.mulf %24, %26 : vector<8x128xf32>
    %c0_12 = arith.constant 0 : index
    %c0_13 = arith.constant 0 : index
    %28 = vector.load %arg6[%c0_12, %c0_13] : memref<1x128xf32, #tpu.memory_space<vmem>>, vector<1x128xf32>
    %29 = vector.broadcast %28 : vector<1x128xf32> to vector<8x128xf32>
    %30 = arith.addf %27, %29 : vector<8x128xf32>
    %cst_14 = arith.constant 0.000000e+00 : f32
    %31 = vector.broadcast %cst_14 : f32 to vector<8x128xf32>
    %32 = arith.maximumf %30, %31 : vector<8x128xf32>
    %c0_15 = arith.constant 0 : index
    %c0_16 = arith.constant 0 : index
    %33 = vector.load %arg1[%c0_15, %c0_16] : memref<8x1xi32, #tpu.memory_space<vmem>>, vector<8x1xi32>
    %34 = tpu.iota {dimensions = array<i32: 1>} : vector<8x8xi32>
    %35 = vector.broadcast %33 : vector<8x1xi32> to vector<8x8xi32>
    %36 = arith.cmpi eq, %34, %35 : vector<8x8xi32>
    %37 = arith.extui %36 : vector<8x8xi1> to vector<8x8xi32>
    %38 = arith.sitofp %37 : vector<8x8xi32> to vector<8x8xf32>
    %c0_17 = arith.constant 0 : index
    %c0_18 = arith.constant 0 : index
    %39 = vector.load %arg2[%c0_17, %c0_18] : memref<8x128xf32, #tpu.memory_space<vmem>>, vector<8x128xf32>
    %cst_19 = arith.constant dense<0.000000e+00> : vector<8x128xf32>
    %40 = tpu.matmul %38, %39, %cst_19 {dimension_numbers = #tpu.dot_dimension_numbers<[1], [0], [0], [1], [0, 0, 1, 1], [], []>} : vector<8x8xf32>, vector<8x128xf32>, vector<8x128xf32> -> vector<8x128xf32>
    %41 = arith.addf %32, %40 : vector<8x128xf32>
    %42 = arith.truncf %41 : vector<8x128xf32> to vector<8x128xbf16>
    %c0_20 = arith.constant 0 : index
    %c0_21 = arith.constant 0 : index
    %c0_22 = arith.constant 0 : index
    %43 = vector.load %arg7[%c0_20, %c0_21, %c0_22] : memref<4x128x512xbf16, #tpu.memory_space<vmem>>, vector<1x128x512xbf16>
    %44 = vector.shape_cast %43 : vector<1x128x512xbf16> to vector<128x512xbf16>
    %cst_23 = arith.constant dense<0.000000e+00> : vector<8x512xf32>
    %45 = tpu.matmul %42, %44, %cst_23 {dimension_numbers = #tpu.dot_dimension_numbers<[1], [0], [0], [1], [0, 0, 1, 1], [], []>} : vector<8x128xbf16>, vector<128x512xbf16>, vector<8x512xf32> -> vector<8x512xf32>
    %c0_24 = arith.constant 0 : index
    %c0_25 = arith.constant 0 : index
    %c0_26 = arith.constant 0 : index
    %46 = vector.load %arg8[%c0_24, %c0_25, %c0_26] : memref<4x1x512xf32, #tpu.memory_space<vmem>>, vector<1x1x512xf32>
    %47 = vector.shape_cast %46 : vector<1x1x512xf32> to vector<1x512xf32>
    %48 = vector.broadcast %47 : vector<1x512xf32> to vector<8x512xf32>
    %49 = arith.addf %45, %48 : vector<8x512xf32>
    %50 = arith.mulf %49, %49 : vector<8x512xf32>
    %51 = arith.mulf %49, %50 : vector<8x512xf32>
    %cst_27 = arith.constant 4.471500e-02 : f32
    %52 = vector.broadcast %cst_27 : f32 to vector<8x512xf32>
    %53 = arith.mulf %52, %51 : vector<8x512xf32>
    %54 = arith.addf %49, %53 : vector<8x512xf32>
    %cst_28 = arith.constant 0.797884583 : f32
    %55 = vector.broadcast %cst_28 : f32 to vector<8x512xf32>
    %56 = arith.mulf %55, %54 : vector<8x512xf32>
    %57 = math.tanh %56 : vector<8x512xf32>
    %cst_29 = arith.constant 1.000000e+00 : f32
    %58 = vector.broadcast %cst_29 : f32 to vector<8x512xf32>
    %59 = arith.addf %58, %57 : vector<8x512xf32>
    %cst_30 = arith.constant 5.000000e-01 : f32
    %60 = vector.broadcast %cst_30 : f32 to vector<8x512xf32>
    %61 = arith.mulf %60, %59 : vector<8x512xf32>
    %62 = arith.mulf %49, %61 : vector<8x512xf32>
    %63 = arith.truncf %62 : vector<8x512xf32> to vector<8x512xbf16>
    %c0_31 = arith.constant 0 : index
    %c0_32 = arith.constant 0 : index
    %c0_33 = arith.constant 0 : index
    %64 = vector.load %arg9[%c0_31, %c0_32, %c0_33] : memref<4x512x128xbf16, #tpu.memory_space<vmem>>, vector<1x512x128xbf16>
    %65 = vector.shape_cast %64 : vector<1x512x128xbf16> to vector<512x128xbf16>
    %cst_34 = arith.constant dense<0.000000e+00> : vector<8x128xf32>
    %66 = tpu.matmul %63, %65, %cst_34 {dimension_numbers = #tpu.dot_dimension_numbers<[1], [0], [0], [1], [0, 0, 1, 1], [], []>} : vector<8x512xbf16>, vector<512x128xbf16>, vector<8x128xf32> -> vector<8x128xf32>
    %c0_35 = arith.constant 0 : index
    %c0_36 = arith.constant 0 : index
    %c0_37 = arith.constant 0 : index
    %67 = vector.load %arg10[%c0_35, %c0_36, %c0_37] : memref<4x1x128xf32, #tpu.memory_space<vmem>>, vector<1x1x128xf32>
    %68 = vector.shape_cast %67 : vector<1x1x128xf32> to vector<1x128xf32>
    %69 = vector.broadcast %68 : vector<1x128xf32> to vector<8x128xf32>
    %70 = arith.addf %66, %69 : vector<8x128xf32>
    %71 = arith.addf %70, %41 : vector<8x128xf32>
    %72 = arith.truncf %71 : vector<8x128xf32> to vector<8x128xbf16>
    %c1 = arith.constant 1 : index
    %c0_38 = arith.constant 0 : index
    %c0_39 = arith.constant 0 : index
    %73 = vector.load %arg7[%c1, %c0_38, %c0_39] : memref<4x128x512xbf16, #tpu.memory_space<vmem>>, vector<1x128x512xbf16>
    %74 = vector.shape_cast %73 : vector<1x128x512xbf16> to vector<128x512xbf16>
    %cst_40 = arith.constant dense<0.000000e+00> : vector<8x512xf32>
    %75 = tpu.matmul %72, %74, %cst_40 {dimension_numbers = #tpu.dot_dimension_numbers<[1], [0], [0], [1], [0, 0, 1, 1], [], []>} : vector<8x128xbf16>, vector<128x512xbf16>, vector<8x512xf32> -> vector<8x512xf32>
    %c1_41 = arith.constant 1 : index
    %c0_42 = arith.constant 0 : index
    %c0_43 = arith.constant 0 : index
    %76 = vector.load %arg8[%c1_41, %c0_42, %c0_43] : memref<4x1x512xf32, #tpu.memory_space<vmem>>, vector<1x1x512xf32>
    %77 = vector.shape_cast %76 : vector<1x1x512xf32> to vector<1x512xf32>
    %78 = vector.broadcast %77 : vector<1x512xf32> to vector<8x512xf32>
    %79 = arith.addf %75, %78 : vector<8x512xf32>
    %80 = arith.mulf %79, %79 : vector<8x512xf32>
    %81 = arith.mulf %79, %80 : vector<8x512xf32>
    %cst_44 = arith.constant 4.471500e-02 : f32
    %82 = vector.broadcast %cst_44 : f32 to vector<8x512xf32>
    %83 = arith.mulf %82, %81 : vector<8x512xf32>
    %84 = arith.addf %79, %83 : vector<8x512xf32>
    %cst_45 = arith.constant 0.797884583 : f32
    %85 = vector.broadcast %cst_45 : f32 to vector<8x512xf32>
    %86 = arith.mulf %85, %84 : vector<8x512xf32>
    %87 = math.tanh %86 : vector<8x512xf32>
    %cst_46 = arith.constant 1.000000e+00 : f32
    %88 = vector.broadcast %cst_46 : f32 to vector<8x512xf32>
    %89 = arith.addf %88, %87 : vector<8x512xf32>
    %cst_47 = arith.constant 5.000000e-01 : f32
    %90 = vector.broadcast %cst_47 : f32 to vector<8x512xf32>
    %91 = arith.mulf %90, %89 : vector<8x512xf32>
    %92 = arith.mulf %79, %91 : vector<8x512xf32>
    %93 = arith.truncf %92 : vector<8x512xf32> to vector<8x512xbf16>
    %c1_48 = arith.constant 1 : index
    %c0_49 = arith.constant 0 : index
    %c0_50 = arith.constant 0 : index
    %94 = vector.load %arg9[%c1_48, %c0_49, %c0_50] : memref<4x512x128xbf16, #tpu.memory_space<vmem>>, vector<1x512x128xbf16>
    %95 = vector.shape_cast %94 : vector<1x512x128xbf16> to vector<512x128xbf16>
    %cst_51 = arith.constant dense<0.000000e+00> : vector<8x128xf32>
    %96 = tpu.matmul %93, %95, %cst_51 {dimension_numbers = #tpu.dot_dimension_numbers<[1], [0], [0], [1], [0, 0, 1, 1], [], []>} : vector<8x512xbf16>, vector<512x128xbf16>, vector<8x128xf32> -> vector<8x128xf32>
    %c1_52 = arith.constant 1 : index
    %c0_53 = arith.constant 0 : index
    %c0_54 = arith.constant 0 : index
    %97 = vector.load %arg10[%c1_52, %c0_53, %c0_54] : memref<4x1x128xf32, #tpu.memory_space<vmem>>, vector<1x1x128xf32>
    %98 = vector.shape_cast %97 : vector<1x1x128xf32> to vector<1x128xf32>
    %99 = vector.broadcast %98 : vector<1x128xf32> to vector<8x128xf32>
    %100 = arith.addf %96, %99 : vector<8x128xf32>
    %101 = arith.addf %100, %71 : vector<8x128xf32>
    %102 = arith.truncf %101 : vector<8x128xf32> to vector<8x128xbf16>
    %c2 = arith.constant 2 : index
    %c0_55 = arith.constant 0 : index
    %c0_56 = arith.constant 0 : index
    %103 = vector.load %arg7[%c2, %c0_55, %c0_56] : memref<4x128x512xbf16, #tpu.memory_space<vmem>>, vector<1x128x512xbf16>
    %104 = vector.shape_cast %103 : vector<1x128x512xbf16> to vector<128x512xbf16>
    %cst_57 = arith.constant dense<0.000000e+00> : vector<8x512xf32>
    %105 = tpu.matmul %102, %104, %cst_57 {dimension_numbers = #tpu.dot_dimension_numbers<[1], [0], [0], [1], [0, 0, 1, 1], [], []>} : vector<8x128xbf16>, vector<128x512xbf16>, vector<8x512xf32> -> vector<8x512xf32>
    %c2_58 = arith.constant 2 : index
    %c0_59 = arith.constant 0 : index
    %c0_60 = arith.constant 0 : index
    %106 = vector.load %arg8[%c2_58, %c0_59, %c0_60] : memref<4x1x512xf32, #tpu.memory_space<vmem>>, vector<1x1x512xf32>
    %107 = vector.shape_cast %106 : vector<1x1x512xf32> to vector<1x512xf32>
    %108 = vector.broadcast %107 : vector<1x512xf32> to vector<8x512xf32>
    %109 = arith.addf %105, %108 : vector<8x512xf32>
    %110 = arith.mulf %109, %109 : vector<8x512xf32>
    %111 = arith.mulf %109, %110 : vector<8x512xf32>
    %cst_61 = arith.constant 4.471500e-02 : f32
    %112 = vector.broadcast %cst_61 : f32 to vector<8x512xf32>
    %113 = arith.mulf %112, %111 : vector<8x512xf32>
    %114 = arith.addf %109, %113 : vector<8x512xf32>
    %cst_62 = arith.constant 0.797884583 : f32
    %115 = vector.broadcast %cst_62 : f32 to vector<8x512xf32>
    %116 = arith.mulf %115, %114 : vector<8x512xf32>
    %117 = math.tanh %116 : vector<8x512xf32>
    %cst_63 = arith.constant 1.000000e+00 : f32
    %118 = vector.broadcast %cst_63 : f32 to vector<8x512xf32>
    %119 = arith.addf %118, %117 : vector<8x512xf32>
    %cst_64 = arith.constant 5.000000e-01 : f32
    %120 = vector.broadcast %cst_64 : f32 to vector<8x512xf32>
    %121 = arith.mulf %120, %119 : vector<8x512xf32>
    %122 = arith.mulf %109, %121 : vector<8x512xf32>
    %123 = arith.truncf %122 : vector<8x512xf32> to vector<8x512xbf16>
    %c2_65 = arith.constant 2 : index
    %c0_66 = arith.constant 0 : index
    %c0_67 = arith.constant 0 : index
    %124 = vector.load %arg9[%c2_65, %c0_66, %c0_67] : memref<4x512x128xbf16, #tpu.memory_space<vmem>>, vector<1x512x128xbf16>
    %125 = vector.shape_cast %124 : vector<1x512x128xbf16> to vector<512x128xbf16>
    %cst_68 = arith.constant dense<0.000000e+00> : vector<8x128xf32>
    %126 = tpu.matmul %123, %125, %cst_68 {dimension_numbers = #tpu.dot_dimension_numbers<[1], [0], [0], [1], [0, 0, 1, 1], [], []>} : vector<8x512xbf16>, vector<512x128xbf16>, vector<8x128xf32> -> vector<8x128xf32>
    %c2_69 = arith.constant 2 : index
    %c0_70 = arith.constant 0 : index
    %c0_71 = arith.constant 0 : index
    %127 = vector.load %arg10[%c2_69, %c0_70, %c0_71] : memref<4x1x128xf32, #tpu.memory_space<vmem>>, vector<1x1x128xf32>
    %128 = vector.shape_cast %127 : vector<1x1x128xf32> to vector<1x128xf32>
    %129 = vector.broadcast %128 : vector<1x128xf32> to vector<8x128xf32>
    %130 = arith.addf %126, %129 : vector<8x128xf32>
    %131 = arith.addf %130, %101 : vector<8x128xf32>
    %132 = arith.truncf %131 : vector<8x128xf32> to vector<8x128xbf16>
    %c3 = arith.constant 3 : index
    %c0_72 = arith.constant 0 : index
    %c0_73 = arith.constant 0 : index
    %133 = vector.load %arg7[%c3, %c0_72, %c0_73] : memref<4x128x512xbf16, #tpu.memory_space<vmem>>, vector<1x128x512xbf16>
    %134 = vector.shape_cast %133 : vector<1x128x512xbf16> to vector<128x512xbf16>
    %cst_74 = arith.constant dense<0.000000e+00> : vector<8x512xf32>
    %135 = tpu.matmul %132, %134, %cst_74 {dimension_numbers = #tpu.dot_dimension_numbers<[1], [0], [0], [1], [0, 0, 1, 1], [], []>} : vector<8x128xbf16>, vector<128x512xbf16>, vector<8x512xf32> -> vector<8x512xf32>
    %c3_75 = arith.constant 3 : index
    %c0_76 = arith.constant 0 : index
    %c0_77 = arith.constant 0 : index
    %136 = vector.load %arg8[%c3_75, %c0_76, %c0_77] : memref<4x1x512xf32, #tpu.memory_space<vmem>>, vector<1x1x512xf32>
    %137 = vector.shape_cast %136 : vector<1x1x512xf32> to vector<1x512xf32>
    %138 = vector.broadcast %137 : vector<1x512xf32> to vector<8x512xf32>
    %139 = arith.addf %135, %138 : vector<8x512xf32>
    %140 = arith.mulf %139, %139 : vector<8x512xf32>
    %141 = arith.mulf %139, %140 : vector<8x512xf32>
    %cst_78 = arith.constant 4.471500e-02 : f32
    %142 = vector.broadcast %cst_78 : f32 to vector<8x512xf32>
    %143 = arith.mulf %142, %141 : vector<8x512xf32>
    %144 = arith.addf %139, %143 : vector<8x512xf32>
    %cst_79 = arith.constant 0.797884583 : f32
    %145 = vector.broadcast %cst_79 : f32 to vector<8x512xf32>
    %146 = arith.mulf %145, %144 : vector<8x512xf32>
    %147 = math.tanh %146 : vector<8x512xf32>
    %cst_80 = arith.constant 1.000000e+00 : f32
    %148 = vector.broadcast %cst_80 : f32 to vector<8x512xf32>
    %149 = arith.addf %148, %147 : vector<8x512xf32>
    %cst_81 = arith.constant 5.000000e-01 : f32
    %150 = vector.broadcast %cst_81 : f32 to vector<8x512xf32>
    %151 = arith.mulf %150, %149 : vector<8x512xf32>
    %152 = arith.mulf %139, %151 : vector<8x512xf32>
    %153 = arith.truncf %152 : vector<8x512xf32> to vector<8x512xbf16>
    %c3_82 = arith.constant 3 : index
    %c0_83 = arith.constant 0 : index
    %c0_84 = arith.constant 0 : index
    %154 = vector.load %arg9[%c3_82, %c0_83, %c0_84] : memref<4x512x128xbf16, #tpu.memory_space<vmem>>, vector<1x512x128xbf16>
    %155 = vector.shape_cast %154 : vector<1x512x128xbf16> to vector<512x128xbf16>
    %cst_85 = arith.constant dense<0.000000e+00> : vector<8x128xf32>
    %156 = tpu.matmul %153, %155, %cst_85 {dimension_numbers = #tpu.dot_dimension_numbers<[1], [0], [0], [1], [0, 0, 1, 1], [], []>} : vector<8x512xbf16>, vector<512x128xbf16>, vector<8x128xf32> -> vector<8x128xf32>
    %c3_86 = arith.constant 3 : index
    %c0_87 = arith.constant 0 : index
    %c0_88 = arith.constant 0 : index
    %157 = vector.load %arg10[%c3_86, %c0_87, %c0_88] : memref<4x1x128xf32, #tpu.memory_space<vmem>>, vector<1x1x128xf32>
    %158 = vector.shape_cast %157 : vector<1x1x128xf32> to vector<1x128xf32>
    %159 = vector.broadcast %158 : vector<1x128xf32> to vector<8x128xf32>
    %160 = arith.addf %156, %159 : vector<8x128xf32>
    %161 = arith.addf %160, %131 : vector<8x128xf32>
    %162 = arith.truncf %161 : vector<8x128xf32> to vector<8x128xbf16>
    %c0_89 = arith.constant 0 : index
    %c0_90 = arith.constant 0 : index
    %163 = vector.load %arg11[%c0_89, %c0_90] : memref<128x1024xbf16, #tpu.memory_space<vmem>>, vector<128x1024xbf16>
    %cst_91 = arith.constant dense<0.000000e+00> : vector<8x1024xf32>
    %164 = tpu.matmul %162, %163, %cst_91 {dimension_numbers = #tpu.dot_dimension_numbers<[1], [0], [0], [1], [0, 0, 1, 1], [], []>} : vector<8x128xbf16>, vector<128x1024xbf16>, vector<8x1024xf32> -> vector<8x1024xf32>
    %c0_92 = arith.constant 0 : index
    %c0_93 = arith.constant 0 : index
    %165 = vector.load %arg12[%c0_92, %c0_93] : memref<1x1024xf32, #tpu.memory_space<vmem>>, vector<1x1024xf32>
    %166 = vector.broadcast %165 : vector<1x1024xf32> to vector<8x1024xf32>
    %167 = arith.addf %164, %166 : vector<8x1024xf32>
    %cst_94 = arith.constant 0.000000e+00 : f32
    %168 = vector.broadcast %cst_94 : f32 to vector<8x1024xf32>
    %169 = arith.maximumf %167, %168 : vector<8x1024xf32>
    %170 = arith.truncf %169 : vector<8x1024xf32> to vector<8x1024xbf16>
    %171 = vector.extract_strided_slice %170 {offsets = [0, 0], sizes = [8, 512], strides = [1, 1]} : vector<8x1024xbf16> to vector<8x512xbf16>
    %c0_95 = arith.constant 0 : index
    %c0_96 = arith.constant 0 : index
    %172 = vector.load %arg13[%c0_95, %c0_96] : memref<512x512xbf16, #tpu.memory_space<vmem>>, vector<512x512xbf16>
    %cst_97 = arith.constant dense<0.000000e+00> : vector<8x512xf32>
    %173 = tpu.matmul %171, %172, %cst_97 {dimension_numbers = #tpu.dot_dimension_numbers<[1], [0], [0], [1], [0, 0, 1, 1], [], []>} : vector<8x512xbf16>, vector<512x512xbf16>, vector<8x512xf32> -> vector<8x512xf32>
    %c0_98 = arith.constant 0 : index
    %c0_99 = arith.constant 0 : index
    %174 = vector.load %arg14[%c0_98, %c0_99] : memref<1x512xf32, #tpu.memory_space<vmem>>, vector<1x512xf32>
    %175 = vector.broadcast %174 : vector<1x512xf32> to vector<8x512xf32>
    %176 = arith.addf %173, %175 : vector<8x512xf32>
    %c0_100 = arith.constant 0 : index
    %c0_101 = arith.constant 0 : index
    %177 = vector.load %arg17[%c0_100, %c0_101] : memref<8x512xf32, #tpu.memory_space<vmem>>, vector<8x512xf32>
    tpu.vector_store %arg17[%c0_100, %c0_101], %176 {strides = array<i32>} : memref<8x512xf32, #tpu.memory_space<vmem>>, vector<8x512xf32>,
    %c0_102 = arith.constant 0 : index
    %c0_103 = arith.constant 0 : index
    %178 = vector.load %arg15[%c0_102, %c0_103] : memref<1024x128xbf16, #tpu.memory_space<vmem>>, vector<1024x128xbf16>
    %cst_104 = arith.constant dense<0.000000e+00> : vector<8x128xf32>
    %179 = tpu.matmul %170, %178, %cst_104 {dimension_numbers = #tpu.dot_dimension_numbers<[1], [0], [0], [1], [0, 0, 1, 1], [], []>} : vector<8x1024xbf16>, vector<1024x128xbf16>, vector<8x128xf32> -> vector<8x128xf32>
    %c0_105 = arith.constant 0 : index
    %c0_106 = arith.constant 0 : index
    %180 = vector.load %arg16[%c0_105, %c0_106] : memref<1x128xf32, #tpu.memory_space<vmem>>, vector<1x128xf32>
    %181 = vector.broadcast %180 : vector<1x128xf32> to vector<8x128xf32>
    %182 = arith.addf %179, %181 : vector<8x128xf32>
    %183 = tpu.iota {dimensions = array<i32: 1>} : vector<8x128xi32>
    %c79_i32 = arith.constant 79 : i32
    %184 = vector.broadcast %c79_i32 : i32 to vector<8x128xi32>
    %185 = arith.cmpi eq, %183, %184 : vector<8x128xi32>
    %186 = arith.negf %182 : vector<8x128xf32>
    %187 = math.exp %186 : vector<8x128xf32>
    %cst_107 = arith.constant 1.000000e+00 : f32
    %188 = vector.broadcast %cst_107 : f32 to vector<8x128xf32>
    %189 = arith.addf %188, %187 : vector<8x128xf32>
    %190 = arith.divf %188, %189 : vector<8x128xf32>
    %191 = arith.select %185, %190, %182 : vector<8x128xi1>, vector<8x128xf32>
    %c0_108 = arith.constant 0 : index
    %c0_109 = arith.constant 0 : index
    %192 = vector.load %arg18[%c0_108, %c0_109] : memref<8x128xf32, #tpu.memory_space<vmem>>, vector<8x128xf32>
    tpu.vector_store %arg18[%c0_108, %c0_109], %191 {strides = array<i32>} : memref<8x128xf32, #tpu.memory_space<vmem>>, vector<8x128xf32>,
    return
  }
}

</mosaic_0001>

<llo_original>
// kernel: content_generator_forward.1
$region0: #{content_generator_forward.1}
  #allocation0 [shape = 'u32[]', space=smem, size = 0x4, offset = 0x4, fixed_abs, tag = 'smem constant byte address 0x4 - core index']
  #allocation1 [shape = 'u32[144,128]{1,0:T(1,128)}', space=vmem, size = 0x12000, scoped, tag = 'internal scratch']
  %s0 = inlined_call_operand.vmem [shape: f32[8,128], index: 0, kind: input, shape index: {}]
  %s1 = inlined_call_operand.vmem [shape: s32[8,1], index: 1, kind: input, shape index: {}]
  %s2 = inlined_call_operand.vmem [shape: f32[8,128], index: 2, kind: input, shape index: {}]
  %s3 = inlined_call_operand.hbm [shape: bf16[128,128], index: 3, kind: input, shape index: {}]
  %s4 = inlined_call_operand.vmem [shape: f32[1,128], index: 4, kind: input, shape index: {}]
  %s5 = inlined_call_operand.vmem [shape: f32[1,128], index: 5, kind: input, shape index: {}]
  %s6 = inlined_call_operand.hbm [shape: f32[1,128], index: 6, kind: input, shape index: {}]
  %s7 = inlined_call_operand.hbm [shape: bf16[4,128,512], index: 7, kind: input, shape index: {}]
  %s8 = inlined_call_operand.vmem [shape: f32[4,1,512], index: 8, kind: input, shape index: {}]
  %s9 = inlined_call_operand.hbm [shape: bf16[4,512,128], index: 9, kind: input, shape index: {}]
  %s10 = inlined_call_operand.hbm [shape: f32[4,1,128], index: 10, kind: input, shape index: {}]
  %s11 = inlined_call_operand.hbm [shape: bf16[128,1024], index: 11, kind: input, shape index: {}]
  %s12 = inlined_call_operand.vmem [shape: f32[1,1024], index: 12, kind: input, shape index: {}]
  %s13 = inlined_call_operand.hbm [shape: bf16[512,512], index: 13, kind: input, shape index: {}]
  %s14 = inlined_call_operand.vmem [shape: f32[1,512], index: 14, kind: input, shape index: {}]
  %s15 = inlined_call_operand.hbm [shape: bf16[1024,128], index: 15, kind: input, shape index: {}]
  %s16 = inlined_call_operand.hbm [shape: f32[1,128], index: 16, kind: input, shape index: {}]
  %s17 = inlined_call_operand.hbm [shape: f32[8,512], index: 17, kind: output, shape index: {0}]
  %s18 = inlined_call_operand.vmem [shape: f32[8,128], index: 18, kind: output, shape index: {1}]
  %19 = xla_tuple %s17, %s18
  %s20 = sld [smem:[#allocation0]]
  $region122: #{content_generator_forward.1} parent=0
    _
  %s22 = ssub.s32 1, %s20
  %s23 = scalar_select 0, %s22, %s20
  $region1: #{content_generator_forward.1} parent=0
    #allocation2 [shape = 'u8[32768]{0}', space=vmem, size = 0x8000, scoped, tag = 'input window, operand 3, single buffered']
    #allocation3 [shape = 's32[1]{0}', space=sflag, size = 0x4, scoped, tag = 'scoped memory for content_generator_forward.1']
    #allocation4 [shape = 's32[1]{0}', space=sflag, size = 0x4, scoped, tag = 'scoped memory for content_generator_forward.1']
    #allocation5 [shape = 'u8[512]{0}', space=vmem, size = 0x400, scoped, tag = 'input window, operand 6, single buffered']
    #allocation6 [shape = 's32[1]{0}', space=sflag, size = 0x4, scoped, tag = 'scoped memory for content_generator_forward.1']
    #allocation7 [shape = 'u8[524288]{0}', space=vmem, size = 0x80000, scoped, tag = 'input window, operand 7, single buffered']
    #allocation8 [shape = 'u8[524288]{0}', space=vmem, size = 0x80000, scoped, tag = 'input window, operand 9, single buffered']
    #allocation9 [shape = 's32[1]{0}', space=sflag, size = 0x4, scoped, tag = 'scoped memory for content_generator_forward.1']
    #allocation10 [shape = 'u8[2048]{0}', space=vmem, size = 0x800, scoped, tag = 'input window, operand 10, single buffered']
    #allocation11 [shape = 'u8[262144]{0}', space=vmem, size = 0x40000, scoped, tag = 'input window, operand 11, single buffered']
    #allocation12 [shape = 's32[1]{0}', space=sflag, size = 0x4, scoped, tag = 'scoped memory for content_generator_forward.1']
    #allocation13 [shape = 'u8[524288]{0}', space=vmem, size = 0x80000, scoped, tag = 'input window, operand 13, single buffered']
    #allocation14 [shape = 'u8[262144]{0}', space=vmem, size = 0x40000, scoped, tag = 'input window, operand 15, single buffered']
    #allocation15 [shape = 's32[1]{0}', space=sflag, size = 0x4, scoped, tag = 'scoped memory for content_generator_forward.1']
    #allocation16 [shape = 'u8[512]{0}', space=vmem, size = 0x400, scoped, tag = 'input window, operand 16, single buffered']
    #allocation17 [shape = 'u8[16384]{0}', space=vmem, size = 0x4000, scoped, tag = 'output window, operand 0, single buffered']
    %24 = vsyncpa [#allocation3], 0
    %25 = vsyncpa [#allocation6], 0
    %26 = vsyncpa [#allocation9], 0
    %27 = vsyncpa [#allocation12], 0
    %28 = vsyncpa [#allocation15], 0
    %29 = vsyncpa [#allocation4], 0
    // Predicated region
    $region2: #{content_generator_forward.1} parent=1 // pred_check
      _
    $region3: #{content_generator_forward.1} parent=1 // pred_check_branch
      %31 = sbr.rel (0) target = $region5
    $region4: #{content_generator_forward.1} parent=1 // pred_region
      _
    $region5: #{content_generator_forward.1} parent=1 // pred_fallthru
      _
    // Predicated region
    $region6: #{content_generator_forward.1} parent=1 // pred_check
      _
    $region7: #{content_generator_forward.1} parent=1 // pred_check_branch
      %33 = sbr.rel (0) target = $region9
    $region8: #{content_generator_forward.1} parent=1 // pred_region
      _
    $region9: #{content_generator_forward.1} parent=1 // pred_fallthru
      _
    // Predicated region
    $region10: #{content_generator_forward.1} parent=1 // pred_check
      _
    $region11: #{content_generator_forward.1} parent=1 // pred_check_branch
      %35 = sbr.rel (0) target = $region13
    $region12: #{content_generator_forward.1} parent=1 // pred_region
      _
    $region13: #{content_generator_forward.1} parent=1 // pred_fallthru
      _
    // Predicated region
    $region14: #{content_generator_forward.1} parent=1 // pred_check
      _
    $region15: #{content_generator_forward.1} parent=1 // pred_check_branch
      %37 = sbr.rel (0) target = $region17
    $region16: #{content_generator_forward.1} parent=1 // pred_region
      %s39 = ssub.s32 1024, 1024
      %40 = vsyncadd [#allocation3], %s39
      %s41 = sshll.u32 [#allocation2], 4
      %s42 = int_to_ptr.vmem [resolvable:$true] %s41
      %47 = dma.hbm_to_vmem [thread:$0]  %s3, 1024, %s42, [#allocation3], 64, 64, 4
    $region17: #{content_generator_forward.1} parent=1 // pred_fallthru
      _
    // Predicated region
    $region18: #{content_generator_forward.1} parent=1 // pred_check
      _
    $region19: #{content_generator_forward.1} parent=1 // pred_check_branch
      %49 = sbr.rel (0) target = $region21
    $region20: #{content_generator_forward.1} parent=1 // pred_region
      _
    $region21: #{content_generator_forward.1} parent=1 // pred_fallthru
      _
    // Predicated region
    $region22: #{content_generator_forward.1} parent=1 // pred_check
      _
    $region23: #{content_generator_forward.1} parent=1 // pred_check_branch
      %51 = sbr.rel (0) target = $region25
    $region24: #{content_generator_forward.1} parent=1 // pred_region
      _
    $region25: #{content_generator_forward.1} parent=1 // pred_fallthru
      _
    // Predicated region
    $region26: #{content_generator_forward.1} parent=1 // pred_check
      _
    $region27: #{content_generator_forward.1} parent=1 // pred_check_branch
      %53 = sbr.rel (0) target = $region29
    $region28: #{content_generator_forward.1} parent=1 // pred_region
      %s55 = ssub.s32 16, 16
      %56 = vsyncadd [#allocation6], %s55
      %s58 = sshll.u32 [#allocation5], 4
      %s59 = int_to_ptr.vmem [resolvable:$true] %s58
      %61 = dma.hbm_to_vmem [thread:$0]  %s6, 16, %s59, [#allocation6]
    $region29: #{content_generator_forward.1} parent=1 // pred_fallthru
      _
    // Predicated region
    $region30: #{content_generator_forward.1} parent=1 // pred_check
      _
    $region31: #{content_generator_forward.1} parent=1 // pred_check_branch
      %63 = sbr.rel (0) target = $region33
    $region32: #{content_generator_forward.1} parent=1 // pred_region
      %s65 = ssub.s32 16384, 16384
      %66 = vsyncadd [#allocation6], %s65
      %s67 = sshll.u32 [#allocation7], 4
      %s68 = int_to_ptr.vmem [resolvable:$true] %s67
      %73 = dma.hbm_to_vmem [thread:$0]  %s7, 16384, %s68, [#allocation6], 256, 256, 16
    $region33: #{content_generator_forward.1} parent=1 // pred_fallthru
      _
    // Predicated region
    $region34: #{content_generator_forward.1} parent=1 // pred_check
      _
    $region35: #{content_generator_forward.1} parent=1 // pred_check_branch
      %75 = sbr.rel (0) target = $region37
    $region36: #{content_generator_forward.1} parent=1 // pred_region
      _
    $region37: #{content_generator_forward.1} parent=1 // pred_fallthru
      _
    // Predicated region
    $region38: #{content_generator_forward.1} parent=1 // pred_check
      _
    $region39: #{content_generator_forward.1} parent=1 // pred_check_branch
      %77 = sbr.rel (0) target = $region41
    $region40: #{content_generator_forward.1} parent=1 // pred_region
      %s79 = ssub.s32 16384, 16384
      %80 = vsyncadd [#allocation9], %s79
      %s81 = sshll.u32 [#allocation8], 4
      %s82 = int_to_ptr.vmem [resolvable:$true] %s81
      %87 = dma.hbm_to_vmem [thread:$0]  %s9, 16384, %s82, [#allocation9], 64, 64, 4
    $region41: #{content_generator_forward.1} parent=1 // pred_fallthru
      _
    // Predicated region
    $region42: #{content_generator_forward.1} parent=1 // pred_check
      _
    $region43: #{content_generator_forward.1} parent=1 // pred_check_branch
      %89 = sbr.rel (0) target = $region45
    $region44: #{content_generator_forward.1} parent=1 // pred_region
      %s91 = ssub.s32 64, 64
      %92 = vsyncadd [#allocation9], %s91
      %s93 = sshll.u32 [#allocation10], 4
      %s94 = int_to_ptr.vmem [resolvable:$true] %s93
      %99 = dma.hbm_to_vmem [thread:$0]  %s10, 64, %s94, [#allocation9], 16, 16, 1
    $region45: #{content_generator_forward.1} parent=1 // pred_fallthru
      _
    // Predicated region
    $region46: #{content_generator_forward.1} parent=1 // pred_check
      _
    $region47: #{content_generator_forward.1} parent=1 // pred_check_branch
      %101 = sbr.rel (0) target = $region49
    $region48: #{content_generator_forward.1} parent=1 // pred_region
      %s103 = ssub.s32 8192, 8192
      %104 = vsyncadd [#allocation12], %s103
      %s105 = sshll.u32 [#allocation11], 4
      %s106 = int_to_ptr.vmem [resolvable:$true] %s105
      %111 = dma.hbm_to_vmem [thread:$0]  %s11, 8192, %s106, [#allocation12], 512, 512, 32
    $region49: #{content_generator_forward.1} parent=1 // pred_fallthru
      _
    // Predicated region
    $region50: #{content_generator_forward.1} parent=1 // pred_check
      _
    $region51: #{content_generator_forward.1} parent=1 // pred_check_branch
      %113 = sbr.rel (0) target = $region53
    $region52: #{content_generator_forward.1} parent=1 // pred_region
      _
    $region53: #{content_generator_forward.1} parent=1 // pred_fallthru
      _
    // Predicated region
    $region54: #{content_generator_forward.1} parent=1 // pred_check
      _
    $region55: #{content_generator_forward.1} parent=1 // pred_check_branch
      %115 = sbr.rel (0) target = $region57
    $region56: #{content_generator_forward.1} parent=1 // pred_region
      %s117 = ssub.s32 16384, 16384
      %118 = vsyncadd [#allocation12], %s117
      %s119 = sshll.u32 [#allocation13], 4
      %s120 = int_to_ptr.vmem [resolvable:$true] %s119
      %125 = dma.hbm_to_vmem [thread:$0]  %s13, 16384, %s120, [#allocation12], 256, 256, 16
    $region57: #{content_generator_forward.1} parent=1 // pred_fallthru
      _
    // Predicated region
    $region58: #{content_generator_forward.1} parent=1 // pred_check
      _
    $region59: #{content_generator_forward.1} parent=1 // pred_check_branch
      %127 = sbr.rel (0) target = $region61
    $region60: #{content_generator_forward.1} parent=1 // pred_region
      _
    $region61: #{content_generator_forward.1} parent=1 // pred_fallthru
      _
    // Predicated region
    $region62: #{content_generator_forward.1} parent=1 // pred_check
      _
    $region63: #{content_generator_forward.1} parent=1 // pred_check_branch
      %129 = sbr.rel (0) target = $region65
    $region64: #{content_generator_forward.1} parent=1 // pred_region
      %s131 = ssub.s32 8192, 8192
      %132 = vsyncadd [#allocation15], %s131
      %s133 = sshll.u32 [#allocation14], 4
      %s134 = int_to_ptr.vmem [resolvable:$true] %s133
      %139 = dma.hbm_to_vmem [thread:$0]  %s15, 8192, %s134, [#allocation15], 64, 64, 4
    $region65: #{content_generator_forward.1} parent=1 // pred_fallthru
      _
    // Predicated region
    $region66: #{content_generator_forward.1} parent=1 // pred_check
      _
    $region67: #{content_generator_forward.1} parent=1 // pred_check_branch
      %141 = sbr.rel (0) target = $region69
    $region68: #{content_generator_forward.1} parent=1 // pred_region
      %s143 = ssub.s32 16, 16
      %144 = vsyncadd [#allocation15], %s143
      %s146 = sshll.u32 [#allocation16], 4
      %s147 = int_to_ptr.vmem [resolvable:$true] %s146
      %149 = dma.hbm_to_vmem [thread:$0]  %s16, 16, %s147, [#allocation15]
    $region69: #{content_generator_forward.1} parent=1 // pred_fallthru
      _
    // Predicated region
    $region70: #{content_generator_forward.1} parent=1 // pred_check
      _
    $region71: #{content_generator_forward.1} parent=1 // pred_check_branch
      %151 = sbr.rel (0) target = $region73
    $region72: #{content_generator_forward.1} parent=1 // pred_region
      %152 = dma.done [#allocation3], 1024
    $region73: #{content_generator_forward.1} parent=1 // pred_fallthru
      _
    // Predicated region
    $region74: #{content_generator_forward.1} parent=1 // pred_check
      _
    $region75: #{content_generator_forward.1} parent=1 // pred_check_branch
      %154 = sbr.rel (0) target = $region77
    $region76: #{content_generator_forward.1} parent=1 // pred_region
      %155 = dma.done [#allocation6], 16
    $region77: #{content_generator_forward.1} parent=1 // pred_fallthru
      _
    // Predicated region
    $region78: #{content_generator_forward.1} parent=1 // pred_check
      _
    $region79: #{content_generator_forward.1} parent=1 // pred_check_branch
      %157 = sbr.rel (0) target = $region81
    $region80: #{content_generator_forward.1} parent=1 // pred_region
      %158 = dma.done [#allocation6], 16384
    $region81: #{content_generator_forward.1} parent=1 // pred_fallthru
      _
    // Predicated region
    $region82: #{content_generator_forward.1} parent=1 // pred_check
      _
    $region83: #{content_generator_forward.1} parent=1 // pred_check_branch
      %160 = sbr.rel (0) target = $region85
    $region84: #{content_generator_forward.1} parent=1 // pred_region
      %161 = dma.done [#allocation9], 16384
    $region85: #{content_generator_forward.1} parent=1 // pred_fallthru
      _
    // Predicated region
    $region86: #{content_generator_forward.1} parent=1 // pred_check
      _
    $region87: #{content_generator_forward.1} parent=1 // pred_check_branch
      %163 = sbr.rel (0) target = $region89
    $region88: #{content_generator_forward.1} parent=1 // pred_region
      %164 = dma.done [#allocation9], 64
    $region89: #{content_generator_forward.1} parent=1 // pred_fallthru
      _
    // Predicated region
    $region90: #{content_generator_forward.1} parent=1 // pred_check
      _
    $region91: #{content_generator_forward.1} parent=1 // pred_check_branch
      %166 = sbr.rel (0) target = $region93
    $region92: #{content_generator_forward.1} parent=1 // pred_region
      %167 = dma.done [#allocation12], 8192
    $region93: #{content_generator_forward.1} parent=1 // pred_fallthru
      _
    // Predicated region
    $region94: #{content_generator_forward.1} parent=1 // pred_check
      _
    $region95: #{content_generator_forward.1} parent=1 // pred_check_branch
      %169 = sbr.rel (0) target = $region97
    $region96: #{content_generator_forward.1} parent=1 // pred_region
      %170 = dma.done [#allocation12], 16384
    $region97: #{content_generator_forward.1} parent=1 // pred_fallthru
      _
    // Predicated region
    $region98: #{content_generator_forward.1} parent=1 // pred_check
      _
    $region99: #{content_generator_forward.1} parent=1 // pred_check_branch
      %172 = sbr.rel (0) target = $region101
    $region100: #{content_generator_forward.1} parent=1 // pred_region
      %173 = dma.done [#allocation15], 8192
    $region101: #{content_generator_forward.1} parent=1 // pred_fallthru
      _
    // Predicated region
    $region102: #{content_generator_forward.1} parent=1 // pred_check
      _
    $region103: #{content_generator_forward.1} parent=1 // pred_check_branch
      %175 = sbr.rel (0) target = $region105
    $region104: #{content_generator_forward.1} parent=1 // pred_region
      %176 = dma.done [#allocation15], 16
    $region105: #{content_generator_forward.1} parent=1 // pred_fallthru
      _
    %v178 = vld [vmem:[%s0] sm:$0xff]
    %v179 = vpack.c.bf16 %v178, %v178
    %v180 = vld [vmem:[#allocation2] sm:$0xf]
    %v181 = vld [vmem:[#allocation2 + $0x4] sm:$0xf]
    %v182 = vld [vmem:[#allocation2 + $0x8] sm:$0xf]
    %v183 = vld [vmem:[#allocation2 + $0xc] sm:$0xf]
    %v184 = vld [vmem:[#allocation2 + $0x10] sm:$0xf]
    %v185 = vld [vmem:[#allocation2 + $0x14] sm:$0xf]
    %v186 = vld [vmem:[#allocation2 + $0x18] sm:$0xf]
    %v187 = vld [vmem:[#allocation2 + $0x1c] sm:$0xf]
    %v188 = vld [vmem:[#allocation2 + $0x20] sm:$0xf]
    %v189 = vld [vmem:[#allocation2 + $0x24] sm:$0xf]
    %v190 = vld [vmem:[#allocation2 + $0x28] sm:$0xf]
    %v191 = vld [vmem:[#allocation2 + $0x2c] sm:$0xf]
    %v192 = vld [vmem:[#allocation2 + $0x30] sm:$0xf]
    %v193 = vld [vmem:[#allocation2 + $0x34] sm:$0xf]
    %v194 = vld [vmem:[#allocation2 + $0x38] sm:$0xf]
    %v195 = vld [vmem:[#allocation2 + $0x3c] sm:$0xf]
    %v196 = vld [vmem:[%s4] sm:$0x1]
    %v198 = vlaneseq
    %v199 = vshrl.u32 %v198, 7
    %v200 = vsub.s32 0, %v199
    %v201 = vrot.slane %v196, %v200
    %v219 = vunpack.c.l.b16 %v180
    %v220 = vunpack.c.l.b16 %v181
    %v221 = vunpack.c.l.b16 %v182
    %v222 = vunpack.c.l.b16 %v183
    %v223 = vunpack.c.l.b16 %v184
    %v224 = vunpack.c.l.b16 %v185
    %v225 = vunpack.c.l.b16 %v186
    %v226 = vunpack.c.l.b16 %v187
    %v227 = vunpack.c.l.b16 %v188
    %v228 = vunpack.c.l.b16 %v189
    %v229 = vunpack.c.l.b16 %v190
    %v230 = vunpack.c.l.b16 %v191
    %v231 = vunpack.c.l.b16 %v192
    %v232 = vunpack.c.l.b16 %v193
    %v233 = vunpack.c.l.b16 %v194
    %v234 = vunpack.c.l.b16 %v195
    %v235 = vpack.c.b16 %v220, %v219
    %v236 = vpack.c.b16 %v222, %v221
    %v237 = vpack.c.b16 %v224, %v223
    %v238 = vpack.c.b16 %v226, %v225
    %v239 = vpack.c.b16 %v228, %v227
    %v240 = vpack.c.b16 %v230, %v229
    %v241 = vpack.c.b16 %v232, %v231
    %v242 = vpack.c.b16 %v234, %v233
    %251 = vmatprep.subr.bf16.mxu0 0
    %252 = vmatpush1.bf16.msra.mxu0 %v235
    %253 = vmatprep.subr.bf16.mxu0 0
    %254 = vmatpush1.bf16.msra.mxu0 %v236
    %255 = vmatprep.subr.bf16.mxu0 0
    %256 = vmatpush1.bf16.msra.mxu0 %v237
    %257 = vmatprep.subr.bf16.mxu0 0
    %258 = vmatpush1.bf16.msra.mxu0 %v238
    %259 = vmatprep.subr.bf16.mxu0 0
    %260 = vmatpush1.bf16.msra.mxu0 %v239
    %261 = vmatprep.subr.bf16.mxu0 0
    %262 = vmatpush1.bf16.msra.mxu0 %v240
    %263 = vmatprep.subr.bf16.mxu0 0
    %264 = vmatpush1.bf16.msra.mxu0 %v241
    %265 = vmatprep.subr.bf16.mxu0 0
    %266 = vmatpush1.bf16.msra.mxu0 %v242
    %267 = vmatprep.subr.bf16.mxu0 0
    %268 = vmatpush1.bf16.msra.mxu0 0
    %269 = vmatprep.subr.bf16.mxu0 0
    %270 = vmatpush1.bf16.msra.mxu0 0
    %271 = vmatprep.subr.bf16.mxu0 0
    %272 = vmatpush1.bf16.msra.mxu0 0
    %273 = vmatprep.subr.bf16.mxu0 0
    %274 = vmatpush1.bf16.msra.mxu0 0
    %275 = vmatprep.subr.bf16.mxu0 0
    %276 = vmatpush1.bf16.msra.mxu0 0
    %277 = vmatprep.subr.bf16.mxu0 0
    %278 = vmatpush1.bf16.msra.mxu0 0
    %279 = vmatprep.subr.bf16.mxu0 0
    %280 = vmatpush1.bf16.msra.mxu0 0
    %281 = vmatprep.subr.bf16.mxu0 0
    %282 = vmatpush1.bf16.msra.mxu0 0
    %283 = vmatprep.mubr.bf16.mxu0 0
    %284 = vmatmul.mubr.bf16.gmra.mrb[0].mxu0 %v179
    %v285 = vpop.f32.mrb[0].mxu0
    %v286 = vadd.f32 %v201, %v285
    %v287 = vpop.f32.mrb[0].mxu0
    %v288 = vpop.f32.mrb[0].mxu0
    %v289 = vpop.f32.mrb[0].mxu0
    %290 = vdwg.mxu0
    %291 = vadd.xlane.f32.xlu0 %v286
    %v292 = vpop.xlane.xlu0 %291
    %v293 = vrcp.pop 128.0
    %v294 = vmul.f32 %v292, %v293
    %v295 = vsub.f32 %v286, %v294
    %v296 = vmul.f32 %v295, %v295
    %297 = vadd.xlane.f32.xlu0 %v296
    %v298 = vpop.xlane.xlu0 %297
    %v299 = vmul.f32 %v298, %v293
    %v300 = vadd.f32 %v299, 1e-05
    %v301 = vrsqrt.pop %v300
    %v302 = vmul.f32 %v295, %v301
    %v303 = vld [vmem:[%s5] sm:$0x1]
    %v305 = vlaneseq
    %v306 = vshrl.u32 %v305, 7
    %v307 = vsub.s32 0, %v306
    %v308 = vrot.slane %v303, %v307
    %v310 = vmul.f32 %v302, %v308
    %v311 = vld [vmem:[#allocation5] sm:$0x1]
    %v313 = vlaneseq
    %v314 = vshrl.u32 %v313, 7
    %v315 = vsub.s32 0, %v314
    %v316 = vrot.slane %v311, %v315
    %v318 = vadd.f32 %v310, %v316
    %v319 = vmax.f32 %v318, 0.0
    %v320 = vld [vmem:[%s1] sm:$0xff]
    %v321 = vlaneseq
    %v322 = vand.u32 %v321, 127
    %323 = vset.pattern.permute.xlu0 0
    %324 = vperm.xlu0 %323, %v320
    %v325 = vpop.permute.xlu0 %324
    %vm326 = vcmp.eq.s32.totalorder %v322, %v325
    %v327 = vsel %vm326, 1, 0
    %v328 = vcvt.s32.f32 %v327
    %v329 = vld [vmem:[%s2] sm:$0xff]
    %vm330 = vcmask 64512
    %v332 = vsel %vm330, %v328, 0
    %334 = vmatprep.subr.mxu0 0.0
    %335 = vmatpush1.msra.mxu0 %v329
    %336 = vmatprep.subr.mxu0 0.0
    %337 = vmatpush1.msra.mxu0 0.0
    %338 = vmatprep.subr.mxu0 0.0
    %339 = vmatpush1.msra.mxu0 0.0
    %340 = vmatprep.subr.mxu0 0.0
    %341 = vmatpush1.msra.mxu0 0.0
    %342 = vmatprep.subr.mxu0 0.0
    %343 = vmatpush1.msra.mxu0 0.0
    %344 = vmatprep.subr.mxu0 0.0
    %345 = vmatpush1.msra.mxu0 0.0
    %346 = vmatprep.subr.mxu0 0.0
    %347 = vmatpush1.msra.mxu0 0.0
    %348 = vmatprep.subr.mxu0 0.0
    %349 = vmatpush1.msra.mxu0 0.0
    %350 = vmatprep.subr.mxu0 0.0
    %351 = vmatpush1.msra.mxu0 0.0
    %352 = vmatprep.subr.mxu0 0.0
    %353 = vmatpush1.msra.mxu0 0.0
    %354 = vmatprep.subr.mxu0 0.0
    %355 = vmatpush1.msra.mxu0 0.0
    %356 = vmatprep.subr.mxu0 0.0
    %357 = vmatpush1.msra.mxu0 0.0
    %358 = vmatprep.subr.mxu0 0.0
    %359 = vmatpush1.msra.mxu0 0.0
    %360 = vmatprep.subr.mxu0 0.0
    %361 = vmatpush1.msra.mxu0 0.0
    %362 = vmatprep.subr.mxu0 0.0
    %363 = vmatpush1.msra.mxu0 0.0
    %364 = vmatprep.subr.mxu0 0.0
    %365 = vmatpush1.msra.mxu0 0.0
    %366 = vmatprep.subr.mxu0 0.0
    %367 = vmatpush1.msra.mxu0 0.0
    %368 = vmatprep.subr.mxu0 0.0
    %369 = vmatpush1.msra.mxu0 0.0
    %370 = vmatprep.subr.mxu0 0.0
    %371 = vmatpush1.msra.mxu0 0.0
    %372 = vmatprep.subr.mxu0 0.0
    %373 = vmatpush1.msra.mxu0 0.0
    %374 = vmatprep.subr.mxu0 0.0
    %375 = vmatpush1.msra.mxu0 0.0
    %376 = vmatprep.subr.mxu0 0.0
    %377 = vmatpush1.msra.mxu0 0.0
    %378 = vmatprep.subr.mxu0 0.0
    %379 = vmatpush1.msra.mxu0 0.0
    %380 = vmatprep.subr.mxu0 0.0
    %381 = vmatpush1.msra.mxu0 0.0
    %382 = vmatprep.subr.mxu0 0.0
    %383 = vmatpush1.msra.mxu0 0.0
    %384 = vmatprep.subr.mxu0 0.0
    %385 = vmatpush1.msra.mxu0 0.0
    %386 = vmatprep.subr.mxu0 0.0
    %387 = vmatpush1.msra.mxu0 0.0
    %388 = vmatprep.subr.mxu0 0.0
    %389 = vmatpush1.msra.mxu0 0.0
    %390 = vmatprep.subr.mxu0 0.0
    %391 = vmatpush1.msra.mxu0 0.0
    %392 = vmatprep.subr.mxu0 0.0
    %393 = vmatpush1.msra.mxu0 0.0
    %394 = vmatprep.subr.mxu0 0.0
    %395 = vmatpush1.msra.mxu0 0.0
    %396 = vmatprep.subr.mxu0 0.0
    %397 = vmatpush1.msra.mxu0 0.0
    %398 = vmatprep.mubr.f32.mxu0 0.0
    %399 = vmatmul.mubr.f32.gmra.mrb[0].mxu0 %v332
    %v400 = vpop.f32.mrb[0].mxu0
    %v401 = vadd.f32 0.0, %v400
    %v402 = vpop.f32.mrb[0].mxu0
    %403 = vdwg.mxu0
    %v404 = vadd.f32 %v319, %v401
    %v405 = vpack.c.bf16 %v404, %v404
    %v406 = vld [vmem:[#allocation7] sm:$0xff]
    %v407 = vld [vmem:[#allocation7 + $0x8] sm:$0xff]
    %v408 = vld [vmem:[#allocation7 + $0x10] sm:$0xff]
    %v409 = vld [vmem:[#allocation7 + $0x18] sm:$0xff]
    %v410 = vld [vmem:[#allocation7 + $0x20] sm:$0xff]
    %v411 = vld [vmem:[#allocation7 + $0x28] sm:$0xff]
    %v412 = vld [vmem:[#allocation7 + $0x30] sm:$0xff]
    %v413 = vld [vmem:[#allocation7 + $0x38] sm:$0xff]
    %v414 = vld [vmem:[#allocation7 + $0x40] sm:$0xff]
    %v415 = vld [vmem:[#allocation7 + $0x48] sm:$0xff]
    %v416 = vld [vmem:[#allocation7 + $0x50] sm:$0xff]
    %v417 = vld [vmem:[#allocation7 + $0x58] sm:$0xff]
    %v418 = vld [vmem:[#allocation7 + $0x60] sm:$0xff]
    %v419 = vld [vmem:[#allocation7 + $0x68] sm:$0xff]
    %v420 = vld [vmem:[#allocation7 + $0x70] sm:$0xff]
    %v421 = vld [vmem:[#allocation7 + $0x78] sm:$0xff]
    %v422 = vld [vmem:[#allocation7 + $0x80] sm:$0xff]
    %v423 = vld [vmem:[#allocation7 + $0x88] sm:$0xff]
    %v424 = vld [vmem:[#allocation7 + $0x90] sm:$0xff]
    %v425 = vld [vmem:[#allocation7 + $0x98] sm:$0xff]
    %v426 = vld [vmem:[#allocation7 + $0xa0] sm:$0xff]
    %v427 = vld [vmem:[#allocation7 + $0xa8] sm:$0xff]
    %v428 = vld [vmem:[#allocation7 + $0xb0] sm:$0xff]
    %v429 = vld [vmem:[#allocation7 + $0xb8] sm:$0xff]
    %v430 = vld [vmem:[#allocation7 + $0xc0] sm:$0xff]
    %v431 = vld [vmem:[#allocation7 + $0xc8] sm:$0xff]
    %v432 = vld [vmem:[#allocation7 + $0xd0] sm:$0xff]
    %v433 = vld [vmem:[#allocation7 + $0xd8] sm:$0xff]
    %v434 = vld [vmem:[#allocation7 + $0xe0] sm:$0xff]
    %v435 = vld [vmem:[#allocation7 + $0xe8] sm:$0xff]
    %v436 = vld [vmem:[#allocation7 + $0xf0] sm:$0xff]
    %v437 = vld [vmem:[#allocation7 + $0xf8] sm:$0xff]
    %v438 = vld [vmem:[%s8] sm:$0xf]
    %v440 = vlaneseq
    %v441 = vshrl.u32 %v440, 7
    %v442 = vsub.s32 0, %v441
    %v443 = vrot.slane %v438, %v442
    %v444 = vlaneseq
    %v445 = vshrl.u32 %v444, 7
    %v446 = vsub.s32 1, %v445
    %v447 = vrot.slane %v438, %v446
    %v448 = vlaneseq
    %v449 = vshrl.u32 %v448, 7
    %v450 = vsub.s32 2, %v449
    %v451 = vrot.slane %v438, %v450
    %v452 = vlaneseq
    %v453 = vshrl.u32 %v452, 7
    %v454 = vsub.s32 3, %v453
    %v455 = vrot.slane %v438, %v454
    %v492 = vunpack.c.l.b16 %v406
    %v493 = vunpack.c.h.b16 %v406
    %v494 = vunpack.c.l.b16 %v407
    %v495 = vunpack.c.h.b16 %v407
    %v496 = vunpack.c.l.b16 %v408
    %v497 = vunpack.c.h.b16 %v408
    %v498 = vunpack.c.l.b16 %v409
    %v499 = vunpack.c.h.b16 %v409
    %v500 = vunpack.c.l.b16 %v410
    %v501 = vunpack.c.h.b16 %v410
    %v502 = vunpack.c.l.b16 %v411
    %v503 = vunpack.c.h.b16 %v411
    %v504 = vunpack.c.l.b16 %v412
    %v505 = vunpack.c.h.b16 %v412
    %v506 = vunpack.c.l.b16 %v413
    %v507 = vunpack.c.h.b16 %v413
    %v508 = vunpack.c.l.b16 %v414
    %v509 = vunpack.c.h.b16 %v414
    %v510 = vunpack.c.l.b16 %v415
    %v511 = vunpack.c.h.b16 %v415
    %v512 = vunpack.c.l.b16 %v416
    %v513 = vunpack.c.h.b16 %v416
    %v514 = vunpack.c.l.b16 %v417
    %v515 = vunpack.c.h.b16 %v417
    %v516 = vunpack.c.l.b16 %v418
    %v517 = vunpack.c.h.b16 %v418
    %v518 = vunpack.c.l.b16 %v419
    %v519 = vunpack.c.h.b16 %v419
    %v520 = vunpack.c.l.b16 %v420
    %v521 = vunpack.c.h.b16 %v420
    %v522 = vunpack.c.l.b16 %v421
    %v523 = vunpack.c.h.b16 %v421
    %v524 = vunpack.c.l.b16 %v422
    %v525 = vunpack.c.h.b16 %v422
    %v526 = vunpack.c.l.b16 %v423
    %v527 = vunpack.c.h.b16 %v423
    %v528 = vunpack.c.l.b16 %v424
    %v529 = vunpack.c.h.b16 %v424
    %v530 = vunpack.c.l.b16 %v425
    %v531 = vunpack.c.h.b16 %v425
    %v532 = vunpack.c.l.b16 %v426
    %v533 = vunpack.c.h.b16 %v426
    %v534 = vunpack.c.l.b16 %v427
    %v535 = vunpack.c.h.b16 %v427
    %v536 = vunpack.c.l.b16 %v428
    %v537 = vunpack.c.h.b16 %v428
    %v538 = vunpack.c.l.b16 %v429
    %v539 = vunpack.c.h.b16 %v429
    %v540 = vunpack.c.l.b16 %v430
    %v541 = vunpack.c.h.b16 %v430
    %v542 = vunpack.c.l.b16 %v431
    %v543 = vunpack.c.h.b16 %v431
    %v544 = vunpack.c.l.b16 %v432
    %v545 = vunpack.c.h.b16 %v432
    %v546 = vunpack.c.l.b16 %v433
    %v547 = vunpack.c.h.b16 %v433
    %v548 = vunpack.c.l.b16 %v434
    %v549 = vunpack.c.h.b16 %v434
    %v550 = vunpack.c.l.b16 %v435
    %v551 = vunpack.c.h.b16 %v435
    %v552 = vunpack.c.l.b16 %v436
    %v553 = vunpack.c.h.b16 %v436
    %v554 = vunpack.c.l.b16 %v437
    %v555 = vunpack.c.h.b16 %v437
    %v556 = vpack.c.b16 %v496, %v492
    %v557 = vpack.c.b16 %v497, %v493
    %v558 = vpack.c.b16 %v498, %v494
    %v559 = vpack.c.b16 %v499, %v495
    %v560 = vpack.c.b16 %v504, %v500
    %v561 = vpack.c.b16 %v505, %v501
    %v562 = vpack.c.b16 %v506, %v502
    %v563 = vpack.c.b16 %v507, %v503
    %v564 = vpack.c.b16 %v512, %v508
    %v565 = vpack.c.b16 %v513, %v509
    %v566 = vpack.c.b16 %v514, %v510
    %v567 = vpack.c.b16 %v515, %v511
    %v568 = vpack.c.b16 %v520, %v516
    %v569 = vpack.c.b16 %v521, %v517
    %v570 = vpack.c.b16 %v522, %v518
    %v571 = vpack.c.b16 %v523, %v519
    %v572 = vpack.c.b16 %v528, %v524
    %v573 = vpack.c.b16 %v529, %v525
    %v574 = vpack.c.b16 %v530, %v526
    %v575 = vpack.c.b16 %v531, %v527
    %v576 = vpack.c.b16 %v536, %v532
    %v577 = vpack.c.b16 %v537, %v533
    %v578 = vpack.c.b16 %v538, %v534
    %v579 = vpack.c.b16 %v539, %v535
    %v580 = vpack.c.b16 %v544, %v540
    %v581 = vpack.c.b16 %v545, %v541
    %v582 = vpack.c.b16 %v546, %v542
    %v583 = vpack.c.b16 %v547, %v543
    %v584 = vpack.c.b16 %v552, %v548
    %v585 = vpack.c.b16 %v553, %v549
    %v586 = vpack.c.b16 %v554, %v550
    %v587 = vpack.c.b16 %v555, %v551
    %620 = vmatprep.subr.bf16.mxu0 %v557
    %621 = vmatpush1.bf16.msra.mxu0 %v556
    %622 = vmatprep.subr.bf16.mxu0 %v561
    %623 = vmatpush1.bf16.msra.mxu0 %v560
    %624 = vmatprep.subr.bf16.mxu0 %v565
    %625 = vmatpush1.bf16.msra.mxu0 %v564
    %626 = vmatprep.subr.bf16.mxu0 %v569
    %627 = vmatpush1.bf16.msra.mxu0 %v568
    %628 = vmatprep.subr.bf16.mxu0 %v573
    %629 = vmatpush1.bf16.msra.mxu0 %v572
    %630 = vmatprep.subr.bf16.mxu0 %v577
    %631 = vmatpush1.bf16.msra.mxu0 %v576
    %632 = vmatprep.subr.bf16.mxu0 %v581
    %633 = vmatpush1.bf16.msra.mxu0 %v580
    %634 = vmatprep.subr.bf16.mxu0 %v585
    %635 = vmatpush1.bf16.msra.mxu0 %v584
    %636 = vmatprep.subr.bf16.mxu0 0
    %637 = vmatpush1.bf16.msra.mxu0 0
    %638 = vmatprep.subr.bf16.mxu0 0
    %639 = vmatpush1.bf16.msra.mxu0 0
    %640 = vmatprep.subr.bf16.mxu0 0
    %641 = vmatpush1.bf16.msra.mxu0 0
    %642 = vmatprep.subr.bf16.mxu0 0
    %643 = vmatpush1.bf16.msra.mxu0 0
    %644 = vmatprep.subr.bf16.mxu0 0
    %645 = vmatpush1.bf16.msra.mxu0 0
    %646 = vmatprep.subr.bf16.mxu0 0
    %647 = vmatpush1.bf16.msra.mxu0 0
    %648 = vmatprep.subr.bf16.mxu0 0
    %649 = vmatpush1.bf16.msra.mxu0 0
    %650 = vmatprep.subr.bf16.mxu0 0
    %651 = vmatpush1.bf16.msra.mxu0 0
    %652 = vmatprep.mubr.bf16.mxu0 0
    %653 = vmatmul.mubr.bf16.gmra.mrb[0].mxu0 %v405
    %v654 = vpop.f32.mrb[0].mxu0
    %v655 = vadd.f32 %v443, %v654
    %v656 = vpop.f32.mrb[0].mxu0
    %v657 = vadd.f32 %v447, %v656
    %v658 = vpop.f32.mrb[0].mxu0
    %v659 = vpop.f32.mrb[0].mxu0
    %660 = vdwg.mxu0
    %661 = vmatprep.subr.bf16.mxu0 %v559
    %662 = vmatpush1.bf16.msra.mxu0 %v558
    %663 = vmatprep.subr.bf16.mxu0 %v563
    %664 = vmatpush1.bf16.msra.mxu0 %v562
    %665 = vmatprep.subr.bf16.mxu0 %v567
    %666 = vmatpush1.bf16.msra.mxu0 %v566
    %667 = vmatprep.subr.bf16.mxu0 %v571
    %668 = vmatpush1.bf16.msra.mxu0 %v570
    %669 = vmatprep.subr.bf16.mxu0 %v575
    %670 = vmatpush1.bf16.msra.mxu0 %v574
    %671 = vmatprep.subr.bf16.mxu0 %v579
    %672 = vmatpush1.bf16.msra.mxu0 %v578
    %673 = vmatprep.subr.bf16.mxu0 %v583
    %674 = vmatpush1.bf16.msra.mxu0 %v582
    %675 = vmatprep.subr.bf16.mxu0 %v587
    %676 = vmatpush1.bf16.msra.mxu0 %v586
    %677 = vmatprep.subr.bf16.mxu0 0
    %678 = vmatpush1.bf16.msra.mxu0 0
    %679 = vmatprep.subr.bf16.mxu0 0
    %680 = vmatpush1.bf16.msra.mxu0 0
    %681 = vmatprep.subr.bf16.mxu0 0
    %682 = vmatpush1.bf16.msra.mxu0 0
    %683 = vmatprep.subr.bf16.mxu0 0
    %684 = vmatpush1.bf16.msra.mxu0 0
    %685 = vmatprep.subr.bf16.mxu0 0
    %686 = vmatpush1.bf16.msra.mxu0 0
    %687 = vmatprep.subr.bf16.mxu0 0
    %688 = vmatpush1.bf16.msra.mxu0 0
    %689 = vmatprep.subr.bf16.mxu0 0
    %690 = vmatpush1.bf16.msra.mxu0 0
    %691 = vmatprep.subr.bf16.mxu0 0
    %692 = vmatpush1.bf16.msra.mxu0 0
    %693 = vmatprep.mubr.bf16.mxu0 0
    %694 = vmatmul.mubr.bf16.gmra.mrb[0].mxu0 %v405
    %v695 = vpop.f32.mrb[0].mxu0
    %v696 = vadd.f32 %v451, %v695
    %v697 = vpop.f32.mrb[0].mxu0
    %v698 = vadd.f32 %v455, %v697
    %v699 = vpop.f32.mrb[0].mxu0
    %v700 = vpop.f32.mrb[0].mxu0
    %701 = vdwg.mxu0
    %v702 = vmul.f32 %v655, %v655
    %v703 = vmul.f32 %v657, %v657
    %v704 = vmul.f32 %v696, %v696
    %v705 = vmul.f32 %v698, %v698
    %v706 = vmul.f32 %v655, %v702
    %v707 = vmul.f32 %v657, %v703
    %v708 = vmul.f32 %v696, %v704
    %v709 = vmul.f32 %v698, %v705
    %v710 = vmul.f32 %v706, 0.044715
    %v711 = vmul.f32 %v707, 0.044715
    %v712 = vmul.f32 %v708, 0.044715
    %v713 = vmul.f32 %v709, 0.044715
    %v714 = vadd.f32 %v655, %v710
    %v715 = vadd.f32 %v657, %v711
    %v716 = vadd.f32 %v696, %v712
    %v717 = vadd.f32 %v698, %v713
    %v718 = vmul.f32 %v714, 0.7978846
    %v719 = vmul.f32 %v715, 0.7978846
    %v720 = vmul.f32 %v716, 0.7978846
    %v721 = vmul.f32 %v717, 0.7978846
    %v722 = vtanh.pop %v718
    %v723 = vtanh.pop %v719
    %v724 = vtanh.pop %v720
    %v725 = vtanh.pop %v721
    %v726 = vadd.f32 %v722, 1.0
    %v727 = vadd.f32 %v723, 1.0
    %v728 = vadd.f32 %v724, 1.0
    %v729 = vadd.f32 %v725, 1.0
    %v730 = vmul.f32 %v726, 0.5
    %v731 = vmul.f32 %v727, 0.5
    %v732 = vmul.f32 %v728, 0.5
    %v733 = vmul.f32 %v729, 0.5
    %v734 = vmul.f32 %v655, %v730
    %v735 = vmul.f32 %v657, %v731
    %v736 = vmul.f32 %v696, %v732
    %v737 = vmul.f32 %v698, %v733
    %v738 = vpack.c.bf16 %v734, %v734
    %v739 = vpack.c.bf16 %v735, %v735
    %v740 = vpack.c.bf16 %v736, %v736
    %v741 = vpack.c.bf16 %v737, %v737
    %v742 = vld [vmem:[#allocation8] sm:$0xf]
    %v743 = vld [vmem:[#allocation8 + $0x4] sm:$0xf]
    %v744 = vld [vmem:[#allocation8 + $0x8] sm:$0xf]
    %v745 = vld [vmem:[#allocation8 + $0xc] sm:$0xf]
    %v746 = vld [vmem:[#allocation8 + $0x10] sm:$0xf]
    %v747 = vld [vmem:[#allocation8 + $0x14] sm:$0xf]
    %v748 = vld [vmem:[#allocation8 + $0x18] sm:$0xf]
    %v749 = vld [vmem:[#allocation8 + $0x1c] sm:$0xf]
    %v750 = vld [vmem:[#allocation8 + $0x20] sm:$0xf]
    %v751 = vld [vmem:[#allocation8 + $0x24] sm:$0xf]
    %v752 = vld [vmem:[#allocation8 + $0x28] sm:$0xf]
    %v753 = vld [vmem:[#allocation8 + $0x2c] sm:$0xf]
    %v754 = vld [vmem:[#allocation8 + $0x30] sm:$0xf]
    %v755 = vld [vmem:[#allocation8 + $0x34] sm:$0xf]
    %v756 = vld [vmem:[#allocation8 + $0x38] sm:$0xf]
    %v757 = vld [vmem:[#allocation8 + $0x3c] sm:$0xf]
    %v758 = vld [vmem:[#allocation8 + $0x40] sm:$0xf]
    %v759 = vld [vmem:[#allocation8 + $0x44] sm:$0xf]
    %v760 = vld [vmem:[#allocation8 + $0x48] sm:$0xf]
    %v761 = vld [vmem:[#allocation8 + $0x4c] sm:$0xf]
    %v762 = vld [vmem:[#allocation8 + $0x50] sm:$0xf]
    %v763 = vld [vmem:[#allocation8 + $0x54] sm:$0xf]
    %v764 = vld [vmem:[#allocation8 + $0x58] sm:$0xf]
    %v765 = vld [vmem:[#allocation8 + $0x5c] sm:$0xf]
    %v766 = vld [vmem:[#allocation8 + $0x60] sm:$0xf]
    %v767 = vld [vmem:[#allocation8 + $0x64] sm:$0xf]
    %v768 = vld [vmem:[#allocation8 + $0x68] sm:$0xf]
    %v769 = vld [vmem:[#allocation8 + $0x6c] sm:$0xf]
    %v770 = vld [vmem:[#allocation8 + $0x70] sm:$0xf]
    %v771 = vld [vmem:[#allocation8 + $0x74] sm:$0xf]
    %v772 = vld [vmem:[#allocation8 + $0x78] sm:$0xf]
    %v773 = vld [vmem:[#allocation8 + $0x7c] sm:$0xf]
    %v774 = vld [vmem:[#allocation8 + $0x80] sm:$0xf]
    %v775 = vld [vmem:[#allocation8 + $0x84] sm:$0xf]
    %v776 = vld [vmem:[#allocation8 + $0x88] sm:$0xf]
    %v777 = vld [vmem:[#allocation8 + $0x8c] sm:$0xf]
    %v778 = vld [vmem:[#allocation8 + $0x90] sm:$0xf]
    %v779 = vld [vmem:[#allocation8 + $0x94] sm:$0xf]
    %v780 = vld [vmem:[#allocation8 + $0x98] sm:$0xf]
    %v781 = vld [vmem:[#allocation8 + $0x9c] sm:$0xf]
    %v782 = vld [vmem:[#allocation8 + $0xa0] sm:$0xf]
    %v783 = vld [vmem:[#allocation8 + $0xa4] sm:$0xf]
    %v784 = vld [vmem:[#allocation8 + $0xa8] sm:$0xf]
    %v785 = vld [vmem:[#allocation8 + $0xac] sm:$0xf]
    %v786 = vld [vmem:[#allocation8 + $0xb0] sm:$0xf]
    %v787 = vld [vmem:[#allocation8 + $0xb4] sm:$0xf]
    %v788 = vld [vmem:[#allocation8 + $0xb8] sm:$0xf]
    %v789 = vld [vmem:[#allocation8 + $0xbc] sm:$0xf]
    %v790 = vld [vmem:[#allocation8 + $0xc0] sm:$0xf]
    %v791 = vld [vmem:[#allocation8 + $0xc4] sm:$0xf]
    %v792 = vld [vmem:[#allocation8 + $0xc8] sm:$0xf]
    %v793 = vld [vmem:[#allocation8 + $0xcc] sm:$0xf]
    %v794 = vld [vmem:[#allocation8 + $0xd0] sm:$0xf]
    %v795 = vld [vmem:[#allocation8 + $0xd4] sm:$0xf]
    %v796 = vld [vmem:[#allocation8 + $0xd8] sm:$0xf]
    %v797 = vld [vmem:[#allocation8 + $0xdc] sm:$0xf]
    %v798 = vld [vmem:[#allocation8 + $0xe0] sm:$0xf]
    %v799 = vld [vmem:[#allocation8 + $0xe4] sm:$0xf]
    %v800 = vld [vmem:[#allocation8 + $0xe8] sm:$0xf]
    %v801 = vld [vmem:[#allocation8 + $0xec] sm:$0xf]
    %v802 = vld [vmem:[#allocation8 + $0xf0] sm:$0xf]
    %v803 = vld [vmem:[#allocation8 + $0xf4] sm:$0xf]
    %v804 = vld [vmem:[#allocation8 + $0xf8] sm:$0xf]
    %v805 = vld [vmem:[#allocation8 + $0xfc] sm:$0xf]
    %v806 = vld [vmem:[#allocation10] sm:$0x1]
    %v808 = vlaneseq
    %v809 = vshrl.u32 %v808, 7
    %v810 = vsub.s32 0, %v809
    %v811 = vrot.slane %v806, %v810
    %v877 = vunpack.c.l.b16 %v742
    %v878 = vunpack.c.l.b16 %v743
    %v879 = vunpack.c.l.b16 %v744
    %v880 = vunpack.c.l.b16 %v745
    %v881 = vunpack.c.l.b16 %v746
    %v882 = vunpack.c.l.b16 %v747
    %v883 = vunpack.c.l.b16 %v748
    %v884 = vunpack.c.l.b16 %v749
    %v885 = vunpack.c.l.b16 %v750
    %v886 = vunpack.c.l.b16 %v751
    %v887 = vunpack.c.l.b16 %v752
    %v888 = vunpack.c.l.b16 %v753
    %v889 = vunpack.c.l.b16 %v754
    %v890 = vunpack.c.l.b16 %v755
    %v891 = vunpack.c.l.b16 %v756
    %v892 = vunpack.c.l.b16 %v757
    %v893 = vunpack.c.l.b16 %v758
    %v894 = vunpack.c.l.b16 %v759
    %v895 = vunpack.c.l.b16 %v760
    %v896 = vunpack.c.l.b16 %v761
    %v897 = vunpack.c.l.b16 %v762
    %v898 = vunpack.c.l.b16 %v763
    %v899 = vunpack.c.l.b16 %v764
    %v900 = vunpack.c.l.b16 %v765
    %v901 = vunpack.c.l.b16 %v766
    %v902 = vunpack.c.l.b16 %v767
    %v903 = vunpack.c.l.b16 %v768
    %v904 = vunpack.c.l.b16 %v769
    %v905 = vunpack.c.l.b16 %v770
    %v906 = vunpack.c.l.b16 %v771
    %v907 = vunpack.c.l.b16 %v772
    %v908 = vunpack.c.l.b16 %v773
    %v909 = vunpack.c.l.b16 %v774
    %v910 = vunpack.c.l.b16 %v775
    %v911 = vunpack.c.l.b16 %v776
    %v912 = vunpack.c.l.b16 %v777
    %v913 = vunpack.c.l.b16 %v778
    %v914 = vunpack.c.l.b16 %v779
    %v915 = vunpack.c.l.b16 %v780
    %v916 = vunpack.c.l.b16 %v781
    %v917 = vunpack.c.l.b16 %v782
    %v918 = vunpack.c.l.b16 %v783
    %v919 = vunpack.c.l.b16 %v784
    %v920 = vunpack.c.l.b16 %v785
    %v921 = vunpack.c.l.b16 %v786
    %v922 = vunpack.c.l.b16 %v787
    %v923 = vunpack.c.l.b16 %v788
    %v924 = vunpack.c.l.b16 %v789
    %v925 = vunpack.c.l.b16 %v790
    %v926 = vunpack.c.l.b16 %v791
    %v927 = vunpack.c.l.b16 %v792
    %v928 = vunpack.c.l.b16 %v793
    %v929 = vunpack.c.l.b16 %v794
    %v930 = vunpack.c.l.b16 %v795
    %v931 = vunpack.c.l.b16 %v796
    %v932 = vunpack.c.l.b16 %v797
    %v933 = vunpack.c.l.b16 %v798
    %v934 = vunpack.c.l.b16 %v799
    %v935 = vunpack.c.l.b16 %v800
    %v936 = vunpack.c.l.b16 %v801
    %v937 = vunpack.c.l.b16 %v802
    %v938 = vunpack.c.l.b16 %v803
    %v939 = vunpack.c.l.b16 %v804
    %v940 = vunpack.c.l.b16 %v805
    %v941 = vpack.c.b16 %v878, %v877
    %v942 = vpack.c.b16 %v880, %v879
    %v943 = vpack.c.b16 %v882, %v881
    %v944 = vpack.c.b16 %v884, %v883
    %v945 = vpack.c.b16 %v886, %v885
    %v946 = vpack.c.b16 %v888, %v887
    %v947 = vpack.c.b16 %v890, %v889
    %v948 = vpack.c.b16 %v892, %v891
    %v949 = vpack.c.b16 %v894, %v893
    %v950 = vpack.c.b16 %v896, %v895
    %v951 = vpack.c.b16 %v898, %v897
    %v952 = vpack.c.b16 %v900, %v899
    %v953 = vpack.c.b16 %v902, %v901
    %v954 = vpack.c.b16 %v904, %v903
    %v955 = vpack.c.b16 %v906, %v905
    %v956 = vpack.c.b16 %v908, %v907
    %v957 = vpack.c.b16 %v910, %v909
    %v958 = vpack.c.b16 %v912, %v911
    %v959 = vpack.c.b16 %v914, %v913
    %v960 = vpack.c.b16 %v916, %v915
    %v961 = vpack.c.b16 %v918, %v917
    %v962 = vpack.c.b16 %v920, %v919
    %v963 = vpack.c.b16 %v922, %v921
    %v964 = vpack.c.b16 %v924, %v923
    %v965 = vpack.c.b16 %v926, %v925
    %v966 = vpack.c.b16 %v928, %v927
    %v967 = vpack.c.b16 %v930, %v929
    %v968 = vpack.c.b16 %v932, %v931
    %v969 = vpack.c.b16 %v934, %v933
    %v970 = vpack.c.b16 %v936, %v935
    %v971 = vpack.c.b16 %v938, %v937
    %v972 = vpack.c.b16 %v940, %v939
    %1005 = vmatprep.subr.bf16.mxu0 0
    %1006 = vmatpush1.bf16.msra.mxu0 %v941
    %1007 = vmatprep.subr.bf16.mxu0 0
    %1008 = vmatpush1.bf16.msra.mxu0 %v942
    %1009 = vmatprep.subr.bf16.mxu0 0
    %1010 = vmatpush1.bf16.msra.mxu0 %v943
    %1011 = vmatprep.subr.bf16.mxu0 0
    %1012 = vmatpush1.bf16.msra.mxu0 %v944
    %1013 = vmatprep.subr.bf16.mxu0 0
    %1014 = vmatpush1.bf16.msra.mxu0 %v945
    %1015 = vmatprep.subr.bf16.mxu0 0
    %1016 = vmatpush1.bf16.msra.mxu0 %v946
    %1017 = vmatprep.subr.bf16.mxu0 0
    %1018 = vmatpush1.bf16.msra.mxu0 %v947
    %1019 = vmatprep.subr.bf16.mxu0 0
    %1020 = vmatpush1.bf16.msra.mxu0 %v948
    %1021 = vmatprep.subr.bf16.mxu0 0
    %1022 = vmatpush1.bf16.msra.mxu0 %v949
    %1023 = vmatprep.subr.bf16.mxu0 0
    %1024 = vmatpush1.bf16.msra.mxu0 %v950
    %1025 = vmatprep.subr.bf16.mxu0 0
    %1026 = vmatpush1.bf16.msra.mxu0 %v951
    %1027 = vmatprep.subr.bf16.mxu0 0
    %1028 = vmatpush1.bf16.msra.mxu0 %v952
    %1029 = vmatprep.subr.bf16.mxu0 0
    %1030 = vmatpush1.bf16.msra.mxu0 %v953
    %1031 = vmatprep.subr.bf16.mxu0 0
    %1032 = vmatpush1.bf16.msra.mxu0 %v954
    %1033 = vmatprep.subr.bf16.mxu0 0
    %1034 = vmatpush1.bf16.msra.mxu0 %v955
    %1035 = vmatprep.subr.bf16.mxu0 0
    %1036 = vmatpush1.bf16.msra.mxu0 %v956
    %1037 = vmatprep.mubr.bf16.mxu0 %v739
    %1038 = vmatmul.mubr.bf16.gmra.mrb[0].mxu0 %v738
    %v1039 = vpop.f32.mrb[0].mxu0
    %v1040 = vadd.f32 %v811, %v1039
    %v1041 = vpop.f32.mrb[0].mxu0
    %v1042 = vpop.f32.mrb[0].mxu0
    %v1043 = vpop.f32.mrb[0].mxu0
    %1044 = vdwg.mxu0
    %1045 = vmatprep.subr.bf16.mxu0 0
    %1046 = vmatpush1.bf16.msra.mxu0 %v957
    %1047 = vmatprep.subr.bf16.mxu0 0
    %1048 = vmatpush1.bf16.msra.mxu0 %v958
    %1049 = vmatprep.subr.bf16.mxu0 0
    %1050 = vmatpush1.bf16.msra.mxu0 %v959
    %1051 = vmatprep.subr.bf16.mxu0 0
    %1052 = vmatpush1.bf16.msra.mxu0 %v960
    %1053 = vmatprep.subr.bf16.mxu0 0
    %1054 = vmatpush1.bf16.msra.mxu0 %v961
    %1055 = vmatprep.subr.bf16.mxu0 0
    %1056 = vmatpush1.bf16.msra.mxu0 %v962
    %1057 = vmatprep.subr.bf16.mxu0 0
    %1058 = vmatpush1.bf16.msra.mxu0 %v963
    %1059 = vmatprep.subr.bf16.mxu0 0
    %1060 = vmatpush1.bf16.msra.mxu0 %v964
    %1061 = vmatprep.subr.bf16.mxu0 0
    %1062 = vmatpush1.bf16.msra.mxu0 %v965
    %1063 = vmatprep.subr.bf16.mxu0 0
    %1064 = vmatpush1.bf16.msra.mxu0 %v966
    %1065 = vmatprep.subr.bf16.mxu0 0
    %1066 = vmatpush1.bf16.msra.mxu0 %v967
    %1067 = vmatprep.subr.bf16.mxu0 0
    %1068 = vmatpush1.bf16.msra.mxu0 %v968
    %1069 = vmatprep.subr.bf16.mxu0 0
    %1070 = vmatpush1.bf16.msra.mxu0 %v969
    %1071 = vmatprep.subr.bf16.mxu0 0
    %1072 = vmatpush1.bf16.msra.mxu0 %v970
    %1073 = vmatprep.subr.bf16.mxu0 0
    %1074 = vmatpush1.bf16.msra.mxu0 %v971
    %1075 = vmatprep.subr.bf16.mxu0 0
    %1076 = vmatpush1.bf16.msra.mxu0 %v972
    %1077 = vmatprep.mubr.bf16.mxu0 %v741
    %1078 = vmatmul.mubr.bf16.gmra.mrb[0].mxu0 %v740
    %v1079 = vpop.f32.mrb[0].mxu0
    %v1080 = vadd.f32 %v1040, %v1079
    %v1081 = vpop.f32.mrb[0].mxu0
    %v1082 = vpop.f32.mrb[0].mxu0
    %v1083 = vpop.f32.mrb[0].mxu0
    %1084 = vdwg.mxu0
    %v1085 = vadd.f32 %v1080, %v404
    %v1086 = vpack.c.bf16 %v1085, %v1085
    %s1087 = scalar_lea.vmem [#allocation7], 256
    %v1088 = vld [vmem:[%s1087] sm:$0xff]
    %v1089 = vld [vmem:[%s1087 + $0x8] sm:$0xff]
    %v1090 = vld [vmem:[%s1087 + $0x10] sm:$0xff]
    %v1091 = vld [vmem:[%s1087 + $0x18] sm:$0xff]
    %v1092 = vld [vmem:[%s1087 + $0x20] sm:$0xff]
    %v1093 = vld [vmem:[%s1087 + $0x28] sm:$0xff]
    %v1094 = vld [vmem:[%s1087 + $0x30] sm:$0xff]
    %v1095 = vld [vmem:[%s1087 + $0x38] sm:$0xff]
    %v1096 = vld [vmem:[%s1087 + $0x40] sm:$0xff]
    %v1097 = vld [vmem:[%s1087 + $0x48] sm:$0xff]
    %v1098 = vld [vmem:[%s1087 + $0x50] sm:$0xff]
    %v1099 = vld [vmem:[%s1087 + $0x58] sm:$0xff]
    %v1100 = vld [vmem:[%s1087 + $0x60] sm:$0xff]
    %v1101 = vld [vmem:[%s1087 + $0x68] sm:$0xff]
    %v1102 = vld [vmem:[%s1087 + $0x70] sm:$0xff]
    %v1103 = vld [vmem:[%s1087 + $0x78] sm:$0xff]
    %v1104 = vld [vmem:[%s1087 + $0x80] sm:$0xff]
    %v1105 = vld [vmem:[%s1087 + $0x88] sm:$0xff]
    %v1106 = vld [vmem:[%s1087 + $0x90] sm:$0xff]
    %v1107 = vld [vmem:[%s1087 + $0x98] sm:$0xff]
    %v1108 = vld [vmem:[%s1087 + $0xa0] sm:$0xff]
    %v1109 = vld [vmem:[%s1087 + $0xa8] sm:$0xff]
    %v1110 = vld [vmem:[%s1087 + $0xb0] sm:$0xff]
    %v1111 = vld [vmem:[%s1087 + $0xb8] sm:$0xff]
    %v1112 = vld [vmem:[%s1087 + $0xc0] sm:$0xff]
    %v1113 = vld [vmem:[%s1087 + $0xc8] sm:$0xff]
    %v1114 = vld [vmem:[%s1087 + $0xd0] sm:$0xff]
    %v1115 = vld [vmem:[%s1087 + $0xd8] sm:$0xff]
    %v1116 = vld [vmem:[%s1087 + $0xe0] sm:$0xff]
    %v1117 = vld [vmem:[%s1087 + $0xe8] sm:$0xff]
    %v1118 = vld [vmem:[%s1087 + $0xf0] sm:$0xff]
    %v1119 = vld [vmem:[%s1087 + $0xf8] sm:$0xff]
    %s1120 = scalar_lea.vmem %s8, 4
    %v1121 = vld [vmem:[%s1120] sm:$0xf]
    %v1123 = vlaneseq
    %v1124 = vshrl.u32 %v1123, 7
    %v1125 = vsub.s32 0, %v1124
    %v1126 = vrot.slane %v1121, %v1125
    %v1127 = vlaneseq
    %v1128 = vshrl.u32 %v1127, 7
    %v1129 = vsub.s32 1, %v1128
    %v1130 = vrot.slane %v1121, %v1129
    %v1131 = vlaneseq
    %v1132 = vshrl.u32 %v1131, 7
    %v1133 = vsub.s32 2, %v1132
    %v1134 = vrot.slane %v1121, %v1133
    %v1135 = vlaneseq
    %v1136 = vshrl.u32 %v1135, 7
    %v1137 = vsub.s32 3, %v1136
    %v1138 = vrot.slane %v1121, %v1137
    %v1175 = vunpack.c.l.b16 %v1088
    %v1176 = vunpack.c.h.b16 %v1088
    %v1177 = vunpack.c.l.b16 %v1089
    %v1178 = vunpack.c.h.b16 %v1089
    %v1179 = vunpack.c.l.b16 %v1090
    %v1180 = vunpack.c.h.b16 %v1090
    %v1181 = vunpack.c.l.b16 %v1091
    %v1182 = vunpack.c.h.b16 %v1091
    %v1183 = vunpack.c.l.b16 %v1092
    %v1184 = vunpack.c.h.b16 %v1092
    %v1185 = vunpack.c.l.b16 %v1093
    %v1186 = vunpack.c.h.b16 %v1093
    %v1187 = vunpack.c.l.b16 %v1094
    %v1188 = vunpack.c.h.b16 %v1094
    %v1189 = vunpack.c.l.b16 %v1095
    %v1190 = vunpack.c.h.b16 %v1095
    %v1191 = vunpack.c.l.b16 %v1096
    %v1192 = vunpack.c.h.b16 %v1096
    %v1193 = vunpack.c.l.b16 %v1097
    %v1194 = vunpack.c.h.b16 %v1097
    %v1195 = vunpack.c.l.b16 %v1098
    %v1196 = vunpack.c.h.b16 %v1098
    %v1197 = vunpack.c.l.b16 %v1099
    %v1198 = vunpack.c.h.b16 %v1099
    %v1199 = vunpack.c.l.b16 %v1100
    %v1200 = vunpack.c.h.b16 %v1100
    %v1201 = vunpack.c.l.b16 %v1101
    %v1202 = vunpack.c.h.b16 %v1101
    %v1203 = vunpack.c.l.b16 %v1102
    %v1204 = vunpack.c.h.b16 %v1102
    %v1205 = vunpack.c.l.b16 %v1103
    %v1206 = vunpack.c.h.b16 %v1103
    %v1207 = vunpack.c.l.b16 %v1104
    %v1208 = vunpack.c.h.b16 %v1104
    %v1209 = vunpack.c.l.b16 %v1105
    %v1210 = vunpack.c.h.b16 %v1105
    %v1211 = vunpack.c.l.b16 %v1106
    %v1212 = vunpack.c.h.b16 %v1106
    %v1213 = vunpack.c.l.b16 %v1107
    %v1214 = vunpack.c.h.b16 %v1107
    %v1215 = vunpack.c.l.b16 %v1108
    %v1216 = vunpack.c.h.b16 %v1108
    %v1217 = vunpack.c.l.b16 %v1109
    %v1218 = vunpack.c.h.b16 %v1109
    %v1219 = vunpack.c.l.b16 %v1110
    %v1220 = vunpack.c.h.b16 %v1110
    %v1221 = vunpack.c.l.b16 %v1111
    %v1222 = vunpack.c.h.b16 %v1111
    %v1223 = vunpack.c.l.b16 %v1112
    %v1224 = vunpack.c.h.b16 %v1112
    %v1225 = vunpack.c.l.b16 %v1113
    %v1226 = vunpack.c.h.b16 %v1113
    %v1227 = vunpack.c.l.b16 %v1114
    %v1228 = vunpack.c.h.b16 %v1114
    %v1229 = vunpack.c.l.b16 %v1115
    %v1230 = vunpack.c.h.b16 %v1115
    %v1231 = vunpack.c.l.b16 %v1116
    %v1232 = vunpack.c.h.b16 %v1116
    %v1233 = vunpack.c.l.b16 %v1117
    %v1234 = vunpack.c.h.b16 %v1117
    %v1235 = vunpack.c.l.b16 %v1118
    %v1236 = vunpack.c.h.b16 %v1118
    %v1237 = vunpack.c.l.b16 %v1119
    %v1238 = vunpack.c.h.b16 %v1119
    %v1239 = vpack.c.b16 %v1179, %v1175
    %v1240 = vpack.c.b16 %v1180, %v1176
    %v1241 = vpack.c.b16 %v1181, %v1177
    %v1242 = vpack.c.b16 %v1182, %v1178
    %v1243 = vpack.c.b16 %v1187, %v1183
    %v1244 = vpack.c.b16 %v1188, %v1184
    %v1245 = vpack.c.b16 %v1189, %v1185
    %v1246 = vpack.c.b16 %v1190, %v1186
    %v1247 = vpack.c.b16 %v1195, %v1191
    %v1248 = vpack.c.b16 %v1196, %v1192
    %v1249 = vpack.c.b16 %v1197, %v1193
    %v1250 = vpack.c.b16 %v1198, %v1194
    %v1251 = vpack.c.b16 %v1203, %v1199
    %v1252 = vpack.c.b16 %v1204, %v1200
    %v1253 = vpack.c.b16 %v1205, %v1201
    %v1254 = vpack.c.b16 %v1206, %v1202
    %v1255 = vpack.c.b16 %v1211, %v1207
    %v1256 = vpack.c.b16 %v1212, %v1208
    %v1257 = vpack.c.b16 %v1213, %v1209
    %v1258 = vpack.c.b16 %v1214, %v1210
    %v1259 = vpack.c.b16 %v1219, %v1215
    %v1260 = vpack.c.b16 %v1220, %v1216
    %v1261 = vpack.c.b16 %v1221, %v1217
    %v1262 = vpack.c.b16 %v1222, %v1218
    %v1263 = vpack.c.b16 %v1227, %v1223
    %v1264 = vpack.c.b16 %v1228, %v1224
    %v1265 = vpack.c.b16 %v1229, %v1225
    %v1266 = vpack.c.b16 %v1230, %v1226
    %v1267 = vpack.c.b16 %v1235, %v1231
    %v1268 = vpack.c.b16 %v1236, %v1232
    %v1269 = vpack.c.b16 %v1237, %v1233
    %v1270 = vpack.c.b16 %v1238, %v1234
    %1303 = vmatprep.subr.bf16.mxu0 %v1240
    %1304 = vmatpush1.bf16.msra.mxu0 %v1239
    %1305 = vmatprep.subr.bf16.mxu0 %v1244
    %1306 = vmatpush1.bf16.msra.mxu0 %v1243
    %1307 = vmatprep.subr.bf16.mxu0 %v1248
    %1308 = vmatpush1.bf16.msra.mxu0 %v1247
    %1309 = vmatprep.subr.bf16.mxu0 %v1252
    %1310 = vmatpush1.bf16.msra.mxu0 %v1251
    %1311 = vmatprep.subr.bf16.mxu0 %v1256
    %1312 = vmatpush1.bf16.msra.mxu0 %v1255
    %1313 = vmatprep.subr.bf16.mxu0 %v1260
    %1314 = vmatpush1.bf16.msra.mxu0 %v1259
    %1315 = vmatprep.subr.bf16.mxu0 %v1264
    %1316 = vmatpush1.bf16.msra.mxu0 %v1263
    %1317 = vmatprep.subr.bf16.mxu0 %v1268
    %1318 = vmatpush1.bf16.msra.mxu0 %v1267
    %1319 = vmatprep.subr.bf16.mxu0 0
    %1320 = vmatpush1.bf16.msra.mxu0 0
    %1321 = vmatprep.subr.bf16.mxu0 0
    %1322 = vmatpush1.bf16.msra.mxu0 0
    %1323 = vmatprep.subr.bf16.mxu0 0
    %1324 = vmatpush1.bf16.msra.mxu0 0
    %1325 = vmatprep.subr.bf16.mxu0 0
    %1326 = vmatpush1.bf16.msra.mxu0 0
    %1327 = vmatprep.subr.bf16.mxu0 0
    %1328 = vmatpush1.bf16.msra.mxu0 0
    %1329 = vmatprep.subr.bf16.mxu0 0
    %1330 = vmatpush1.bf16.msra.mxu0 0
    %1331 = vmatprep.subr.bf16.mxu0 0
    %1332 = vmatpush1.bf16.msra.mxu0 0
    %1333 = vmatprep.subr.bf16.mxu0 0
    %1334 = vmatpush1.bf16.msra.mxu0 0
    %1335 = vmatprep.mubr.bf16.mxu0 0
    %1336 = vmatmul.mubr.bf16.gmra.mrb[0].mxu0 %v1086
    %v1337 = vpop.f32.mrb[0].mxu0
    %v1338 = vadd.f32 %v1126, %v1337
    %v1339 = vpop.f32.mrb[0].mxu0
    %v1340 = vadd.f32 %v1130, %v1339
    %v1341 = vpop.f32.mrb[0].mxu0
    %v1342 = vpop.f32.mrb[0].mxu0
    %1343 = vdwg.mxu0
    %1344 = vmatprep.subr.bf16.mxu0 %v1242
    %1345 = vmatpush1.bf16.msra.mxu0 %v1241
    %1346 = vmatprep.subr.bf16.mxu0 %v1246
    %1347 = vmatpush1.bf16.msra.mxu0 %v1245
    %1348 = vmatprep.subr.bf16.mxu0 %v1250
    %1349 = vmatpush1.bf16.msra.mxu0 %v1249
    %1350 = vmatprep.subr.bf16.mxu0 %v1254
    %1351 = vmatpush1.bf16.msra.mxu0 %v1253
    %1352 = vmatprep.subr.bf16.mxu0 %v1258
    %1353 = vmatpush1.bf16.msra.mxu0 %v1257
    %1354 = vmatprep.subr.bf16.mxu0 %v1262
    %1355 = vmatpush1.bf16.msra.mxu0 %v1261
    %1356 = vmatprep.subr.bf16.mxu0 %v1266
    %1357 = vmatpush1.bf16.msra.mxu0 %v1265
    %1358 = vmatprep.subr.bf16.mxu0 %v1270
    %1359 = vmatpush1.bf16.msra.mxu0 %v1269
    %1360 = vmatprep.subr.bf16.mxu0 0
    %1361 = vmatpush1.bf16.msra.mxu0 0
    %1362 = vmatprep.subr.bf16.mxu0 0
    %1363 = vmatpush1.bf16.msra.mxu0 0
    %1364 = vmatprep.subr.bf16.mxu0 0
    %1365 = vmatpush1.bf16.msra.mxu0 0
    %1366 = vmatprep.subr.bf16.mxu0 0
    %1367 = vmatpush1.bf16.msra.mxu0 0
    %1368 = vmatprep.subr.bf16.mxu0 0
    %1369 = vmatpush1.bf16.msra.mxu0 0
    %1370 = vmatprep.subr.bf16.mxu0 0
    %1371 = vmatpush1.bf16.msra.mxu0 0
    %1372 = vmatprep.subr.bf16.mxu0 0
    %1373 = vmatpush1.bf16.msra.mxu0 0
    %1374 = vmatprep.subr.bf16.mxu0 0
    %1375 = vmatpush1.bf16.msra.mxu0 0
    %1376 = vmatprep.mubr.bf16.mxu0 0
    %1377 = vmatmul.mubr.bf16.gmra.mrb[0].mxu0 %v1086
    %v1378 = vpop.f32.mrb[0].mxu0
    %v1379 = vadd.f32 %v1134, %v1378
    %v1380 = vpop.f32.mrb[0].mxu0
    %v1381 = vadd.f32 %v1138, %v1380
    %v1382 = vpop.f32.mrb[0].mxu0
    %v1383 = vpop.f32.mrb[0].mxu0
    %1384 = vdwg.mxu0
    %v1385 = vmul.f32 %v1338, %v1338
    %v1386 = vmul.f32 %v1340, %v1340
    %v1387 = vmul.f32 %v1379, %v1379
    %v1388 = vmul.f32 %v1381, %v1381
    %v1389 = vmul.f32 %v1338, %v1385
    %v1390 = vmul.f32 %v1340, %v1386
    %v1391 = vmul.f32 %v1379, %v1387
    %v1392 = vmul.f32 %v1381, %v1388
    %v1393 = vmul.f32 %v1389, 0.044715
    %v1394 = vmul.f32 %v1390, 0.044715
    %v1395 = vmul.f32 %v1391, 0.044715
    %v1396 = vmul.f32 %v1392, 0.044715
    %v1397 = vadd.f32 %v1338, %v1393
    %v1398 = vadd.f32 %v1340, %v1394
    %v1399 = vadd.f32 %v1379, %v1395
    %v1400 = vadd.f32 %v1381, %v1396
    %v1401 = vmul.f32 %v1397, 0.7978846
    %v1402 = vmul.f32 %v1398, 0.7978846
    %v1403 = vmul.f32 %v1399, 0.7978846
    %v1404 = vmul.f32 %v1400, 0.7978846
    %v1405 = vtanh.pop %v1401
    %v1406 = vtanh.pop %v1402
    %v1407 = vtanh.pop %v1403
    %v1408 = vtanh.pop %v1404
    %v1409 = vadd.f32 %v1405, 1.0
    %v1410 = vadd.f32 %v1406, 1.0
    %v1411 = vadd.f32 %v1407, 1.0
    %v1412 = vadd.f32 %v1408, 1.0
    %v1413 = vmul.f32 %v1409, 0.5
    %v1414 = vmul.f32 %v1410, 0.5
    %v1415 = vmul.f32 %v1411, 0.5
    %v1416 = vmul.f32 %v1412, 0.5
    %v1417 = vmul.f32 %v1338, %v1413
    %v1418 = vmul.f32 %v1340, %v1414
    %v1419 = vmul.f32 %v1379, %v1415
    %v1420 = vmul.f32 %v1381, %v1416
    %v1421 = vpack.c.bf16 %v1417, %v1417
    %v1422 = vpack.c.bf16 %v1418, %v1418
    %v1423 = vpack.c.bf16 %v1419, %v1419
    %v1424 = vpack.c.bf16 %v1420, %v1420
    %s1425 = scalar_lea.vmem [#allocation8], 256
    %v1426 = vld [vmem:[%s1425] sm:$0xf]
    %v1427 = vld [vmem:[%s1425 + $0x4] sm:$0xf]
    %v1428 = vld [vmem:[%s1425 + $0x8] sm:$0xf]
    %v1429 = vld [vmem:[%s1425 + $0xc] sm:$0xf]
    %v1430 = vld [vmem:[%s1425 + $0x10] sm:$0xf]
    %v1431 = vld [vmem:[%s1425 + $0x14] sm:$0xf]
    %v1432 = vld [vmem:[%s1425 + $0x18] sm:$0xf]
    %v1433 = vld [vmem:[%s1425 + $0x1c] sm:$0xf]
    %v1434 = vld [vmem:[%s1425 + $0x20] sm:$0xf]
    %v1435 = vld [vmem:[%s1425 + $0x24] sm:$0xf]
    %v1436 = vld [vmem:[%s1425 + $0x28] sm:$0xf]
    %v1437 = vld [vmem:[%s1425 + $0x2c] sm:$0xf]
    %v1438 = vld [vmem:[%s1425 + $0x30] sm:$0xf]
    %v1439 = vld [vmem:[%s1425 + $0x34] sm:$0xf]
    %v1440 = vld [vmem:[%s1425 + $0x38] sm:$0xf]
    %v1441 = vld [vmem:[%s1425 + $0x3c] sm:$0xf]
    %v1442 = vld [vmem:[%s1425 + $0x40] sm:$0xf]
    %v1443 = vld [vmem:[%s1425 + $0x44] sm:$0xf]
    %v1444 = vld [vmem:[%s1425 + $0x48] sm:$0xf]
    %v1445 = vld [vmem:[%s1425 + $0x4c] sm:$0xf]
    %v1446 = vld [vmem:[%s1425 + $0x50] sm:$0xf]
    %v1447 = vld [vmem:[%s1425 + $0x54] sm:$0xf]
    %v1448 = vld [vmem:[%s1425 + $0x58] sm:$0xf]
    %v1449 = vld [vmem:[%s1425 + $0x5c] sm:$0xf]
    %v1450 = vld [vmem:[%s1425 + $0x60] sm:$0xf]
    %v1451 = vld [vmem:[%s1425 + $0x64] sm:$0xf]
    %v1452 = vld [vmem:[%s1425 + $0x68] sm:$0xf]
    %v1453 = vld [vmem:[%s1425 + $0x6c] sm:$0xf]
    %v1454 = vld [vmem:[%s1425 + $0x70] sm:$0xf]
    %v1455 = vld [vmem:[%s1425 + $0x74] sm:$0xf]
    %v1456 = vld [vmem:[%s1425 + $0x78] sm:$0xf]
    %v1457 = vld [vmem:[%s1425 + $0x7c] sm:$0xf]
    %v1458 = vld [vmem:[%s1425 + $0x80] sm:$0xf]
    %v1459 = vld [vmem:[%s1425 + $0x84] sm:$0xf]
    %v1460 = vld [vmem:[%s1425 + $0x88] sm:$0xf]
    %v1461 = vld [vmem:[%s1425 + $0x8c] sm:$0xf]
    %v1462 = vld [vmem:[%s1425 + $0x90] sm:$0xf]
    %v1463 = vld [vmem:[%s1425 + $0x94] sm:$0xf]
    %v1464 = vld [vmem:[%s1425 + $0x98] sm:$0xf]
    %v1465 = vld [vmem:[%s1425 + $0x9c] sm:$0xf]
    %v1466 = vld [vmem:[%s1425 + $0xa0] sm:$0xf]
    %v1467 = vld [vmem:[%s1425 + $0xa4] sm:$0xf]
    %v1468 = vld [vmem:[%s1425 + $0xa8] sm:$0xf]
    %v1469 = vld [vmem:[%s1425 + $0xac] sm:$0xf]
    %v1470 = vld [vmem:[%s1425 + $0xb0] sm:$0xf]
    %v1471 = vld [vmem:[%s1425 + $0xb4] sm:$0xf]
    %v1472 = vld [vmem:[%s1425 + $0xb8] sm:$0xf]
    %v1473 = vld [vmem:[%s1425 + $0xbc] sm:$0xf]
    %v1474 = vld [vmem:[%s1425 + $0xc0] sm:$0xf]
    %v1475 = vld [vmem:[%s1425 + $0xc4] sm:$0xf]
    %v1476 = vld [vmem:[%s1425 + $0xc8] sm:$0xf]
    %v1477 = vld [vmem:[%s1425 + $0xcc] sm:$0xf]
    %v1478 = vld [vmem:[%s1425 + $0xd0] sm:$0xf]
    %v1479 = vld [vmem:[%s1425 + $0xd4] sm:$0xf]
    %v1480 = vld [vmem:[%s1425 + $0xd8] sm:$0xf]
    %v1481 = vld [vmem:[%s1425 + $0xdc] sm:$0xf]
    %v1482 = vld [vmem:[%s1425 + $0xe0] sm:$0xf]
    %v1483 = vld [vmem:[%s1425 + $0xe4] sm:$0xf]
    %v1484 = vld [vmem:[%s1425 + $0xe8] sm:$0xf]
    %v1485 = vld [vmem:[%s1425 + $0xec] sm:$0xf]
    %v1486 = vld [vmem:[%s1425 + $0xf0] sm:$0xf]
    %v1487 = vld [vmem:[%s1425 + $0xf4] sm:$0xf]
    %v1488 = vld [vmem:[%s1425 + $0xf8] sm:$0xf]
    %v1489 = vld [vmem:[%s1425 + $0xfc] sm:$0xf]
    %s1490 = scalar_lea.vmem [#allocation10], 1
    %v1491 = vld [vmem:[%s1490] sm:$0x1]
    %v1493 = vlaneseq
    %v1494 = vshrl.u32 %v1493, 7
    %v1495 = vsub.s32 0, %v1494
    %v1496 = vrot.slane %v1491, %v1495
    %v1562 = vunpack.c.l.b16 %v1426
    %v1563 = vunpack.c.l.b16 %v1427
    %v1564 = vunpack.c.l.b16 %v1428
    %v1565 = vunpack.c.l.b16 %v1429
    %v1566 = vunpack.c.l.b16 %v1430
    %v1567 = vunpack.c.l.b16 %v1431
    %v1568 = vunpack.c.l.b16 %v1432
    %v1569 = vunpack.c.l.b16 %v1433
    %v1570 = vunpack.c.l.b16 %v1434
    %v1571 = vunpack.c.l.b16 %v1435
    %v1572 = vunpack.c.l.b16 %v1436
    %v1573 = vunpack.c.l.b16 %v1437
    %v1574 = vunpack.c.l.b16 %v1438
    %v1575 = vunpack.c.l.b16 %v1439
    %v1576 = vunpack.c.l.b16 %v1440
    %v1577 = vunpack.c.l.b16 %v1441
    %v1578 = vunpack.c.l.b16 %v1442
    %v1579 = vunpack.c.l.b16 %v1443
    %v1580 = vunpack.c.l.b16 %v1444
    %v1581 = vunpack.c.l.b16 %v1445
    %v1582 = vunpack.c.l.b16 %v1446
    %v1583 = vunpack.c.l.b16 %v1447
    %v1584 = vunpack.c.l.b16 %v1448
    %v1585 = vunpack.c.l.b16 %v1449
    %v1586 = vunpack.c.l.b16 %v1450
    %v1587 = vunpack.c.l.b16 %v1451
    %v1588 = vunpack.c.l.b16 %v1452
    %v1589 = vunpack.c.l.b16 %v1453
    %v1590 = vunpack.c.l.b16 %v1454
    %v1591 = vunpack.c.l.b16 %v1455
    %v1592 = vunpack.c.l.b16 %v1456
    %v1593 = vunpack.c.l.b16 %v1457
    %v1594 = vunpack.c.l.b16 %v1458
    %v1595 = vunpack.c.l.b16 %v1459
    %v1596 = vunpack.c.l.b16 %v1460
    %v1597 = vunpack.c.l.b16 %v1461
    %v1598 = vunpack.c.l.b16 %v1462
    %v1599 = vunpack.c.l.b16 %v1463
    %v1600 = vunpack.c.l.b16 %v1464
    %v1601 = vunpack.c.l.b16 %v1465
    %v1602 = vunpack.c.l.b16 %v1466
    %v1603 = vunpack.c.l.b16 %v1467
    %v1604 = vunpack.c.l.b16 %v1468
    %v1605 = vunpack.c.l.b16 %v1469
    %v1606 = vunpack.c.l.b16 %v1470
    %v1607 = vunpack.c.l.b16 %v1471
    %v1608 = vunpack.c.l.b16 %v1472
    %v1609 = vunpack.c.l.b16 %v1473
    %v1610 = vunpack.c.l.b16 %v1474
    %v1611 = vunpack.c.l.b16 %v1475
    %v1612 = vunpack.c.l.b16 %v1476
    %v1613 = vunpack.c.l.b16 %v1477
    %v1614 = vunpack.c.l.b16 %v1478
    %v1615 = vunpack.c.l.b16 %v1479
    %v1616 = vunpack.c.l.b16 %v1480
    %v1617 = vunpack.c.l.b16 %v1481
    %v1618 = vunpack.c.l.b16 %v1482
    %v1619 = vunpack.c.l.b16 %v1483
    %v1620 = vunpack.c.l.b16 %v1484
    %v1621 = vunpack.c.l.b16 %v1485
    %v1622 = vunpack.c.l.b16 %v1486
    %v1623 = vunpack.c.l.b16 %v1487
    %v1624 = vunpack.c.l.b16 %v1488
    %v1625 = vunpack.c.l.b16 %v1489
    %v1626 = vpack.c.b16 %v1563, %v1562
    %v1627 = vpack.c.b16 %v1565, %v1564
    %v1628 = vpack.c.b16 %v1567, %v1566
    %v1629 = vpack.c.b16 %v1569, %v1568
    %v1630 = vpack.c.b16 %v1571, %v1570
    %v1631 = vpack.c.b16 %v1573, %v1572
    %v1632 = vpack.c.b16 %v1575, %v1574
    %v1633 = vpack.c.b16 %v1577, %v1576
    %v1634 = vpack.c.b16 %v1579, %v1578
    %v1635 = vpack.c.b16 %v1581, %v1580
    %v1636 = vpack.c.b16 %v1583, %v1582
    %v1637 = vpack.c.b16 %v1585, %v1584
    %v1638 = vpack.c.b16 %v1587, %v1586
    %v1639 = vpack.c.b16 %v1589, %v1588
    %v1640 = vpack.c.b16 %v1591, %v1590
    %v1641 = vpack.c.b16 %v1593, %v1592
    %v1642 = vpack.c.b16 %v1595, %v1594
    %v1643 = vpack.c.b16 %v1597, %v1596
    %v1644 = vpack.c.b16 %v1599, %v1598
    %v1645 = vpack.c.b16 %v1601, %v1600
    %v1646 = vpack.c.b16 %v1603, %v1602
    %v1647 = vpack.c.b16 %v1605, %v1604
    %v1648 = vpack.c.b16 %v1607, %v1606
    %v1649 = vpack.c.b16 %v1609, %v1608
    %v1650 = vpack.c.b16 %v1611, %v1610
    %v1651 = vpack.c.b16 %v1613, %v1612
    %v1652 = vpack.c.b16 %v1615, %v1614
    %v1653 = vpack.c.b16 %v1617, %v1616
    %v1654 = vpack.c.b16 %v1619, %v1618
    %v1655 = vpack.c.b16 %v1621, %v1620
    %v1656 = vpack.c.b16 %v1623, %v1622
    %v1657 = vpack.c.b16 %v1625, %v1624
    %1690 = vmatprep.subr.bf16.mxu0 0
    %1691 = vmatpush1.bf16.msra.mxu0 %v1626
    %1692 = vmatprep.subr.bf16.mxu0 0
    %1693 = vmatpush1.bf16.msra.mxu0 %v1627
    %1694 = vmatprep.subr.bf16.mxu0 0
    %1695 = vmatpush1.bf16.msra.mxu0 %v1628
    %1696 = vmatprep.subr.bf16.mxu0 0
    %1697 = vmatpush1.bf16.msra.mxu0 %v1629
    %1698 = vmatprep.subr.bf16.mxu0 0
    %1699 = vmatpush1.bf16.msra.mxu0 %v1630
    %1700 = vmatprep.subr.bf16.mxu0 0
    %1701 = vmatpush1.bf16.msra.mxu0 %v1631
    %1702 = vmatprep.subr.bf16.mxu0 0
    %1703 = vmatpush1.bf16.msra.mxu0 %v1632
    %1704 = vmatprep.subr.bf16.mxu0 0
    %1705 = vmatpush1.bf16.msra.mxu0 %v1633
    %1706 = vmatprep.subr.bf16.mxu0 0
    %1707 = vmatpush1.bf16.msra.mxu0 %v1634
    %1708 = vmatprep.subr.bf16.mxu0 0
    %1709 = vmatpush1.bf16.msra.mxu0 %v1635
    %1710 = vmatprep.subr.bf16.mxu0 0
    %1711 = vmatpush1.bf16.msra.mxu0 %v1636
    %1712 = vmatprep.subr.bf16.mxu0 0
    %1713 = vmatpush1.bf16.msra.mxu0 %v1637
    %1714 = vmatprep.subr.bf16.mxu0 0
    %1715 = vmatpush1.bf16.msra.mxu0 %v1638
    %1716 = vmatprep.subr.bf16.mxu0 0
    %1717 = vmatpush1.bf16.msra.mxu0 %v1639
    %1718 = vmatprep.subr.bf16.mxu0 0
    %1719 = vmatpush1.bf16.msra.mxu0 %v1640
    %1720 = vmatprep.subr.bf16.mxu0 0
    %1721 = vmatpush1.bf16.msra.mxu0 %v1641
    %1722 = vmatprep.mubr.bf16.mxu0 %v1422
    %1723 = vmatmul.mubr.bf16.gmra.mrb[0].mxu0 %v1421
    %v1724 = vpop.f32.mrb[0].mxu0
    %v1725 = vadd.f32 %v1496, %v1724
    %v1726 = vpop.f32.mrb[0].mxu0
    %v1727 = vpop.f32.mrb[0].mxu0
    %v1728 = vpop.f32.mrb[0].mxu0
    %1729 = vdwg.mxu0
    %1730 = vmatprep.subr.bf16.mxu0 0
    %1731 = vmatpush1.bf16.msra.mxu0 %v1642
    %1732 = vmatprep.subr.bf16.mxu0 0
    %1733 = vmatpush1.bf16.msra.mxu0 %v1643
    %1734 = vmatprep.subr.bf16.mxu0 0
    %1735 = vmatpush1.bf16.msra.mxu0 %v1644
    %1736 = vmatprep.subr.bf16.mxu0 0
    %1737 = vmatpush1.bf16.msra.mxu0 %v1645
    %1738 = vmatprep.subr.bf16.mxu0 0
    %1739 = vmatpush1.bf16.msra.mxu0 %v1646
    %1740 = vmatprep.subr.bf16.mxu0 0
    %1741 = vmatpush1.bf16.msra.mxu0 %v1647
    %1742 = vmatprep.subr.bf16.mxu0 0
    %1743 = vmatpush1.bf16.msra.mxu0 %v1648
    %1744 = vmatprep.subr.bf16.mxu0 0
    %1745 = vmatpush1.bf16.msra.mxu0 %v1649
    %1746 = vmatprep.subr.bf16.mxu0 0
    %1747 = vmatpush1.bf16.msra.mxu0 %v1650
    %1748 = vmatprep.subr.bf16.mxu0 0
    %1749 = vmatpush1.bf16.msra.mxu0 %v1651
    %1750 = vmatprep.subr.bf16.mxu0 0
    %1751 = vmatpush1.bf16.msra.mxu0 %v1652
    %1752 = vmatprep.subr.bf16.mxu0 0
    %1753 = vmatpush1.bf16.msra.mxu0 %v1653
    %1754 = vmatprep.subr.bf16.mxu0 0
    %1755 = vmatpush1.bf16.msra.mxu0 %v1654
    %1756 = vmatprep.subr.bf16.mxu0 0
    %1757 = vmatpush1.bf16.msra.mxu0 %v1655
    %1758 = vmatprep.subr.bf16.mxu0 0
    %1759 = vmatpush1.bf16.msra.mxu0 %v1656
    %1760 = vmatprep.subr.bf16.mxu0 0
    %1761 = vmatpush1.bf16.msra.mxu0 %v1657
    %1762 = vmatprep.mubr.bf16.mxu0 %v1424
    %1763 = vmatmul.mubr.bf16.gmra.mrb[0].mxu0 %v1423
    %v1764 = vpop.f32.mrb[0].mxu0
    %v1765 = vadd.f32 %v1725, %v1764
    %v1766 = vpop.f32.mrb[0].mxu0
    %v1767 = vpop.f32.mrb[0].mxu0
    %v1768 = vpop.f32.mrb[0].mxu0
    %1769 = vdwg.mxu0
    %v1770 = vadd.f32 %v1765, %v1085
    %v1771 = vpack.c.bf16 %v1770, %v1770
    %s1772 = scalar_lea.vmem [#allocation7], 512
    %v1773 = vld [vmem:[%s1772] sm:$0xff]
    %v1774 = vld [vmem:[%s1772 + $0x8] sm:$0xff]
    %v1775 = vld [vmem:[%s1772 + $0x10] sm:$0xff]
    %v1776 = vld [vmem:[%s1772 + $0x18] sm:$0xff]
    %v1777 = vld [vmem:[%s1772 + $0x20] sm:$0xff]
    %v1778 = vld [vmem:[%s1772 + $0x28] sm:$0xff]
    %v1779 = vld [vmem:[%s1772 + $0x30] sm:$0xff]
    %v1780 = vld [vmem:[%s1772 + $0x38] sm:$0xff]
    %v1781 = vld [vmem:[%s1772 + $0x40] sm:$0xff]
    %v1782 = vld [vmem:[%s1772 + $0x48] sm:$0xff]
    %v1783 = vld [vmem:[%s1772 + $0x50] sm:$0xff]
    %v1784 = vld [vmem:[%s1772 + $0x58] sm:$0xff]
    %v1785 = vld [vmem:[%s1772 + $0x60] sm:$0xff]
    %v1786 = vld [vmem:[%s1772 + $0x68] sm:$0xff]
    %v1787 = vld [vmem:[%s1772 + $0x70] sm:$0xff]
    %v1788 = vld [vmem:[%s1772 + $0x78] sm:$0xff]
    %v1789 = vld [vmem:[%s1772 + $0x80] sm:$0xff]
    %v1790 = vld [vmem:[%s1772 + $0x88] sm:$0xff]
    %v1791 = vld [vmem:[%s1772 + $0x90] sm:$0xff]
    %v1792 = vld [vmem:[%s1772 + $0x98] sm:$0xff]
    %v1793 = vld [vmem:[%s1772 + $0xa0] sm:$0xff]
    %v1794 = vld [vmem:[%s1772 + $0xa8] sm:$0xff]
    %v1795 = vld [vmem:[%s1772 + $0xb0] sm:$0xff]
    %v1796 = vld [vmem:[%s1772 + $0xb8] sm:$0xff]
    %v1797 = vld [vmem:[%s1772 + $0xc0] sm:$0xff]
    %v1798 = vld [vmem:[%s1772 + $0xc8] sm:$0xff]
    %v1799 = vld [vmem:[%s1772 + $0xd0] sm:$0xff]
    %v1800 = vld [vmem:[%s1772 + $0xd8] sm:$0xff]
    %v1801 = vld [vmem:[%s1772 + $0xe0] sm:$0xff]
    %v1802 = vld [vmem:[%s1772 + $0xe8] sm:$0xff]
    %v1803 = vld [vmem:[%s1772 + $0xf0] sm:$0xff]
    %v1804 = vld [vmem:[%s1772 + $0xf8] sm:$0xff]
    %s1805 = scalar_lea.vmem %s8, 8
    %v1806 = vld [vmem:[%s1805] sm:$0xf]
    %v1808 = vlaneseq
    %v1809 = vshrl.u32 %v1808, 7
    %v1810 = vsub.s32 0, %v1809
    %v1811 = vrot.slane %v1806, %v1810
    %v1812 = vlaneseq
    %v1813 = vshrl.u32 %v1812, 7
    %v1814 = vsub.s32 1, %v1813
    %v1815 = vrot.slane %v1806, %v1814
    %v1816 = vlaneseq
    %v1817 = vshrl.u32 %v1816, 7
    %v1818 = vsub.s32 2, %v1817
    %v1819 = vrot.slane %v1806, %v1818
    %v1820 = vlaneseq
    %v1821 = vshrl.u32 %v1820, 7
    %v1822 = vsub.s32 3, %v1821
    %v1823 = vrot.slane %v1806, %v1822
    %v1860 = vunpack.c.l.b16 %v1773
    %v1861 = vunpack.c.h.b16 %v1773
    %v1862 = vunpack.c.l.b16 %v1774
    %v1863 = vunpack.c.h.b16 %v1774
    %v1864 = vunpack.c.l.b16 %v1775
    %v1865 = vunpack.c.h.b16 %v1775
    %v1866 = vunpack.c.l.b16 %v1776
    %v1867 = vunpack.c.h.b16 %v1776
    %v1868 = vunpack.c.l.b16 %v1777
    %v1869 = vunpack.c.h.b16 %v1777
    %v1870 = vunpack.c.l.b16 %v1778
    %v1871 = vunpack.c.h.b16 %v1778
    %v1872 = vunpack.c.l.b16 %v1779
    %v1873 = vunpack.c.h.b16 %v1779
    %v1874 = vunpack.c.l.b16 %v1780
    %v1875 = vunpack.c.h.b16 %v1780
    %v1876 = vunpack.c.l.b16 %v1781
    %v1877 = vunpack.c.h.b16 %v1781
    %v1878 = vunpack.c.l.b16 %v1782
    %v1879 = vunpack.c.h.b16 %v1782
    %v1880 = vunpack.c.l.b16 %v1783
    %v1881 = vunpack.c.h.b16 %v1783
    %v1882 = vunpack.c.l.b16 %v1784
    %v1883 = vunpack.c.h.b16 %v1784
    %v1884 = vunpack.c.l.b16 %v1785
    %v1885 = vunpack.c.h.b16 %v1785
    %v1886 = vunpack.c.l.b16 %v1786
    %v1887 = vunpack.c.h.b16 %v1786
    %v1888 = vunpack.c.l.b16 %v1787
    %v1889 = vunpack.c.h.b16 %v1787
    %v1890 = vunpack.c.l.b16 %v1788
    %v1891 = vunpack.c.h.b16 %v1788
    %v1892 = vunpack.c.l.b16 %v1789
    %v1893 = vunpack.c.h.b16 %v1789
    %v1894 = vunpack.c.l.b16 %v1790
    %v1895 = vunpack.c.h.b16 %v1790
    %v1896 = vunpack.c.l.b16 %v1791
    %v1897 = vunpack.c.h.b16 %v1791
    %v1898 = vunpack.c.l.b16 %v1792
    %v1899 = vunpack.c.h.b16 %v1792
    %v1900 = vunpack.c.l.b16 %v1793
    %v1901 = vunpack.c.h.b16 %v1793
    %v1902 = vunpack.c.l.b16 %v1794
    %v1903 = vunpack.c.h.b16 %v1794
    %v1904 = vunpack.c.l.b16 %v1795
    %v1905 = vunpack.c.h.b16 %v1795
    %v1906 = vunpack.c.l.b16 %v1796
    %v1907 = vunpack.c.h.b16 %v1796
    %v1908 = vunpack.c.l.b16 %v1797
    %v1909 = vunpack.c.h.b16 %v1797
    %v1910 = vunpack.c.l.b16 %v1798
    %v1911 = vunpack.c.h.b16 %v1798
    %v1912 = vunpack.c.l.b16 %v1799
    %v1913 = vunpack.c.h.b16 %v1799
    %v1914 = vunpack.c.l.b16 %v1800
    %v1915 = vunpack.c.h.b16 %v1800
    %v1916 = vunpack.c.l.b16 %v1801
    %v1917 = vunpack.c.h.b16 %v1801
    %v1918 = vunpack.c.l.b16 %v1802
    %v1919 = vunpack.c.h.b16 %v1802
    %v1920 = vunpack.c.l.b16 %v1803
    %v1921 = vunpack.c.h.b16 %v1803
    %v1922 = vunpack.c.l.b16 %v1804
    %v1923 = vunpack.c.h.b16 %v1804
    %v1924 = vpack.c.b16 %v1864, %v1860
    %v1925 = vpack.c.b16 %v1865, %v1861
    %v1926 = vpack.c.b16 %v1866, %v1862
    %v1927 = vpack.c.b16 %v1867, %v1863
    %v1928 = vpack.c.b16 %v1872, %v1868
    %v1929 = vpack.c.b16 %v1873, %v1869
    %v1930 = vpack.c.b16 %v1874, %v1870
    %v1931 = vpack.c.b16 %v1875, %v1871
    %v1932 = vpack.c.b16 %v1880, %v1876
    %v1933 = vpack.c.b16 %v1881, %v1877
    %v1934 = vpack.c.b16 %v1882, %v1878
    %v1935 = vpack.c.b16 %v1883, %v1879
    %v1936 = vpack.c.b16 %v1888, %v1884
    %v1937 = vpack.c.b16 %v1889, %v1885
    %v1938 = vpack.c.b16 %v1890, %v1886
    %v1939 = vpack.c.b16 %v1891, %v1887
    %v1940 = vpack.c.b16 %v1896, %v1892
    %v1941 = vpack.c.b16 %v1897, %v1893
    %v1942 = vpack.c.b16 %v1898, %v1894
    %v1943 = vpack.c.b16 %v1899, %v1895
    %v1944 = vpack.c.b16 %v1904, %v1900
    %v1945 = vpack.c.b16 %v1905, %v1901
    %v1946 = vpack.c.b16 %v1906, %v1902
    %v1947 = vpack.c.b16 %v1907, %v1903
    %v1948 = vpack.c.b16 %v1912, %v1908
    %v1949 = vpack.c.b16 %v1913, %v1909
    %v1950 = vpack.c.b16 %v1914, %v1910
    %v1951 = vpack.c.b16 %v1915, %v1911
    %v1952 = vpack.c.b16 %v1920, %v1916
    %v1953 = vpack.c.b16 %v1921, %v1917
    %v1954 = vpack.c.b16 %v1922, %v1918
    %v1955 = vpack.c.b16 %v1923, %v1919
    %1988 = vmatprep.subr.bf16.mxu0 %v1925
    %1989 = vmatpush1.bf16.msra.mxu0 %v1924
    %1990 = vmatprep.subr.bf16.mxu0 %v1929
    %1991 = vmatpush1.bf16.msra.mxu0 %v1928
    %1992 = vmatprep.subr.bf16.mxu0 %v1933
    %1993 = vmatpush1.bf16.msra.mxu0 %v1932
    %1994 = vmatprep.subr.bf16.mxu0 %v1937
    %1995 = vmatpush1.bf16.msra.mxu0 %v1936
    %1996 = vmatprep.subr.bf16.mxu0 %v1941
    %1997 = vmatpush1.bf16.msra.mxu0 %v1940
    %1998 = vmatprep.subr.bf16.mxu0 %v1945
    %1999 = vmatpush1.bf16.msra.mxu0 %v1944
    %2000 = vmatprep.subr.bf16.mxu0 %v1949
    %2001 = vmatpush1.bf16.msra.mxu0 %v1948
    %2002 = vmatprep.subr.bf16.mxu0 %v1953
    %2003 = vmatpush1.bf16.msra.mxu0 %v1952
    %2004 = vmatprep.subr.bf16.mxu0 0
    %2005 = vmatpush1.bf16.msra.mxu0 0
    %2006 = vmatprep.subr.bf16.mxu0 0
    %2007 = vmatpush1.bf16.msra.mxu0 0
    %2008 = vmatprep.subr.bf16.mxu0 0
    %2009 = vmatpush1.bf16.msra.mxu0 0
    %2010 = vmatprep.subr.bf16.mxu0 0
    %2011 = vmatpush1.bf16.msra.mxu0 0
    %2012 = vmatprep.subr.bf16.mxu0 0
    %2013 = vmatpush1.bf16.msra.mxu0 0
    %2014 = vmatprep.subr.bf16.mxu0 0
    %2015 = vmatpush1.bf16.msra.mxu0 0
    %2016 = vmatprep.subr.bf16.mxu0 0
    %2017 = vmatpush1.bf16.msra.mxu0 0
    %2018 = vmatprep.subr.bf16.mxu0 0
    %2019 = vmatpush1.bf16.msra.mxu0 0
    %2020 = vmatprep.mubr.bf16.mxu0 0
    %2021 = vmatmul.mubr.bf16.gmra.mrb[0].mxu0 %v1771
    %v2022 = vpop.f32.mrb[0].mxu0
    %v2023 = vadd.f32 %v1811, %v2022
    %v2024 = vpop.f32.mrb[0].mxu0
    %v2025 = vadd.f32 %v1815, %v2024
    %v2026 = vpop.f32.mrb[0].mxu0
    %v2027 = vpop.f32.mrb[0].mxu0
    %2028 = vdwg.mxu0
    %2029 = vmatprep.subr.bf16.mxu0 %v1927
    %2030 = vmatpush1.bf16.msra.mxu0 %v1926
    %2031 = vmatprep.subr.bf16.mxu0 %v1931
    %2032 = vmatpush1.bf16.msra.mxu0 %v1930
    %2033 = vmatprep.subr.bf16.mxu0 %v1935
    %2034 = vmatpush1.bf16.msra.mxu0 %v1934
    %2035 = vmatprep.subr.bf16.mxu0 %v1939
    %2036 = vmatpush1.bf16.msra.mxu0 %v1938
    %2037 = vmatprep.subr.bf16.mxu0 %v1943
    %2038 = vmatpush1.bf16.msra.mxu0 %v1942
    %2039 = vmatprep.subr.bf16.mxu0 %v1947
    %2040 = vmatpush1.bf16.msra.mxu0 %v1946
    %2041 = vmatprep.subr.bf16.mxu0 %v1951
    %2042 = vmatpush1.bf16.msra.mxu0 %v1950
    %2043 = vmatprep.subr.bf16.mxu0 %v1955
    %2044 = vmatpush1.bf16.msra.mxu0 %v1954
    %2045 = vmatprep.subr.bf16.mxu0 0
    %2046 = vmatpush1.bf16.msra.mxu0 0
    %2047 = vmatprep.subr.bf16.mxu0 0
    %2048 = vmatpush1.bf16.msra.mxu0 0
    %2049 = vmatprep.subr.bf16.mxu0 0
    %2050 = vmatpush1.bf16.msra.mxu0 0
    %2051 = vmatprep.subr.bf16.mxu0 0
    %2052 = vmatpush1.bf16.msra.mxu0 0
    %2053 = vmatprep.subr.bf16.mxu0 0
    %2054 = vmatpush1.bf16.msra.mxu0 0
    %2055 = vmatprep.subr.bf16.mxu0 0
    %2056 = vmatpush1.bf16.msra.mxu0 0
    %2057 = vmatprep.subr.bf16.mxu0 0
    %2058 = vmatpush1.bf16.msra.mxu0 0
    %2059 = vmatprep.subr.bf16.mxu0 0
    %2060 = vmatpush1.bf16.msra.mxu0 0
    %2061 = vmatprep.mubr.bf16.mxu0 0
    %2062 = vmatmul.mubr.bf16.gmra.mrb[0].mxu0 %v1771
    %v2063 = vpop.f32.mrb[0].mxu0
    %v2064 = vadd.f32 %v1819, %v2063
    %v2065 = vpop.f32.mrb[0].mxu0
    %v2066 = vadd.f32 %v1823, %v2065
    %v2067 = vpop.f32.mrb[0].mxu0
    %v2068 = vpop.f32.mrb[0].mxu0
    %2069 = vdwg.mxu0
    %v2070 = vmul.f32 %v2023, %v2023
    %v2071 = vmul.f32 %v2025, %v2025
    %v2072 = vmul.f32 %v2064, %v2064
    %v2073 = vmul.f32 %v2066, %v2066
    %v2074 = vmul.f32 %v2023, %v2070
    %v2075 = vmul.f32 %v2025, %v2071
    %v2076 = vmul.f32 %v2064, %v2072
    %v2077 = vmul.f32 %v2066, %v2073
    %v2078 = vmul.f32 %v2074, 0.044715
    %v2079 = vmul.f32 %v2075, 0.044715
    %v2080 = vmul.f32 %v2076, 0.044715
    %v2081 = vmul.f32 %v2077, 0.044715
    %v2082 = vadd.f32 %v2023, %v2078
    %v2083 = vadd.f32 %v2025, %v2079
    %v2084 = vadd.f32 %v2064, %v2080
    %v2085 = vadd.f32 %v2066, %v2081
    %v2086 = vmul.f32 %v2082, 0.7978846
    %v2087 = vmul.f32 %v2083, 0.7978846
    %v2088 = vmul.f32 %v2084, 0.7978846
    %v2089 = vmul.f32 %v2085, 0.7978846
    %v2090 = vtanh.pop %v2086
    %v2091 = vtanh.pop %v2087
    %v2092 = vtanh.pop %v2088
    %v2093 = vtanh.pop %v2089
    %v2094 = vadd.f32 %v2090, 1.0
    %v2095 = vadd.f32 %v2091, 1.0
    %v2096 = vadd.f32 %v2092, 1.0
    %v2097 = vadd.f32 %v2093, 1.0
    %v2098 = vmul.f32 %v2094, 0.5
    %v2099 = vmul.f32 %v2095, 0.5
    %v2100 = vmul.f32 %v2096, 0.5
    %v2101 = vmul.f32 %v2097, 0.5
    %v2102 = vmul.f32 %v2023, %v2098
    %v2103 = vmul.f32 %v2025, %v2099
    %v2104 = vmul.f32 %v2064, %v2100
    %v2105 = vmul.f32 %v2066, %v2101
    %v2106 = vpack.c.bf16 %v2102, %v2102
    %v2107 = vpack.c.bf16 %v2103, %v2103
    %v2108 = vpack.c.bf16 %v2104, %v2104
    %v2109 = vpack.c.bf16 %v2105, %v2105
    %s2110 = scalar_lea.vmem [#allocation8], 512
    %v2111 = vld [vmem:[%s2110] sm:$0xf]
    %v2112 = vld [vmem:[%s2110 + $0x4] sm:$0xf]
    %v2113 = vld [vmem:[%s2110 + $0x8] sm:$0xf]
    %v2114 = vld [vmem:[%s2110 + $0xc] sm:$0xf]
    %v2115 = vld [vmem:[%s2110 + $0x10] sm:$0xf]
    %v2116 = vld [vmem:[%s2110 + $0x14] sm:$0xf]
    %v2117 = vld [vmem:[%s2110 + $0x18] sm:$0xf]
    %v2118 = vld [vmem:[%s2110 + $0x1c] sm:$0xf]
    %v2119 = vld [vmem:[%s2110 + $0x20] sm:$0xf]
    %v2120 = vld [vmem:[%s2110 + $0x24] sm:$0xf]
    %v2121 = vld [vmem:[%s2110 + $0x28] sm:$0xf]
    %v2122 = vld [vmem:[%s2110 + $0x2c] sm:$0xf]
    %v2123 = vld [vmem:[%s2110 + $0x30] sm:$0xf]
    %v2124 = vld [vmem:[%s2110 + $0x34] sm:$0xf]
    %v2125 = vld [vmem:[%s2110 + $0x38] sm:$0xf]
    %v2126 = vld [vmem:[%s2110 + $0x3c] sm:$0xf]
    %v2127 = vld [vmem:[%s2110 + $0x40] sm:$0xf]
    %v2128 = vld [vmem:[%s2110 + $0x44] sm:$0xf]
    %v2129 = vld [vmem:[%s2110 + $0x48] sm:$0xf]
    %v2130 = vld [vmem:[%s2110 + $0x4c] sm:$0xf]
    %v2131 = vld [vmem:[%s2110 + $0x50] sm:$0xf]
    %v2132 = vld [vmem:[%s2110 + $0x54] sm:$0xf]
    %v2133 = vld [vmem:[%s2110 + $0x58] sm:$0xf]
    %v2134 = vld [vmem:[%s2110 + $0x5c] sm:$0xf]
    %v2135 = vld [vmem:[%s2110 + $0x60] sm:$0xf]
    %v2136 = vld [vmem:[%s2110 + $0x64] sm:$0xf]
    %v2137 = vld [vmem:[%s2110 + $0x68] sm:$0xf]
    %v2138 = vld [vmem:[%s2110 + $0x6c] sm:$0xf]
    %v2139 = vld [vmem:[%s2110 + $0x70] sm:$0xf]
    %v2140 = vld [vmem:[%s2110 + $0x74] sm:$0xf]
    %v2141 = vld [vmem:[%s2110 + $0x78] sm:$0xf]
    %v2142 = vld [vmem:[%s2110 + $0x7c] sm:$0xf]
    %v2143 = vld [vmem:[%s2110 + $0x80] sm:$0xf]
    %v2144 = vld [vmem:[%s2110 + $0x84] sm:$0xf]
    %v2145 = vld [vmem:[%s2110 + $0x88] sm:$0xf]
    %v2146 = vld [vmem:[%s2110 + $0x8c] sm:$0xf]
    %v2147 = vld [vmem:[%s2110 + $0x90] sm:$0xf]
    %v2148 = vld [vmem:[%s2110 + $0x94] sm:$0xf]
    %v2149 = vld [vmem:[%s2110 + $0x98] sm:$0xf]
    %v2150 = vld [vmem:[%s2110 + $0x9c] sm:$0xf]
    %v2151 = vld [vmem:[%s2110 + $0xa0] sm:$0xf]
    %v2152 = vld [vmem:[%s2110 + $0xa4] sm:$0xf]
    %v2153 = vld [vmem:[%s2110 + $0xa8] sm:$0xf]
    %v2154 = vld [vmem:[%s2110 + $0xac] sm:$0xf]
    %v2155 = vld [vmem:[%s2110 + $0xb0] sm:$0xf]
    %v2156 = vld [vmem:[%s2110 + $0xb4] sm:$0xf]
    %v2157 = vld [vmem:[%s2110 + $0xb8] sm:$0xf]
    %v2158 = vld [vmem:[%s2110 + $0xbc] sm:$0xf]
    %v2159 = vld [vmem:[%s2110 + $0xc0] sm:$0xf]
    %v2160 = vld [vmem:[%s2110 + $0xc4] sm:$0xf]
    %v2161 = vld [vmem:[%s2110 + $0xc8] sm:$0xf]
    %v2162 = vld [vmem:[%s2110 + $0xcc] sm:$0xf]
    %v2163 = vld [vmem:[%s2110 + $0xd0] sm:$0xf]
    %v2164 = vld [vmem:[%s2110 + $0xd4] sm:$0xf]
    %v2165 = vld [vmem:[%s2110 + $0xd8] sm:$0xf]
    %v2166 = vld [vmem:[%s2110 + $0xdc] sm:$0xf]
    %v2167 = vld [vmem:[%s2110 + $0xe0] sm:$0xf]
    %v2168 = vld [vmem:[%s2110 + $0xe4] sm:$0xf]
    %v2169 = vld [vmem:[%s2110 + $0xe8] sm:$0xf]
    %v2170 = vld [vmem:[%s2110 + $0xec] sm:$0xf]
    %v2171 = vld [vmem:[%s2110 + $0xf0] sm:$0xf]
    %v2172 = vld [vmem:[%s2110 + $0xf4] sm:$0xf]
    %v2173 = vld [vmem:[%s2110 + $0xf8] sm:$0xf]
    %v2174 = vld [vmem:[%s2110 + $0xfc] sm:$0xf]
    %s2175 = scalar_lea.vmem [#allocation10], 2
    %v2176 = vld [vmem:[%s2175] sm:$0x1]
    %v2178 = vlaneseq
    %v2179 = vshrl.u32 %v2178, 7
    %v2180 = vsub.s32 0, %v2179
    %v2181 = vrot.slane %v2176, %v2180
    %v2247 = vunpack.c.l.b16 %v2111
    %v2248 = vunpack.c.l.b16 %v2112
    %v2249 = vunpack.c.l.b16 %v2113
    %v2250 = vunpack.c.l.b16 %v2114
    %v2251 = vunpack.c.l.b16 %v2115
    %v2252 = vunpack.c.l.b16 %v2116
    %v2253 = vunpack.c.l.b16 %v2117
    %v2254 = vunpack.c.l.b16 %v2118
    %v2255 = vunpack.c.l.b16 %v2119
    %v2256 = vunpack.c.l.b16 %v2120
    %v2257 = vunpack.c.l.b16 %v2121
    %v2258 = vunpack.c.l.b16 %v2122
    %v2259 = vunpack.c.l.b16 %v2123
    %v2260 = vunpack.c.l.b16 %v2124
    %v2261 = vunpack.c.l.b16 %v2125
    %v2262 = vunpack.c.l.b16 %v2126
    %v2263 = vunpack.c.l.b16 %v2127
    %v2264 = vunpack.c.l.b16 %v2128
    %v2265 = vunpack.c.l.b16 %v2129
    %v2266 = vunpack.c.l.b16 %v2130
    %v2267 = vunpack.c.l.b16 %v2131
    %v2268 = vunpack.c.l.b16 %v2132
    %v2269 = vunpack.c.l.b16 %v2133
    %v2270 = vunpack.c.l.b16 %v2134
    %v2271 = vunpack.c.l.b16 %v2135
    %v2272 = vunpack.c.l.b16 %v2136
    %v2273 = vunpack.c.l.b16 %v2137
    %v2274 = vunpack.c.l.b16 %v2138
    %v2275 = vunpack.c.l.b16 %v2139
    %v2276 = vunpack.c.l.b16 %v2140
    %v2277 = vunpack.c.l.b16 %v2141
    %v2278 = vunpack.c.l.b16 %v2142
    %v2279 = vunpack.c.l.b16 %v2143
    %v2280 = vunpack.c.l.b16 %v2144
    %v2281 = vunpack.c.l.b16 %v2145
    %v2282 = vunpack.c.l.b16 %v2146
    %v2283 = vunpack.c.l.b16 %v2147
    %v2284 = vunpack.c.l.b16 %v2148
    %v2285 = vunpack.c.l.b16 %v2149
    %v2286 = vunpack.c.l.b16 %v2150
    %v2287 = vunpack.c.l.b16 %v2151
    %v2288 = vunpack.c.l.b16 %v2152
    %v2289 = vunpack.c.l.b16 %v2153
    %v2290 = vunpack.c.l.b16 %v2154
    %v2291 = vunpack.c.l.b16 %v2155
    %v2292 = vunpack.c.l.b16 %v2156
    %v2293 = vunpack.c.l.b16 %v2157
    %v2294 = vunpack.c.l.b16 %v2158
    %v2295 = vunpack.c.l.b16 %v2159
    %v2296 = vunpack.c.l.b16 %v2160
    %v2297 = vunpack.c.l.b16 %v2161
    %v2298 = vunpack.c.l.b16 %v2162
    %v2299 = vunpack.c.l.b16 %v2163
    %v2300 = vunpack.c.l.b16 %v2164
    %v2301 = vunpack.c.l.b16 %v2165
    %v2302 = vunpack.c.l.b16 %v2166
    %v2303 = vunpack.c.l.b16 %v2167
    %v2304 = vunpack.c.l.b16 %v2168
    %v2305 = vunpack.c.l.b16 %v2169
    %v2306 = vunpack.c.l.b16 %v2170
    %v2307 = vunpack.c.l.b16 %v2171
    %v2308 = vunpack.c.l.b16 %v2172
    %v2309 = vunpack.c.l.b16 %v2173
    %v2310 = vunpack.c.l.b16 %v2174
    %v2311 = vpack.c.b16 %v2248, %v2247
    %v2312 = vpack.c.b16 %v2250, %v2249
    %v2313 = vpack.c.b16 %v2252, %v2251
    %v2314 = vpack.c.b16 %v2254, %v2253
    %v2315 = vpack.c.b16 %v2256, %v2255
    %v2316 = vpack.c.b16 %v2258, %v2257
    %v2317 = vpack.c.b16 %v2260, %v2259
    %v2318 = vpack.c.b16 %v2262, %v2261
    %v2319 = vpack.c.b16 %v2264, %v2263
    %v2320 = vpack.c.b16 %v2266, %v2265
    %v2321 = vpack.c.b16 %v2268, %v2267
    %v2322 = vpack.c.b16 %v2270, %v2269
    %v2323 = vpack.c.b16 %v2272, %v2271
    %v2324 = vpack.c.b16 %v2274, %v2273
    %v2325 = vpack.c.b16 %v2276, %v2275
    %v2326 = vpack.c.b16 %v2278, %v2277
    %v2327 = vpack.c.b16 %v2280, %v2279
    %v2328 = vpack.c.b16 %v2282, %v2281
    %v2329 = vpack.c.b16 %v2284, %v2283
    %v2330 = vpack.c.b16 %v2286, %v2285
    %v2331 = vpack.c.b16 %v2288, %v2287
    %v2332 = vpack.c.b16 %v2290, %v2289
    %v2333 = vpack.c.b16 %v2292, %v2291
    %v2334 = vpack.c.b16 %v2294, %v2293
    %v2335 = vpack.c.b16 %v2296, %v2295
    %v2336 = vpack.c.b16 %v2298, %v2297
    %v2337 = vpack.c.b16 %v2300, %v2299
    %v2338 = vpack.c.b16 %v2302, %v2301
    %v2339 = vpack.c.b16 %v2304, %v2303
    %v2340 = vpack.c.b16 %v2306, %v2305
    %v2341 = vpack.c.b16 %v2308, %v2307
    %v2342 = vpack.c.b16 %v2310, %v2309
    %2375 = vmatprep.subr.bf16.mxu0 0
    %2376 = vmatpush1.bf16.msra.mxu0 %v2311
    %2377 = vmatprep.subr.bf16.mxu0 0
    %2378 = vmatpush1.bf16.msra.mxu0 %v2312
    %2379 = vmatprep.subr.bf16.mxu0 0
    %2380 = vmatpush1.bf16.msra.mxu0 %v2313
    %2381 = vmatprep.subr.bf16.mxu0 0
    %2382 = vmatpush1.bf16.msra.mxu0 %v2314
    %2383 = vmatprep.subr.bf16.mxu0 0
    %2384 = vmatpush1.bf16.msra.mxu0 %v2315
    %2385 = vmatprep.subr.bf16.mxu0 0
    %2386 = vmatpush1.bf16.msra.mxu0 %v2316
    %2387 = vmatprep.subr.bf16.mxu0 0
    %2388 = vmatpush1.bf16.msra.mxu0 %v2317
    %2389 = vmatprep.subr.bf16.mxu0 0
    %2390 = vmatpush1.bf16.msra.mxu0 %v2318
    %2391 = vmatprep.subr.bf16.mxu0 0
    %2392 = vmatpush1.bf16.msra.mxu0 %v2319
    %2393 = vmatprep.subr.bf16.mxu0 0
    %2394 = vmatpush1.bf16.msra.mxu0 %v2320
    %2395 = vmatprep.subr.bf16.mxu0 0
    %2396 = vmatpush1.bf16.msra.mxu0 %v2321
    %2397 = vmatprep.subr.bf16.mxu0 0
    %2398 = vmatpush1.bf16.msra.mxu0 %v2322
    %2399 = vmatprep.subr.bf16.mxu0 0
    %2400 = vmatpush1.bf16.msra.mxu0 %v2323
    %2401 = vmatprep.subr.bf16.mxu0 0
    %2402 = vmatpush1.bf16.msra.mxu0 %v2324
    %2403 = vmatprep.subr.bf16.mxu0 0
    %2404 = vmatpush1.bf16.msra.mxu0 %v2325
    %2405 = vmatprep.subr.bf16.mxu0 0
    %2406 = vmatpush1.bf16.msra.mxu0 %v2326
    %2407 = vmatprep.mubr.bf16.mxu0 %v2107
    %2408 = vmatmul.mubr.bf16.gmra.mrb[0].mxu0 %v2106
    %v2409 = vpop.f32.mrb[0].mxu0
    %v2410 = vadd.f32 %v2181, %v2409
    %v2411 = vpop.f32.mrb[0].mxu0
    %v2412 = vpop.f32.mrb[0].mxu0
    %v2413 = vpop.f32.mrb[0].mxu0
    %2414 = vdwg.mxu0
    %2415 = vmatprep.subr.bf16.mxu0 0
    %2416 = vmatpush1.bf16.msra.mxu0 %v2327
    %2417 = vmatprep.subr.bf16.mxu0 0
    %2418 = vmatpush1.bf16.msra.mxu0 %v2328
    %2419 = vmatprep.subr.bf16.mxu0 0
    %2420 = vmatpush1.bf16.msra.mxu0 %v2329
    %2421 = vmatprep.subr.bf16.mxu0 0
    %2422 = vmatpush1.bf16.msra.mxu0 %v2330
    %2423 = vmatprep.subr.bf16.mxu0 0
    %2424 = vmatpush1.bf16.msra.mxu0 %v2331
    %2425 = vmatprep.subr.bf16.mxu0 0
    %2426 = vmatpush1.bf16.msra.mxu0 %v2332
    %2427 = vmatprep.subr.bf16.mxu0 0
    %2428 = vmatpush1.bf16.msra.mxu0 %v2333
    %2429 = vmatprep.subr.bf16.mxu0 0
    %2430 = vmatpush1.bf16.msra.mxu0 %v2334
    %2431 = vmatprep.subr.bf16.mxu0 0
    %2432 = vmatpush1.bf16.msra.mxu0 %v2335
    %2433 = vmatprep.subr.bf16.mxu0 0
    %2434 = vmatpush1.bf16.msra.mxu0 %v2336
    %2435 = vmatprep.subr.bf16.mxu0 0
    %2436 = vmatpush1.bf16.msra.mxu0 %v2337
    %2437 = vmatprep.subr.bf16.mxu0 0
    %2438 = vmatpush1.bf16.msra.mxu0 %v2338
    %2439 = vmatprep.subr.bf16.mxu0 0
    %2440 = vmatpush1.bf16.msra.mxu0 %v2339
    %2441 = vmatprep.subr.bf16.mxu0 0
    %2442 = vmatpush1.bf16.msra.mxu0 %v2340
    %2443 = vmatprep.subr.bf16.mxu0 0
    %2444 = vmatpush1.bf16.msra.mxu0 %v2341
    %2445 = vmatprep.subr.bf16.mxu0 0
    %2446 = vmatpush1.bf16.msra.mxu0 %v2342
    %2447 = vmatprep.mubr.bf16.mxu0 %v2109
    %2448 = vmatmul.mubr.bf16.gmra.mrb[0].mxu0 %v2108
    %v2449 = vpop.f32.mrb[0].mxu0
    %v2450 = vadd.f32 %v2410, %v2449
    %v2451 = vpop.f32.mrb[0].mxu0
    %v2452 = vpop.f32.mrb[0].mxu0
    %v2453 = vpop.f32.mrb[0].mxu0
    %2454 = vdwg.mxu0
    %v2455 = vadd.f32 %v2450, %v1770
    %v2456 = vpack.c.bf16 %v2455, %v2455
    %s2457 = scalar_lea.vmem [#allocation7], 768
    %v2458 = vld [vmem:[%s2457] sm:$0xff]
    %v2459 = vld [vmem:[%s2457 + $0x8] sm:$0xff]
    %v2460 = vld [vmem:[%s2457 + $0x10] sm:$0xff]
    %v2461 = vld [vmem:[%s2457 + $0x18] sm:$0xff]
    %v2462 = vld [vmem:[%s2457 + $0x20] sm:$0xff]
    %v2463 = vld [vmem:[%s2457 + $0x28] sm:$0xff]
    %v2464 = vld [vmem:[%s2457 + $0x30] sm:$0xff]
    %v2465 = vld [vmem:[%s2457 + $0x38] sm:$0xff]
    %v2466 = vld [vmem:[%s2457 + $0x40] sm:$0xff]
    %v2467 = vld [vmem:[%s2457 + $0x48] sm:$0xff]
    %v2468 = vld [vmem:[%s2457 + $0x50] sm:$0xff]
    %v2469 = vld [vmem:[%s2457 + $0x58] sm:$0xff]
    %v2470 = vld [vmem:[%s2457 + $0x60] sm:$0xff]
    %v2471 = vld [vmem:[%s2457 + $0x68] sm:$0xff]
    %v2472 = vld [vmem:[%s2457 + $0x70] sm:$0xff]
    %v2473 = vld [vmem:[%s2457 + $0x78] sm:$0xff]
    %v2474 = vld [vmem:[%s2457 + $0x80] sm:$0xff]
    %v2475 = vld [vmem:[%s2457 + $0x88] sm:$0xff]
    %v2476 = vld [vmem:[%s2457 + $0x90] sm:$0xff]
    %v2477 = vld [vmem:[%s2457 + $0x98] sm:$0xff]
    %v2478 = vld [vmem:[%s2457 + $0xa0] sm:$0xff]
    %v2479 = vld [vmem:[%s2457 + $0xa8] sm:$0xff]
    %v2480 = vld [vmem:[%s2457 + $0xb0] sm:$0xff]
    %v2481 = vld [vmem:[%s2457 + $0xb8] sm:$0xff]
    %v2482 = vld [vmem:[%s2457 + $0xc0] sm:$0xff]
    %v2483 = vld [vmem:[%s2457 + $0xc8] sm:$0xff]
    %v2484 = vld [vmem:[%s2457 + $0xd0] sm:$0xff]
    %v2485 = vld [vmem:[%s2457 + $0xd8] sm:$0xff]
    %v2486 = vld [vmem:[%s2457 + $0xe0] sm:$0xff]
    %v2487 = vld [vmem:[%s2457 + $0xe8] sm:$0xff]
    %v2488 = vld [vmem:[%s2457 + $0xf0] sm:$0xff]
    %v2489 = vld [vmem:[%s2457 + $0xf8] sm:$0xff]
    %s2490 = scalar_lea.vmem %s8, 12
    %v2491 = vld [vmem:[%s2490] sm:$0xf]
    %v2493 = vlaneseq
    %v2494 = vshrl.u32 %v2493, 7
    %v2495 = vsub.s32 0, %v2494
    %v2496 = vrot.slane %v2491, %v2495
    %v2497 = vlaneseq
    %v2498 = vshrl.u32 %v2497, 7
    %v2499 = vsub.s32 1, %v2498
    %v2500 = vrot.slane %v2491, %v2499
    %v2501 = vlaneseq
    %v2502 = vshrl.u32 %v2501, 7
    %v2503 = vsub.s32 2, %v2502
    %v2504 = vrot.slane %v2491, %v2503
    %v2505 = vlaneseq
    %v2506 = vshrl.u32 %v2505, 7
    %v2507 = vsub.s32 3, %v2506
    %v2508 = vrot.slane %v2491, %v2507
    %v2545 = vunpack.c.l.b16 %v2458
    %v2546 = vunpack.c.h.b16 %v2458
    %v2547 = vunpack.c.l.b16 %v2459
    %v2548 = vunpack.c.h.b16 %v2459
    %v2549 = vunpack.c.l.b16 %v2460
    %v2550 = vunpack.c.h.b16 %v2460
    %v2551 = vunpack.c.l.b16 %v2461
    %v2552 = vunpack.c.h.b16 %v2461
    %v2553 = vunpack.c.l.b16 %v2462
    %v2554 = vunpack.c.h.b16 %v2462
    %v2555 = vunpack.c.l.b16 %v2463
    %v2556 = vunpack.c.h.b16 %v2463
    %v2557 = vunpack.c.l.b16 %v2464
    %v2558 = vunpack.c.h.b16 %v2464
    %v2559 = vunpack.c.l.b16 %v2465
    %v2560 = vunpack.c.h.b16 %v2465
    %v2561 = vunpack.c.l.b16 %v2466
    %v2562 = vunpack.c.h.b16 %v2466
    %v2563 = vunpack.c.l.b16 %v2467
    %v2564 = vunpack.c.h.b16 %v2467
    %v2565 = vunpack.c.l.b16 %v2468
    %v2566 = vunpack.c.h.b16 %v2468
    %v2567 = vunpack.c.l.b16 %v2469
    %v2568 = vunpack.c.h.b16 %v2469
    %v2569 = vunpack.c.l.b16 %v2470
    %v2570 = vunpack.c.h.b16 %v2470
    %v2571 = vunpack.c.l.b16 %v2471
    %v2572 = vunpack.c.h.b16 %v2471
    %v2573 = vunpack.c.l.b16 %v2472
    %v2574 = vunpack.c.h.b16 %v2472
    %v2575 = vunpack.c.l.b16 %v2473
    %v2576 = vunpack.c.h.b16 %v2473
    %v2577 = vunpack.c.l.b16 %v2474
    %v2578 = vunpack.c.h.b16 %v2474
    %v2579 = vunpack.c.l.b16 %v2475
    %v2580 = vunpack.c.h.b16 %v2475
    %v2581 = vunpack.c.l.b16 %v2476
    %v2582 = vunpack.c.h.b16 %v2476
    %v2583 = vunpack.c.l.b16 %v2477
    %v2584 = vunpack.c.h.b16 %v2477
    %v2585 = vunpack.c.l.b16 %v2478
    %v2586 = vunpack.c.h.b16 %v2478
    %v2587 = vunpack.c.l.b16 %v2479
    %v2588 = vunpack.c.h.b16 %v2479
    %v2589 = vunpack.c.l.b16 %v2480
    %v2590 = vunpack.c.h.b16 %v2480
    %v2591 = vunpack.c.l.b16 %v2481
    %v2592 = vunpack.c.h.b16 %v2481
    %v2593 = vunpack.c.l.b16 %v2482
    %v2594 = vunpack.c.h.b16 %v2482
    %v2595 = vunpack.c.l.b16 %v2483
    %v2596 = vunpack.c.h.b16 %v2483
    %v2597 = vunpack.c.l.b16 %v2484
    %v2598 = vunpack.c.h.b16 %v2484
    %v2599 = vunpack.c.l.b16 %v2485
    %v2600 = vunpack.c.h.b16 %v2485
    %v2601 = vunpack.c.l.b16 %v2486
    %v2602 = vunpack.c.h.b16 %v2486
    %v2603 = vunpack.c.l.b16 %v2487
    %v2604 = vunpack.c.h.b16 %v2487
    %v2605 = vunpack.c.l.b16 %v2488
    %v2606 = vunpack.c.h.b16 %v2488
    %v2607 = vunpack.c.l.b16 %v2489
    %v2608 = vunpack.c.h.b16 %v2489
    %v2609 = vpack.c.b16 %v2549, %v2545
    %v2610 = vpack.c.b16 %v2550, %v2546
    %v2611 = vpack.c.b16 %v2551, %v2547
    %v2612 = vpack.c.b16 %v2552, %v2548
    %v2613 = vpack.c.b16 %v2557, %v2553
    %v2614 = vpack.c.b16 %v2558, %v2554
    %v2615 = vpack.c.b16 %v2559, %v2555
    %v2616 = vpack.c.b16 %v2560, %v2556
    %v2617 = vpack.c.b16 %v2565, %v2561
    %v2618 = vpack.c.b16 %v2566, %v2562
    %v2619 = vpack.c.b16 %v2567, %v2563
    %v2620 = vpack.c.b16 %v2568, %v2564
    %v2621 = vpack.c.b16 %v2573, %v2569
    %v2622 = vpack.c.b16 %v2574, %v2570
    %v2623 = vpack.c.b16 %v2575, %v2571
    %v2624 = vpack.c.b16 %v2576, %v2572
    %v2625 = vpack.c.b16 %v2581, %v2577
    %v2626 = vpack.c.b16 %v2582, %v2578
    %v2627 = vpack.c.b16 %v2583, %v2579
    %v2628 = vpack.c.b16 %v2584, %v2580
    %v2629 = vpack.c.b16 %v2589, %v2585
    %v2630 = vpack.c.b16 %v2590, %v2586
    %v2631 = vpack.c.b16 %v2591, %v2587
    %v2632 = vpack.c.b16 %v2592, %v2588
    %v2633 = vpack.c.b16 %v2597, %v2593
    %v2634 = vpack.c.b16 %v2598, %v2594
    %v2635 = vpack.c.b16 %v2599, %v2595
    %v2636 = vpack.c.b16 %v2600, %v2596
    %v2637 = vpack.c.b16 %v2605, %v2601
    %v2638 = vpack.c.b16 %v2606, %v2602
    %v2639 = vpack.c.b16 %v2607, %v2603
    %v2640 = vpack.c.b16 %v2608, %v2604
    %2673 = vmatprep.subr.bf16.mxu0 %v2610
    %2674 = vmatpush1.bf16.msra.mxu0 %v2609
    %2675 = vmatprep.subr.bf16.mxu0 %v2614
    %2676 = vmatpush1.bf16.msra.mxu0 %v2613
    %2677 = vmatprep.subr.bf16.mxu0 %v2618
    %2678 = vmatpush1.bf16.msra.mxu0 %v2617
    %2679 = vmatprep.subr.bf16.mxu0 %v2622
    %2680 = vmatpush1.bf16.msra.mxu0 %v2621
    %2681 = vmatprep.subr.bf16.mxu0 %v2626
    %2682 = vmatpush1.bf16.msra.mxu0 %v2625
    %2683 = vmatprep.subr.bf16.mxu0 %v2630
    %2684 = vmatpush1.bf16.msra.mxu0 %v2629
    %2685 = vmatprep.subr.bf16.mxu0 %v2634
    %2686 = vmatpush1.bf16.msra.mxu0 %v2633
    %2687 = vmatprep.subr.bf16.mxu0 %v2638
    %2688 = vmatpush1.bf16.msra.mxu0 %v2637
    %2689 = vmatprep.subr.bf16.mxu0 0
    %2690 = vmatpush1.bf16.msra.mxu0 0
    %2691 = vmatprep.subr.bf16.mxu0 0
    %2692 = vmatpush1.bf16.msra.mxu0 0
    %2693 = vmatprep.subr.bf16.mxu0 0
    %2694 = vmatpush1.bf16.msra.mxu0 0
    %2695 = vmatprep.subr.bf16.mxu0 0
    %2696 = vmatpush1.bf16.msra.mxu0 0
    %2697 = vmatprep.subr.bf16.mxu0 0
    %2698 = vmatpush1.bf16.msra.mxu0 0
    %2699 = vmatprep.subr.bf16.mxu0 0
    %2700 = vmatpush1.bf16.msra.mxu0 0
    %2701 = vmatprep.subr.bf16.mxu0 0
    %2702 = vmatpush1.bf16.msra.mxu0 0
    %2703 = vmatprep.subr.bf16.mxu0 0
    %2704 = vmatpush1.bf16.msra.mxu0 0
    %2705 = vmatprep.mubr.bf16.mxu0 0
    %2706 = vmatmul.mubr.bf16.gmra.mrb[0].mxu0 %v2456
    %v2707 = vpop.f32.mrb[0].mxu0
    %v2708 = vadd.f32 %v2496, %v2707
    %v2709 = vpop.f32.mrb[0].mxu0
    %v2710 = vadd.f32 %v2500, %v2709
    %v2711 = vpop.f32.mrb[0].mxu0
    %v2712 = vpop.f32.mrb[0].mxu0
    %2713 = vdwg.mxu0
    %2714 = vmatprep.subr.bf16.mxu0 %v2612
    %2715 = vmatpush1.bf16.msra.mxu0 %v2611
    %2716 = vmatprep.subr.bf16.mxu0 %v2616
    %2717 = vmatpush1.bf16.msra.mxu0 %v2615
    %2718 = vmatprep.subr.bf16.mxu0 %v2620
    %2719 = vmatpush1.bf16.msra.mxu0 %v2619
    %2720 = vmatprep.subr.bf16.mxu0 %v2624
    %2721 = vmatpush1.bf16.msra.mxu0 %v2623
    %2722 = vmatprep.subr.bf16.mxu0 %v2628
    %2723 = vmatpush1.bf16.msra.mxu0 %v2627
    %2724 = vmatprep.subr.bf16.mxu0 %v2632
    %2725 = vmatpush1.bf16.msra.mxu0 %v2631
    %2726 = vmatprep.subr.bf16.mxu0 %v2636
    %2727 = vmatpush1.bf16.msra.mxu0 %v2635
    %2728 = vmatprep.subr.bf16.mxu0 %v2640
    %2729 = vmatpush1.bf16.msra.mxu0 %v2639
    %2730 = vmatprep.subr.bf16.mxu0 0
    %2731 = vmatpush1.bf16.msra.mxu0 0
    %2732 = vmatprep.subr.bf16.mxu0 0
    %2733 = vmatpush1.bf16.msra.mxu0 0
    %2734 = vmatprep.subr.bf16.mxu0 0
    %2735 = vmatpush1.bf16.msra.mxu0 0
    %2736 = vmatprep.subr.bf16.mxu0 0
    %2737 = vmatpush1.bf16.msra.mxu0 0
    %2738 = vmatprep.subr.bf16.mxu0 0
    %2739 = vmatpush1.bf16.msra.mxu0 0
    %2740 = vmatprep.subr.bf16.mxu0 0
    %2741 = vmatpush1.bf16.msra.mxu0 0
    %2742 = vmatprep.subr.bf16.mxu0 0
    %2743 = vmatpush1.bf16.msra.mxu0 0
    %2744 = vmatprep.subr.bf16.mxu0 0
    %2745 = vmatpush1.bf16.msra.mxu0 0
    %2746 = vmatprep.mubr.bf16.mxu0 0
    %2747 = vmatmul.mubr.bf16.gmra.mrb[0].mxu0 %v2456
    %v2748 = vpop.f32.mrb[0].mxu0
    %v2749 = vadd.f32 %v2504, %v2748
    %v2750 = vpop.f32.mrb[0].mxu0
    %v2751 = vadd.f32 %v2508, %v2750
    %v2752 = vpop.f32.mrb[0].mxu0
    %v2753 = vpop.f32.mrb[0].mxu0
    %2754 = vdwg.mxu0
    %v2755 = vmul.f32 %v2708, %v2708
    %v2756 = vmul.f32 %v2710, %v2710
    %v2757 = vmul.f32 %v2749, %v2749
    %v2758 = vmul.f32 %v2751, %v2751
    %v2759 = vmul.f32 %v2708, %v2755
    %v2760 = vmul.f32 %v2710, %v2756
    %v2761 = vmul.f32 %v2749, %v2757
    %v2762 = vmul.f32 %v2751, %v2758
    %v2763 = vmul.f32 %v2759, 0.044715
    %v2764 = vmul.f32 %v2760, 0.044715
    %v2765 = vmul.f32 %v2761, 0.044715
    %v2766 = vmul.f32 %v2762, 0.044715
    %v2767 = vadd.f32 %v2708, %v2763
    %v2768 = vadd.f32 %v2710, %v2764
    %v2769 = vadd.f32 %v2749, %v2765
    %v2770 = vadd.f32 %v2751, %v2766
    %v2771 = vmul.f32 %v2767, 0.7978846
    %v2772 = vmul.f32 %v2768, 0.7978846
    %v2773 = vmul.f32 %v2769, 0.7978846
    %v2774 = vmul.f32 %v2770, 0.7978846
    %v2775 = vtanh.pop %v2771
    %v2776 = vtanh.pop %v2772
    %v2777 = vtanh.pop %v2773
    %v2778 = vtanh.pop %v2774
    %v2779 = vadd.f32 %v2775, 1.0
    %v2780 = vadd.f32 %v2776, 1.0
    %v2781 = vadd.f32 %v2777, 1.0
    %v2782 = vadd.f32 %v2778, 1.0
    %v2783 = vmul.f32 %v2779, 0.5
    %v2784 = vmul.f32 %v2780, 0.5
    %v2785 = vmul.f32 %v2781, 0.5
    %v2786 = vmul.f32 %v2782, 0.5
    %v2787 = vmul.f32 %v2708, %v2783
    %v2788 = vmul.f32 %v2710, %v2784
    %v2789 = vmul.f32 %v2749, %v2785
    %v2790 = vmul.f32 %v2751, %v2786
    %v2791 = vpack.c.bf16 %v2787, %v2787
    %v2792 = vpack.c.bf16 %v2788, %v2788
    %v2793 = vpack.c.bf16 %v2789, %v2789
    %v2794 = vpack.c.bf16 %v2790, %v2790
    %s2795 = scalar_lea.vmem [#allocation8], 768
    %v2796 = vld [vmem:[%s2795] sm:$0xf]
    %v2797 = vld [vmem:[%s2795 + $0x4] sm:$0xf]
    %v2798 = vld [vmem:[%s2795 + $0x8] sm:$0xf]
    %v2799 = vld [vmem:[%s2795 + $0xc] sm:$0xf]
    %v2800 = vld [vmem:[%s2795 + $0x10] sm:$0xf]
    %v2801 = vld [vmem:[%s2795 + $0x14] sm:$0xf]
    %v2802 = vld [vmem:[%s2795 + $0x18] sm:$0xf]
    %v2803 = vld [vmem:[%s2795 + $0x1c] sm:$0xf]
    %v2804 = vld [vmem:[%s2795 + $0x20] sm:$0xf]
    %v2805 = vld [vmem:[%s2795 + $0x24] sm:$0xf]
    %v2806 = vld [vmem:[%s2795 + $0x28] sm:$0xf]
    %v2807 = vld [vmem:[%s2795 + $0x2c] sm:$0xf]
    %v2808 = vld [vmem:[%s2795 + $0x30] sm:$0xf]
    %v2809 = vld [vmem:[%s2795 + $0x34] sm:$0xf]
    %v2810 = vld [vmem:[%s2795 + $0x38] sm:$0xf]
    %v2811 = vld [vmem:[%s2795 + $0x3c] sm:$0xf]
    %v2812 = vld [vmem:[%s2795 + $0x40] sm:$0xf]
    %v2813 = vld [vmem:[%s2795 + $0x44] sm:$0xf]
    %v2814 = vld [vmem:[%s2795 + $0x48] sm:$0xf]
    %v2815 = vld [vmem:[%s2795 + $0x4c] sm:$0xf]
    %v2816 = vld [vmem:[%s2795 + $0x50] sm:$0xf]
    %v2817 = vld [vmem:[%s2795 + $0x54] sm:$0xf]
    %v2818 = vld [vmem:[%s2795 + $0x58] sm:$0xf]
    %v2819 = vld [vmem:[%s2795 + $0x5c] sm:$0xf]
    %v2820 = vld [vmem:[%s2795 + $0x60] sm:$0xf]
    %v2821 = vld [vmem:[%s2795 + $0x64] sm:$0xf]
    %v2822 = vld [vmem:[%s2795 + $0x68] sm:$0xf]
    %v2823 = vld [vmem:[%s2795 + $0x6c] sm:$0xf]
    %v2824 = vld [vmem:[%s2795 + $0x70] sm:$0xf]
    %v2825 = vld [vmem:[%s2795 + $0x74] sm:$0xf]
    %v2826 = vld [vmem:[%s2795 + $0x78] sm:$0xf]
    %v2827 = vld [vmem:[%s2795 + $0x7c] sm:$0xf]
    %v2828 = vld [vmem:[%s2795 + $0x80] sm:$0xf]
    %v2829 = vld [vmem:[%s2795 + $0x84] sm:$0xf]
    %v2830 = vld [vmem:[%s2795 + $0x88] sm:$0xf]
    %v2831 = vld [vmem:[%s2795 + $0x8c] sm:$0xf]
    %v2832 = vld [vmem:[%s2795 + $0x90] sm:$0xf]
    %v2833 = vld [vmem:[%s2795 + $0x94] sm:$0xf]
    %v2834 = vld [vmem:[%s2795 + $0x98] sm:$0xf]
    %v2835 = vld [vmem:[%s2795 + $0x9c] sm:$0xf]
    %v2836 = vld [vmem:[%s2795 + $0xa0] sm:$0xf]
    %v2837 = vld [vmem:[%s2795 + $0xa4] sm:$0xf]
    %v2838 = vld [vmem:[%s2795 + $0xa8] sm:$0xf]
    %v2839 = vld [vmem:[%s2795 + $0xac] sm:$0xf]
    %v2840 = vld [vmem:[%s2795 + $0xb0] sm:$0xf]
    %v2841 = vld [vmem:[%s2795 + $0xb4] sm:$0xf]
    %v2842 = vld [vmem:[%s2795 + $0xb8] sm:$0xf]
    %v2843 = vld [vmem:[%s2795 + $0xbc] sm:$0xf]
    %v2844 = vld [vmem:[%s2795 + $0xc0] sm:$0xf]
    %v2845 = vld [vmem:[%s2795 + $0xc4] sm:$0xf]
    %v2846 = vld [vmem:[%s2795 + $0xc8] sm:$0xf]
    %v2847 = vld [vmem:[%s2795 + $0xcc] sm:$0xf]
    %v2848 = vld [vmem:[%s2795 + $0xd0] sm:$0xf]
    %v2849 = vld [vmem:[%s2795 + $0xd4] sm:$0xf]
    %v2850 = vld [vmem:[%s2795 + $0xd8] sm:$0xf]
    %v2851 = vld [vmem:[%s2795 + $0xdc] sm:$0xf]
    %v2852 = vld [vmem:[%s2795 + $0xe0] sm:$0xf]
    %v2853 = vld [vmem:[%s2795 + $0xe4] sm:$0xf]
    %v2854 = vld [vmem:[%s2795 + $0xe8] sm:$0xf]
    %v2855 = vld [vmem:[%s2795 + $0xec] sm:$0xf]
    %v2856 = vld [vmem:[%s2795 + $0xf0] sm:$0xf]
    %v2857 = vld [vmem:[%s2795 + $0xf4] sm:$0xf]
    %v2858 = vld [vmem:[%s2795 + $0xf8] sm:$0xf]
    %v2859 = vld [vmem:[%s2795 + $0xfc] sm:$0xf]
    %s2860 = scalar_lea.vmem [#allocation10], 3
    %v2861 = vld [vmem:[%s2860] sm:$0x1]
    %v2863 = vlaneseq
    %v2864 = vshrl.u32 %v2863, 7
    %v2865 = vsub.s32 0, %v2864
    %v2866 = vrot.slane %v2861, %v2865
    %v2932 = vunpack.c.l.b16 %v2796
    %v2933 = vunpack.c.l.b16 %v2797
    %v2934 = vunpack.c.l.b16 %v2798
    %v2935 = vunpack.c.l.b16 %v2799
    %v2936 = vunpack.c.l.b16 %v2800
    %v2937 = vunpack.c.l.b16 %v2801
    %v2938 = vunpack.c.l.b16 %v2802
    %v2939 = vunpack.c.l.b16 %v2803
    %v2940 = vunpack.c.l.b16 %v2804
    %v2941 = vunpack.c.l.b16 %v2805
    %v2942 = vunpack.c.l.b16 %v2806
    %v2943 = vunpack.c.l.b16 %v2807
    %v2944 = vunpack.c.l.b16 %v2808
    %v2945 = vunpack.c.l.b16 %v2809
    %v2946 = vunpack.c.l.b16 %v2810
    %v2947 = vunpack.c.l.b16 %v2811
    %v2948 = vunpack.c.l.b16 %v2812
    %v2949 = vunpack.c.l.b16 %v2813
    %v2950 = vunpack.c.l.b16 %v2814
    %v2951 = vunpack.c.l.b16 %v2815
    %v2952 = vunpack.c.l.b16 %v2816
    %v2953 = vunpack.c.l.b16 %v2817
    %v2954 = vunpack.c.l.b16 %v2818
    %v2955 = vunpack.c.l.b16 %v2819
    %v2956 = vunpack.c.l.b16 %v2820
    %v2957 = vunpack.c.l.b16 %v2821
    %v2958 = vunpack.c.l.b16 %v2822
    %v2959 = vunpack.c.l.b16 %v2823
    %v2960 = vunpack.c.l.b16 %v2824
    %v2961 = vunpack.c.l.b16 %v2825
    %v2962 = vunpack.c.l.b16 %v2826
    %v2963 = vunpack.c.l.b16 %v2827
    %v2964 = vunpack.c.l.b16 %v2828
    %v2965 = vunpack.c.l.b16 %v2829
    %v2966 = vunpack.c.l.b16 %v2830
    %v2967 = vunpack.c.l.b16 %v2831
    %v2968 = vunpack.c.l.b16 %v2832
    %v2969 = vunpack.c.l.b16 %v2833
    %v2970 = vunpack.c.l.b16 %v2834
    %v2971 = vunpack.c.l.b16 %v2835
    %v2972 = vunpack.c.l.b16 %v2836
    %v2973 = vunpack.c.l.b16 %v2837
    %v2974 = vunpack.c.l.b16 %v2838
    %v2975 = vunpack.c.l.b16 %v2839
    %v2976 = vunpack.c.l.b16 %v2840
    %v2977 = vunpack.c.l.b16 %v2841
    %v2978 = vunpack.c.l.b16 %v2842
    %v2979 = vunpack.c.l.b16 %v2843
    %v2980 = vunpack.c.l.b16 %v2844
    %v2981 = vunpack.c.l.b16 %v2845
    %v2982 = vunpack.c.l.b16 %v2846
    %v2983 = vunpack.c.l.b16 %v2847
    %v2984 = vunpack.c.l.b16 %v2848
    %v2985 = vunpack.c.l.b16 %v2849
    %v2986 = vunpack.c.l.b16 %v2850
    %v2987 = vunpack.c.l.b16 %v2851
    %v2988 = vunpack.c.l.b16 %v2852
    %v2989 = vunpack.c.l.b16 %v2853
    %v2990 = vunpack.c.l.b16 %v2854
    %v2991 = vunpack.c.l.b16 %v2855
    %v2992 = vunpack.c.l.b16 %v2856
    %v2993 = vunpack.c.l.b16 %v2857
    %v2994 = vunpack.c.l.b16 %v2858
    %v2995 = vunpack.c.l.b16 %v2859
    %v2996 = vpack.c.b16 %v2933, %v2932
    %v2997 = vpack.c.b16 %v2935, %v2934
    %v2998 = vpack.c.b16 %v2937, %v2936
    %v2999 = vpack.c.b16 %v2939, %v2938
    %v3000 = vpack.c.b16 %v2941, %v2940
    %v3001 = vpack.c.b16 %v2943, %v2942
    %v3002 = vpack.c.b16 %v2945, %v2944
    %v3003 = vpack.c.b16 %v2947, %v2946
    %v3004 = vpack.c.b16 %v2949, %v2948
    %v3005 = vpack.c.b16 %v2951, %v2950
    %v3006 = vpack.c.b16 %v2953, %v2952
    %v3007 = vpack.c.b16 %v2955, %v2954
    %v3008 = vpack.c.b16 %v2957, %v2956
    %v3009 = vpack.c.b16 %v2959, %v2958
    %v3010 = vpack.c.b16 %v2961, %v2960
    %v3011 = vpack.c.b16 %v2963, %v2962
    %v3012 = vpack.c.b16 %v2965, %v2964
    %v3013 = vpack.c.b16 %v2967, %v2966
    %v3014 = vpack.c.b16 %v2969, %v2968
    %v3015 = vpack.c.b16 %v2971, %v2970
    %v3016 = vpack.c.b16 %v2973, %v2972
    %v3017 = vpack.c.b16 %v2975, %v2974
    %v3018 = vpack.c.b16 %v2977, %v2976
    %v3019 = vpack.c.b16 %v2979, %v2978
    %v3020 = vpack.c.b16 %v2981, %v2980
    %v3021 = vpack.c.b16 %v2983, %v2982
    %v3022 = vpack.c.b16 %v2985, %v2984
    %v3023 = vpack.c.b16 %v2987, %v2986
    %v3024 = vpack.c.b16 %v2989, %v2988
    %v3025 = vpack.c.b16 %v2991, %v2990
    %v3026 = vpack.c.b16 %v2993, %v2992
    %v3027 = vpack.c.b16 %v2995, %v2994
    %3060 = vmatprep.subr.bf16.mxu0 0
    %3061 = vmatpush1.bf16.msra.mxu0 %v2996
    %3062 = vmatprep.subr.bf16.mxu0 0
    %3063 = vmatpush1.bf16.msra.mxu0 %v2997
    %3064 = vmatprep.subr.bf16.mxu0 0
    %3065 = vmatpush1.bf16.msra.mxu0 %v2998
    %3066 = vmatprep.subr.bf16.mxu0 0
    %3067 = vmatpush1.bf16.msra.mxu0 %v2999
    %3068 = vmatprep.subr.bf16.mxu0 0
    %3069 = vmatpush1.bf16.msra.mxu0 %v3000
    %3070 = vmatprep.subr.bf16.mxu0 0
    %3071 = vmatpush1.bf16.msra.mxu0 %v3001
    %3072 = vmatprep.subr.bf16.mxu0 0
    %3073 = vmatpush1.bf16.msra.mxu0 %v3002
    %3074 = vmatprep.subr.bf16.mxu0 0
    %3075 = vmatpush1.bf16.msra.mxu0 %v3003
    %3076 = vmatprep.subr.bf16.mxu0 0
    %3077 = vmatpush1.bf16.msra.mxu0 %v3004
    %3078 = vmatprep.subr.bf16.mxu0 0
    %3079 = vmatpush1.bf16.msra.mxu0 %v3005
    %3080 = vmatprep.subr.bf16.mxu0 0
    %3081 = vmatpush1.bf16.msra.mxu0 %v3006
    %3082 = vmatprep.subr.bf16.mxu0 0
    %3083 = vmatpush1.bf16.msra.mxu0 %v3007
    %3084 = vmatprep.subr.bf16.mxu0 0
    %3085 = vmatpush1.bf16.msra.mxu0 %v3008
    %3086 = vmatprep.subr.bf16.mxu0 0
    %3087 = vmatpush1.bf16.msra.mxu0 %v3009
    %3088 = vmatprep.subr.bf16.mxu0 0
    %3089 = vmatpush1.bf16.msra.mxu0 %v3010
    %3090 = vmatprep.subr.bf16.mxu0 0
    %3091 = vmatpush1.bf16.msra.mxu0 %v3011
    %3092 = vmatprep.mubr.bf16.mxu0 %v2792
    %3093 = vmatmul.mubr.bf16.gmra.mrb[0].mxu0 %v2791
    %v3094 = vpop.f32.mrb[0].mxu0
    %v3095 = vadd.f32 %v2866, %v3094
    %v3096 = vpop.f32.mrb[0].mxu0
    %v3097 = vpop.f32.mrb[0].mxu0
    %v3098 = vpop.f32.mrb[0].mxu0
    %3099 = vdwg.mxu0
    %3100 = vmatprep.subr.bf16.mxu0 0
    %3101 = vmatpush1.bf16.msra.mxu0 %v3012
    %3102 = vmatprep.subr.bf16.mxu0 0
    %3103 = vmatpush1.bf16.msra.mxu0 %v3013
    %3104 = vmatprep.subr.bf16.mxu0 0
    %3105 = vmatpush1.bf16.msra.mxu0 %v3014
    %3106 = vmatprep.subr.bf16.mxu0 0
    %3107 = vmatpush1.bf16.msra.mxu0 %v3015
    %3108 = vmatprep.subr.bf16.mxu0 0
    %3109 = vmatpush1.bf16.msra.mxu0 %v3016
    %3110 = vmatprep.subr.bf16.mxu0 0
    %3111 = vmatpush1.bf16.msra.mxu0 %v3017
    %3112 = vmatprep.subr.bf16.mxu0 0
    %3113 = vmatpush1.bf16.msra.mxu0 %v3018
    %3114 = vmatprep.subr.bf16.mxu0 0
    %3115 = vmatpush1.bf16.msra.mxu0 %v3019
    %3116 = vmatprep.subr.bf16.mxu0 0
    %3117 = vmatpush1.bf16.msra.mxu0 %v3020
    %3118 = vmatprep.subr.bf16.mxu0 0
    %3119 = vmatpush1.bf16.msra.mxu0 %v3021
    %3120 = vmatprep.subr.bf16.mxu0 0
    %3121 = vmatpush1.bf16.msra.mxu0 %v3022
    %3122 = vmatprep.subr.bf16.mxu0 0
    %3123 = vmatpush1.bf16.msra.mxu0 %v3023
    %3124 = vmatprep.subr.bf16.mxu0 0
    %3125 = vmatpush1.bf16.msra.mxu0 %v3024
    %3126 = vmatprep.subr.bf16.mxu0 0
    %3127 = vmatpush1.bf16.msra.mxu0 %v3025
    %3128 = vmatprep.subr.bf16.mxu0 0
    %3129 = vmatpush1.bf16.msra.mxu0 %v3026
    %3130 = vmatprep.subr.bf16.mxu0 0
    %3131 = vmatpush1.bf16.msra.mxu0 %v3027
    %3132 = vmatprep.mubr.bf16.mxu0 %v2794
    %3133 = vmatmul.mubr.bf16.gmra.mrb[0].mxu0 %v2793
    %v3134 = vpop.f32.mrb[0].mxu0
    %v3135 = vadd.f32 %v3095, %v3134
    %v3136 = vpop.f32.mrb[0].mxu0
    %v3137 = vpop.f32.mrb[0].mxu0
    %v3138 = vpop.f32.mrb[0].mxu0
    %3139 = vdwg.mxu0
    %v3140 = vadd.f32 %v3135, %v2455
    %v3141 = vpack.c.bf16 %v3140, %v3140
    %v3142 = vld [vmem:[#allocation11] sm:$0xff]
    %v3143 = vld [vmem:[#allocation11 + $0x8] sm:$0xff]
    %v3144 = vld [vmem:[#allocation11 + $0x10] sm:$0xff]
    %v3145 = vld [vmem:[#allocation11 + $0x18] sm:$0xff]
    %v3146 = vld [vmem:[#allocation11 + $0x20] sm:$0xff]
    %v3147 = vld [vmem:[#allocation11 + $0x28] sm:$0xff]
    %v3148 = vld [vmem:[#allocation11 + $0x30] sm:$0xff]
    %v3149 = vld [vmem:[#allocation11 + $0x38] sm:$0xff]
    %v3150 = vld [vmem:[#allocation11 + $0x40] sm:$0xff]
    %v3151 = vld [vmem:[#allocation11 + $0x48] sm:$0xff]
    %v3152 = vld [vmem:[#allocation11 + $0x50] sm:$0xff]
    %v3153 = vld [vmem:[#allocation11 + $0x58] sm:$0xff]
    %v3154 = vld [vmem:[#allocation11 + $0x60] sm:$0xff]
    %v3155 = vld [vmem:[#allocation11 + $0x68] sm:$0xff]
    %v3156 = vld [vmem:[#allocation11 + $0x70] sm:$0xff]
    %v3157 = vld [vmem:[#allocation11 + $0x78] sm:$0xff]
    %v3158 = vld [vmem:[#allocation11 + $0x80] sm:$0xff]
    %v3159 = vld [vmem:[#allocation11 + $0x88] sm:$0xff]
    %v3160 = vld [vmem:[#allocation11 + $0x90] sm:$0xff]
    %v3161 = vld [vmem:[#allocation11 + $0x98] sm:$0xff]
    %v3162 = vld [vmem:[#allocation11 + $0xa0] sm:$0xff]
    %v3163 = vld [vmem:[#allocation11 + $0xa8] sm:$0xff]
    %v3164 = vld [vmem:[#allocation11 + $0xb0] sm:$0xff]
    %v3165 = vld [vmem:[#allocation11 + $0xb8] sm:$0xff]
    %v3166 = vld [vmem:[#allocation11 + $0xc0] sm:$0xff]
    %v3167 = vld [vmem:[#allocation11 + $0xc8] sm:$0xff]
    %v3168 = vld [vmem:[#allocation11 + $0xd0] sm:$0xff]
    %v3169 = vld [vmem:[#allocation11 + $0xd8] sm:$0xff]
    %v3170 = vld [vmem:[#allocation11 + $0xe0] sm:$0xff]
    %v3171 = vld [vmem:[#allocation11 + $0xe8] sm:$0xff]
    %v3172 = vld [vmem:[#allocation11 + $0xf0] sm:$0xff]
    %v3173 = vld [vmem:[#allocation11 + $0xf8] sm:$0xff]
    %v3174 = vld [vmem:[#allocation11 + $0x100] sm:$0xff]
    %v3175 = vld [vmem:[#allocation11 + $0x108] sm:$0xff]
    %v3176 = vld [vmem:[#allocation11 + $0x110] sm:$0xff]
    %v3177 = vld [vmem:[#allocation11 + $0x118] sm:$0xff]
    %v3178 = vld [vmem:[#allocation11 + $0x120] sm:$0xff]
    %v3179 = vld [vmem:[#allocation11 + $0x128] sm:$0xff]
    %v3180 = vld [vmem:[#allocation11 + $0x130] sm:$0xff]
    %v3181 = vld [vmem:[#allocation11 + $0x138] sm:$0xff]
    %v3182 = vld [vmem:[#allocation11 + $0x140] sm:$0xff]
    %v3183 = vld [vmem:[#allocation11 + $0x148] sm:$0xff]
    %v3184 = vld [vmem:[#allocation11 + $0x150] sm:$0xff]
    %v3185 = vld [vmem:[#allocation11 + $0x158] sm:$0xff]
    %v3186 = vld [vmem:[#allocation11 + $0x160] sm:$0xff]
    %v3187 = vld [vmem:[#allocation11 + $0x168] sm:$0xff]
    %v3188 = vld [vmem:[#allocation11 + $0x170] sm:$0xff]
    %v3189 = vld [vmem:[#allocation11 + $0x178] sm:$0xff]
    %v3190 = vld [vmem:[#allocation11 + $0x180] sm:$0xff]
    %v3191 = vld [vmem:[#allocation11 + $0x188] sm:$0xff]
    %v3192 = vld [vmem:[#allocation11 + $0x190] sm:$0xff]
    %v3193 = vld [vmem:[#allocation11 + $0x198] sm:$0xff]
    %v3194 = vld [vmem:[#allocation11 + $0x1a0] sm:$0xff]
    %v3195 = vld [vmem:[#allocation11 + $0x1a8] sm:$0xff]
    %v3196 = vld [vmem:[#allocation11 + $0x1b0] sm:$0xff]
    %v3197 = vld [vmem:[#allocation11 + $0x1b8] sm:$0xff]
    %v3198 = vld [vmem:[#allocation11 + $0x1c0] sm:$0xff]
    %v3199 = vld [vmem:[#allocation11 + $0x1c8] sm:$0xff]
    %v3200 = vld [vmem:[#allocation11 + $0x1d0] sm:$0xff]
    %v3201 = vld [vmem:[#allocation11 + $0x1d8] sm:$0xff]
    %v3202 = vld [vmem:[#allocation11 + $0x1e0] sm:$0xff]
    %v3203 = vld [vmem:[#allocation11 + $0x1e8] sm:$0xff]
    %v3204 = vld [vmem:[#allocation11 + $0x1f0] sm:$0xff]
    %v3205 = vld [vmem:[#allocation11 + $0x1f8] sm:$0xff]
    %v3206 = vld [vmem:[%s12] sm:$0xff]
    %v3208 = vlaneseq
    %v3209 = vshrl.u32 %v3208, 7
    %v3210 = vsub.s32 0, %v3209
    %v3211 = vrot.slane %v3206, %v3210
    %v3212 = vlaneseq
    %v3213 = vshrl.u32 %v3212, 7
    %v3214 = vsub.s32 1, %v3213
    %v3215 = vrot.slane %v3206, %v3214
    %v3216 = vlaneseq
    %v3217 = vshrl.u32 %v3216, 7
    %v3218 = vsub.s32 2, %v3217
    %v3219 = vrot.slane %v3206, %v3218
    %v3220 = vlaneseq
    %v3221 = vshrl.u32 %v3220, 7
    %v3222 = vsub.s32 3, %v3221
    %v3223 = vrot.slane %v3206, %v3222
    %v3224 = vlaneseq
    %v3225 = vshrl.u32 %v3224, 7
    %v3226 = vsub.s32 4, %v3225
    %v3227 = vrot.slane %v3206, %v3226
    %v3228 = vlaneseq
    %v3229 = vshrl.u32 %v3228, 7
    %v3230 = vsub.s32 5, %v3229
    %v3231 = vrot.slane %v3206, %v3230
    %v3232 = vlaneseq
    %v3233 = vshrl.u32 %v3232, 7
    %v3234 = vsub.s32 6, %v3233
    %v3235 = vrot.slane %v3206, %v3234
    %v3236 = vlaneseq
    %v3237 = vshrl.u32 %v3236, 7
    %v3238 = vsub.s32 7, %v3237
    %v3239 = vrot.slane %v3206, %v3238
    %v3312 = vunpack.c.l.b16 %v3142
    %v3313 = vunpack.c.h.b16 %v3142
    %v3314 = vunpack.c.l.b16 %v3143
    %v3315 = vunpack.c.h.b16 %v3143
    %v3316 = vunpack.c.l.b16 %v3144
    %v3317 = vunpack.c.h.b16 %v3144
    %v3318 = vunpack.c.l.b16 %v3145
    %v3319 = vunpack.c.h.b16 %v3145
    %v3320 = vunpack.c.l.b16 %v3146
    %v3321 = vunpack.c.h.b16 %v3146
    %v3322 = vunpack.c.l.b16 %v3147
    %v3323 = vunpack.c.h.b16 %v3147
    %v3324 = vunpack.c.l.b16 %v3148
    %v3325 = vunpack.c.h.b16 %v3148
    %v3326 = vunpack.c.l.b16 %v3149
    %v3327 = vunpack.c.h.b16 %v3149
    %v3328 = vunpack.c.l.b16 %v3150
    %v3329 = vunpack.c.h.b16 %v3150
    %v3330 = vunpack.c.l.b16 %v3151
    %v3331 = vunpack.c.h.b16 %v3151
    %v3332 = vunpack.c.l.b16 %v3152
    %v3333 = vunpack.c.h.b16 %v3152
    %v3334 = vunpack.c.l.b16 %v3153
    %v3335 = vunpack.c.h.b16 %v3153
    %v3336 = vunpack.c.l.b16 %v3154
    %v3337 = vunpack.c.h.b16 %v3154
    %v3338 = vunpack.c.l.b16 %v3155
    %v3339 = vunpack.c.h.b16 %v3155
    %v3340 = vunpack.c.l.b16 %v3156
    %v3341 = vunpack.c.h.b16 %v3156
    %v3342 = vunpack.c.l.b16 %v3157
    %v3343 = vunpack.c.h.b16 %v3157
    %v3344 = vunpack.c.l.b16 %v3158
    %v3345 = vunpack.c.h.b16 %v3158
    %v3346 = vunpack.c.l.b16 %v3159
    %v3347 = vunpack.c.h.b16 %v3159
    %v3348 = vunpack.c.l.b16 %v3160
    %v3349 = vunpack.c.h.b16 %v3160
    %v3350 = vunpack.c.l.b16 %v3161
    %v3351 = vunpack.c.h.b16 %v3161
    %v3352 = vunpack.c.l.b16 %v3162
    %v3353 = vunpack.c.h.b16 %v3162
    %v3354 = vunpack.c.l.b16 %v3163
    %v3355 = vunpack.c.h.b16 %v3163
    %v3356 = vunpack.c.l.b16 %v3164
    %v3357 = vunpack.c.h.b16 %v3164
    %v3358 = vunpack.c.l.b16 %v3165
    %v3359 = vunpack.c.h.b16 %v3165
    %v3360 = vunpack.c.l.b16 %v3166
    %v3361 = vunpack.c.h.b16 %v3166
    %v3362 = vunpack.c.l.b16 %v3167
    %v3363 = vunpack.c.h.b16 %v3167
    %v3364 = vunpack.c.l.b16 %v3168
    %v3365 = vunpack.c.h.b16 %v3168
    %v3366 = vunpack.c.l.b16 %v3169
    %v3367 = vunpack.c.h.b16 %v3169
    %v3368 = vunpack.c.l.b16 %v3170
    %v3369 = vunpack.c.h.b16 %v3170
    %v3370 = vunpack.c.l.b16 %v3171
    %v3371 = vunpack.c.h.b16 %v3171
    %v3372 = vunpack.c.l.b16 %v3172
    %v3373 = vunpack.c.h.b16 %v3172
    %v3374 = vunpack.c.l.b16 %v3173
    %v3375 = vunpack.c.h.b16 %v3173
    %v3376 = vunpack.c.l.b16 %v3174
    %v3377 = vunpack.c.h.b16 %v3174
    %v3378 = vunpack.c.l.b16 %v3175
    %v3379 = vunpack.c.h.b16 %v3175
    %v3380 = vunpack.c.l.b16 %v3176
    %v3381 = vunpack.c.h.b16 %v3176
    %v3382 = vunpack.c.l.b16 %v3177
    %v3383 = vunpack.c.h.b16 %v3177
    %v3384 = vunpack.c.l.b16 %v3178
    %v3385 = vunpack.c.h.b16 %v3178
    %v3386 = vunpack.c.l.b16 %v3179
    %v3387 = vunpack.c.h.b16 %v3179
    %v3388 = vunpack.c.l.b16 %v3180
    %v3389 = vunpack.c.h.b16 %v3180
    %v3390 = vunpack.c.l.b16 %v3181
    %v3391 = vunpack.c.h.b16 %v3181
    %v3392 = vunpack.c.l.b16 %v3182
    %v3393 = vunpack.c.h.b16 %v3182
    %v3394 = vunpack.c.l.b16 %v3183
    %v3395 = vunpack.c.h.b16 %v3183
    %v3396 = vunpack.c.l.b16 %v3184
    %v3397 = vunpack.c.h.b16 %v3184
    %v3398 = vunpack.c.l.b16 %v3185
    %v3399 = vunpack.c.h.b16 %v3185
    %v3400 = vunpack.c.l.b16 %v3186
    %v3401 = vunpack.c.h.b16 %v3186
    %v3402 = vunpack.c.l.b16 %v3187
    %v3403 = vunpack.c.h.b16 %v3187
    %v3404 = vunpack.c.l.b16 %v3188
    %v3405 = vunpack.c.h.b16 %v3188
    %v3406 = vunpack.c.l.b16 %v3189
    %v3407 = vunpack.c.h.b16 %v3189
    %v3408 = vunpack.c.l.b16 %v3190
    %v3409 = vunpack.c.h.b16 %v3190
    %v3410 = vunpack.c.l.b16 %v3191
    %v3411 = vunpack.c.h.b16 %v3191
    %v3412 = vunpack.c.l.b16 %v3192
    %v3413 = vunpack.c.h.b16 %v3192
    %v3414 = vunpack.c.l.b16 %v3193
    %v3415 = vunpack.c.h.b16 %v3193
    %v3416 = vunpack.c.l.b16 %v3194
    %v3417 = vunpack.c.h.b16 %v3194
    %v3418 = vunpack.c.l.b16 %v3195
    %v3419 = vunpack.c.h.b16 %v3195
    %v3420 = vunpack.c.l.b16 %v3196
    %v3421 = vunpack.c.h.b16 %v3196
    %v3422 = vunpack.c.l.b16 %v3197
    %v3423 = vunpack.c.h.b16 %v3197
    %v3424 = vunpack.c.l.b16 %v3198
    %v3425 = vunpack.c.h.b16 %v3198
    %v3426 = vunpack.c.l.b16 %v3199
    %v3427 = vunpack.c.h.b16 %v3199
    %v3428 = vunpack.c.l.b16 %v3200
    %v3429 = vunpack.c.h.b16 %v3200
    %v3430 = vunpack.c.l.b16 %v3201
    %v3431 = vunpack.c.h.b16 %v3201
    %v3432 = vunpack.c.l.b16 %v3202
    %v3433 = vunpack.c.h.b16 %v3202
    %v3434 = vunpack.c.l.b16 %v3203
    %v3435 = vunpack.c.h.b16 %v3203
    %v3436 = vunpack.c.l.b16 %v3204
    %v3437 = vunpack.c.h.b16 %v3204
    %v3438 = vunpack.c.l.b16 %v3205
    %v3439 = vunpack.c.h.b16 %v3205
    %v3440 = vpack.c.b16 %v3320, %v3312
    %v3441 = vpack.c.b16 %v3321, %v3313
    %v3442 = vpack.c.b16 %v3322, %v3314
    %v3443 = vpack.c.b16 %v3323, %v3315
    %v3444 = vpack.c.b16 %v3324, %v3316
    %v3445 = vpack.c.b16 %v3325, %v3317
    %v3446 = vpack.c.b16 %v3326, %v3318
    %v3447 = vpack.c.b16 %v3327, %v3319
    %v3448 = vpack.c.b16 %v3336, %v3328
    %v3449 = vpack.c.b16 %v3337, %v3329
    %v3450 = vpack.c.b16 %v3338, %v3330
    %v3451 = vpack.c.b16 %v3339, %v3331
    %v3452 = vpack.c.b16 %v3340, %v3332
    %v3453 = vpack.c.b16 %v3341, %v3333
    %v3454 = vpack.c.b16 %v3342, %v3334
    %v3455 = vpack.c.b16 %v3343, %v3335
    %v3456 = vpack.c.b16 %v3352, %v3344
    %v3457 = vpack.c.b16 %v3353, %v3345
    %v3458 = vpack.c.b16 %v3354, %v3346
    %v3459 = vpack.c.b16 %v3355, %v3347
    %v3460 = vpack.c.b16 %v3356, %v3348
    %v3461 = vpack.c.b16 %v3357, %v3349
    %v3462 = vpack.c.b16 %v3358, %v3350
    %v3463 = vpack.c.b16 %v3359, %v3351
    %v3464 = vpack.c.b16 %v3368, %v3360
    %v3465 = vpack.c.b16 %v3369, %v3361
    %v3466 = vpack.c.b16 %v3370, %v3362
    %v3467 = vpack.c.b16 %v3371, %v3363
    %v3468 = vpack.c.b16 %v3372, %v3364
    %v3469 = vpack.c.b16 %v3373, %v3365
    %v3470 = vpack.c.b16 %v3374, %v3366
    %v3471 = vpack.c.b16 %v3375, %v3367
    %v3472 = vpack.c.b16 %v3384, %v3376
    %v3473 = vpack.c.b16 %v3385, %v3377
    %v3474 = vpack.c.b16 %v3386, %v3378
    %v3475 = vpack.c.b16 %v3387, %v3379
    %v3476 = vpack.c.b16 %v3388, %v3380
    %v3477 = vpack.c.b16 %v3389, %v3381
    %v3478 = vpack.c.b16 %v3390, %v3382
    %v3479 = vpack.c.b16 %v3391, %v3383
    %v3480 = vpack.c.b16 %v3400, %v3392
    %v3481 = vpack.c.b16 %v3401, %v3393
    %v3482 = vpack.c.b16 %v3402, %v3394
    %v3483 = vpack.c.b16 %v3403, %v3395
    %v3484 = vpack.c.b16 %v3404, %v3396
    %v3485 = vpack.c.b16 %v3405, %v3397
    %v3486 = vpack.c.b16 %v3406, %v3398
    %v3487 = vpack.c.b16 %v3407, %v3399
    %v3488 = vpack.c.b16 %v3416, %v3408
    %v3489 = vpack.c.b16 %v3417, %v3409
    %v3490 = vpack.c.b16 %v3418, %v3410
    %v3491 = vpack.c.b16 %v3419, %v3411
    %v3492 = vpack.c.b16 %v3420, %v3412
    %v3493 = vpack.c.b16 %v3421, %v3413
    %v3494 = vpack.c.b16 %v3422, %v3414
    %v3495 = vpack.c.b16 %v3423, %v3415
    %v3496 = vpack.c.b16 %v3432, %v3424
    %v3497 = vpack.c.b16 %v3433, %v3425
    %v3498 = vpack.c.b16 %v3434, %v3426
    %v3499 = vpack.c.b16 %v3435, %v3427
    %v3500 = vpack.c.b16 %v3436, %v3428
    %v3501 = vpack.c.b16 %v3437, %v3429
    %v3502 = vpack.c.b16 %v3438, %v3430
    %v3503 = vpack.c.b16 %v3439, %v3431
    %3568 = vmatprep.subr.bf16.mxu0 %v3441
    %3569 = vmatpush1.bf16.msra.mxu0 %v3440
    %3570 = vmatprep.subr.bf16.mxu0 %v3449
    %3571 = vmatpush1.bf16.msra.mxu0 %v3448
    %3572 = vmatprep.subr.bf16.mxu0 %v3457
    %3573 = vmatpush1.bf16.msra.mxu0 %v3456
    %3574 = vmatprep.subr.bf16.mxu0 %v3465
    %3575 = vmatpush1.bf16.msra.mxu0 %v3464
    %3576 = vmatprep.subr.bf16.mxu0 %v3473
    %3577 = vmatpush1.bf16.msra.mxu0 %v3472
    %3578 = vmatprep.subr.bf16.mxu0 %v3481
    %3579 = vmatpush1.bf16.msra.mxu0 %v3480
    %3580 = vmatprep.subr.bf16.mxu0 %v3489
    %3581 = vmatpush1.bf16.msra.mxu0 %v3488
    %3582 = vmatprep.subr.bf16.mxu0 %v3497
    %3583 = vmatpush1.bf16.msra.mxu0 %v3496
    %3584 = vmatprep.subr.bf16.mxu0 0
    %3585 = vmatpush1.bf16.msra.mxu0 0
    %3586 = vmatprep.subr.bf16.mxu0 0
    %3587 = vmatpush1.bf16.msra.mxu0 0
    %3588 = vmatprep.subr.bf16.mxu0 0
    %3589 = vmatpush1.bf16.msra.mxu0 0
    %3590 = vmatprep.subr.bf16.mxu0 0
    %3591 = vmatpush1.bf16.msra.mxu0 0
    %3592 = vmatprep.subr.bf16.mxu0 0
    %3593 = vmatpush1.bf16.msra.mxu0 0
    %3594 = vmatprep.subr.bf16.mxu0 0
    %3595 = vmatpush1.bf16.msra.mxu0 0
    %3596 = vmatprep.subr.bf16.mxu0 0
    %3597 = vmatpush1.bf16.msra.mxu0 0
    %3598 = vmatprep.subr.bf16.mxu0 0
    %3599 = vmatpush1.bf16.msra.mxu0 0
    %3600 = vmatprep.mubr.bf16.mxu0 0
    %3601 = vmatmul.mubr.bf16.gmra.mrb[0].mxu0 %v3141
    %v3602 = vpop.f32.mrb[0].mxu0
    %v3603 = vadd.f32 %v3211, %v3602
    %v3604 = vpop.f32.mrb[0].mxu0
    %v3605 = vadd.f32 %v3215, %v3604
    %v3606 = vpop.f32.mrb[0].mxu0
    %v3607 = vpop.f32.mrb[0].mxu0
    %3608 = vdwg.mxu0
    %3609 = vmatprep.subr.bf16.mxu0 %v3443
    %3610 = vmatpush1.bf16.msra.mxu0 %v3442
    %3611 = vmatprep.subr.bf16.mxu0 %v3451
    %3612 = vmatpush1.bf16.msra.mxu0 %v3450
    %3613 = vmatprep.subr.bf16.mxu0 %v3459
    %3614 = vmatpush1.bf16.msra.mxu0 %v3458
    %3615 = vmatprep.subr.bf16.mxu0 %v3467
    %3616 = vmatpush1.bf16.msra.mxu0 %v3466
    %3617 = vmatprep.subr.bf16.mxu0 %v3475
    %3618 = vmatpush1.bf16.msra.mxu0 %v3474
    %3619 = vmatprep.subr.bf16.mxu0 %v3483
    %3620 = vmatpush1.bf16.msra.mxu0 %v3482
    %3621 = vmatprep.subr.bf16.mxu0 %v3491
    %3622 = vmatpush1.bf16.msra.mxu0 %v3490
    %3623 = vmatprep.subr.bf16.mxu0 %v3499
    %3624 = vmatpush1.bf16.msra.mxu0 %v3498
    %3625 = vmatprep.subr.bf16.mxu0 0
    %3626 = vmatpush1.bf16.msra.mxu0 0
    %3627 = vmatprep.subr.bf16.mxu0 0
    %3628 = vmatpush1.bf16.msra.mxu0 0
    %3629 = vmatprep.subr.bf16.mxu0 0
    %3630 = vmatpush1.bf16.msra.mxu0 0
    %3631 = vmatprep.subr.bf16.mxu0 0
    %3632 = vmatpush1.bf16.msra.mxu0 0
    %3633 = vmatprep.subr.bf16.mxu0 0
    %3634 = vmatpush1.bf16.msra.mxu0 0
    %3635 = vmatprep.subr.bf16.mxu0 0
    %3636 = vmatpush1.bf16.msra.mxu0 0
    %3637 = vmatprep.subr.bf16.mxu0 0
    %3638 = vmatpush1.bf16.msra.mxu0 0
    %3639 = vmatprep.subr.bf16.mxu0 0
    %3640 = vmatpush1.bf16.msra.mxu0 0
    %3641 = vmatprep.mubr.bf16.mxu0 0
    %3642 = vmatmul.mubr.bf16.gmra.mrb[0].mxu0 %v3141
    %v3643 = vpop.f32.mrb[0].mxu0
    %v3644 = vadd.f32 %v3219, %v3643
    %v3645 = vpop.f32.mrb[0].mxu0
    %v3646 = vadd.f32 %v3223, %v3645
    %v3647 = vpop.f32.mrb[0].mxu0
    %v3648 = vpop.f32.mrb[0].mxu0
    %3649 = vdwg.mxu0
    %3650 = vmatprep.subr.bf16.mxu0 %v3445
    %3651 = vmatpush1.bf16.msra.mxu0 %v3444
    %3652 = vmatprep.subr.bf16.mxu0 %v3453
    %3653 = vmatpush1.bf16.msra.mxu0 %v3452
    %3654 = vmatprep.subr.bf16.mxu0 %v3461
    %3655 = vmatpush1.bf16.msra.mxu0 %v3460
    %3656 = vmatprep.subr.bf16.mxu0 %v3469
    %3657 = vmatpush1.bf16.msra.mxu0 %v3468
    %3658 = vmatprep.subr.bf16.mxu0 %v3477
    %3659 = vmatpush1.bf16.msra.mxu0 %v3476
    %3660 = vmatprep.subr.bf16.mxu0 %v3485
    %3661 = vmatpush1.bf16.msra.mxu0 %v3484
    %3662 = vmatprep.subr.bf16.mxu0 %v3493
    %3663 = vmatpush1.bf16.msra.mxu0 %v3492
    %3664 = vmatprep.subr.bf16.mxu0 %v3501
    %3665 = vmatpush1.bf16.msra.mxu0 %v3500
    %3666 = vmatprep.subr.bf16.mxu0 0
    %3667 = vmatpush1.bf16.msra.mxu0 0
    %3668 = vmatprep.subr.bf16.mxu0 0
    %3669 = vmatpush1.bf16.msra.mxu0 0
    %3670 = vmatprep.subr.bf16.mxu0 0
    %3671 = vmatpush1.bf16.msra.mxu0 0
    %3672 = vmatprep.subr.bf16.mxu0 0
    %3673 = vmatpush1.bf16.msra.mxu0 0
    %3674 = vmatprep.subr.bf16.mxu0 0
    %3675 = vmatpush1.bf16.msra.mxu0 0
    %3676 = vmatprep.subr.bf16.mxu0 0
    %3677 = vmatpush1.bf16.msra.mxu0 0
    %3678 = vmatprep.subr.bf16.mxu0 0
    %3679 = vmatpush1.bf16.msra.mxu0 0
    %3680 = vmatprep.subr.bf16.mxu0 0
    %3681 = vmatpush1.bf16.msra.mxu0 0
    %3682 = vmatprep.mubr.bf16.mxu0 0
    %3683 = vmatmul.mubr.bf16.gmra.mrb[0].mxu0 %v3141
    %v3684 = vpop.f32.mrb[0].mxu0
    %v3685 = vadd.f32 %v3227, %v3684
    %v3686 = vpop.f32.mrb[0].mxu0
    %v3687 = vadd.f32 %v3231, %v3686
    %v3688 = vpop.f32.mrb[0].mxu0
    %v3689 = vpop.f32.mrb[0].mxu0
    %3690 = vdwg.mxu0
    %3691 = vmatprep.subr.bf16.mxu0 %v3447
    %3692 = vmatpush1.bf16.msra.mxu0 %v3446
    %3693 = vmatprep.subr.bf16.mxu0 %v3455
    %3694 = vmatpush1.bf16.msra.mxu0 %v3454
    %3695 = vmatprep.subr.bf16.mxu0 %v3463
    %3696 = vmatpush1.bf16.msra.mxu0 %v3462
    %3697 = vmatprep.subr.bf16.mxu0 %v3471
    %3698 = vmatpush1.bf16.msra.mxu0 %v3470
    %3699 = vmatprep.subr.bf16.mxu0 %v3479
    %3700 = vmatpush1.bf16.msra.mxu0 %v3478
    %3701 = vmatprep.subr.bf16.mxu0 %v3487
    %3702 = vmatpush1.bf16.msra.mxu0 %v3486
    %3703 = vmatprep.subr.bf16.mxu0 %v3495
    %3704 = vmatpush1.bf16.msra.mxu0 %v3494
    %3705 = vmatprep.subr.bf16.mxu0 %v3503
    %3706 = vmatpush1.bf16.msra.mxu0 %v3502
    %3707 = vmatprep.subr.bf16.mxu0 0
    %3708 = vmatpush1.bf16.msra.mxu0 0
    %3709 = vmatprep.subr.bf16.mxu0 0
    %3710 = vmatpush1.bf16.msra.mxu0 0
    %3711 = vmatprep.subr.bf16.mxu0 0
    %3712 = vmatpush1.bf16.msra.mxu0 0
    %3713 = vmatprep.subr.bf16.mxu0 0
    %3714 = vmatpush1.bf16.msra.mxu0 0
    %3715 = vmatprep.subr.bf16.mxu0 0
    %3716 = vmatpush1.bf16.msra.mxu0 0
    %3717 = vmatprep.subr.bf16.mxu0 0
    %3718 = vmatpush1.bf16.msra.mxu0 0
    %3719 = vmatprep.subr.bf16.mxu0 0
    %3720 = vmatpush1.bf16.msra.mxu0 0
    %3721 = vmatprep.subr.bf16.mxu0 0
    %3722 = vmatpush1.bf16.msra.mxu0 0
    %3723 = vmatprep.mubr.bf16.mxu0 0
    %3724 = vmatmul.mubr.bf16.gmra.mrb[0].mxu0 %v3141
    %v3725 = vpop.f32.mrb[0].mxu0
    %v3726 = vadd.f32 %v3235, %v3725
    %v3727 = vpop.f32.mrb[0].mxu0
    %v3728 = vadd.f32 %v3239, %v3727
    %v3729 = vpop.f32.mrb[0].mxu0
    %v3730 = vpop.f32.mrb[0].mxu0
    %3731 = vdwg.mxu0
    %v3732 = vmax.f32 %v3603, 0.0
    %v3733 = vmax.f32 %v3605, 0.0
    %v3734 = vmax.f32 %v3644, 0.0
    %v3735 = vmax.f32 %v3646, 0.0
    %v3736 = vmax.f32 %v3685, 0.0
    %v3737 = vmax.f32 %v3687, 0.0
    %v3738 = vmax.f32 %v3726, 0.0
    %v3739 = vmax.f32 %v3728, 0.0
    %v3740 = vpack.c.bf16 %v3732, %v3732
    %v3741 = vpack.c.bf16 %v3733, %v3733
    %v3742 = vpack.c.bf16 %v3734, %v3734
    %v3743 = vpack.c.bf16 %v3735, %v3735
    %v3744 = vpack.c.bf16 %v3736, %v3736
    %v3745 = vpack.c.bf16 %v3737, %v3737
    %v3746 = vpack.c.bf16 %v3738, %v3738
    %v3747 = vpack.c.bf16 %v3739, %v3739
    %v3748 = vld [vmem:[#allocation13] sm:$0xff]
    %v3749 = vld [vmem:[#allocation13 + $0x8] sm:$0xff]
    %v3750 = vld [vmem:[#allocation13 + $0x10] sm:$0xff]
    %v3751 = vld [vmem:[#allocation13 + $0x18] sm:$0xff]
    %v3752 = vld [vmem:[#allocation13 + $0x20] sm:$0xff]
    %v3753 = vld [vmem:[#allocation13 + $0x28] sm:$0xff]
    %v3754 = vld [vmem:[#allocation13 + $0x30] sm:$0xff]
    %v3755 = vld [vmem:[#allocation13 + $0x38] sm:$0xff]
    %v3756 = vld [vmem:[#allocation13 + $0x40] sm:$0xff]
    %v3757 = vld [vmem:[#allocation13 + $0x48] sm:$0xff]
    %v3758 = vld [vmem:[#allocation13 + $0x50] sm:$0xff]
    %v3759 = vld [vmem:[#allocation13 + $0x58] sm:$0xff]
    %v3760 = vld [vmem:[#allocation13 + $0x60] sm:$0xff]
    %v3761 = vld [vmem:[#allocation13 + $0x68] sm:$0xff]
    %v3762 = vld [vmem:[#allocation13 + $0x70] sm:$0xff]
    %v3763 = vld [vmem:[#allocation13 + $0x78] sm:$0xff]
    %v3764 = vld [vmem:[#allocation13 + $0x80] sm:$0xff]
    %v3765 = vld [vmem:[#allocation13 + $0x88] sm:$0xff]
    %v3766 = vld [vmem:[#allocation13 + $0x90] sm:$0xff]
    %v3767 = vld [vmem:[#allocation13 + $0x98] sm:$0xff]
    %v3768 = vld [vmem:[#allocation13 + $0xa0] sm:$0xff]
    %v3769 = vld [vmem:[#allocation13 + $0xa8] sm:$0xff]
    %v3770 = vld [vmem:[#allocation13 + $0xb0] sm:$0xff]
    %v3771 = vld [vmem:[#allocation13 + $0xb8] sm:$0xff]
    %v3772 = vld [vmem:[#allocation13 + $0xc0] sm:$0xff]
    %v3773 = vld [vmem:[#allocation13 + $0xc8] sm:$0xff]
    %v3774 = vld [vmem:[#allocation13 + $0xd0] sm:$0xff]
    %v3775 = vld [vmem:[#allocation13 + $0xd8] sm:$0xff]
    %v3776 = vld [vmem:[#allocation13 + $0xe0] sm:$0xff]
    %v3777 = vld [vmem:[#allocation13 + $0xe8] sm:$0xff]
    %v3778 = vld [vmem:[#allocation13 + $0xf0] sm:$0xff]
    %v3779 = vld [vmem:[#allocation13 + $0xf8] sm:$0xff]
    %v3780 = vld [vmem:[#allocation13 + $0x100] sm:$0xff]
    %v3781 = vld [vmem:[#allocation13 + $0x108] sm:$0xff]
    %v3782 = vld [vmem:[#allocation13 + $0x110] sm:$0xff]
    %v3783 = vld [vmem:[#allocation13 + $0x118] sm:$0xff]
    %v3784 = vld [vmem:[#allocation13 + $0x120] sm:$0xff]
    %v3785 = vld [vmem:[#allocation13 + $0x128] sm:$0xff]
    %v3786 = vld [vmem:[#allocation13 + $0x130] sm:$0xff]
    %v3787 = vld [vmem:[#allocation13 + $0x138] sm:$0xff]
    %v3788 = vld [vmem:[#allocation13 + $0x140] sm:$0xff]
    %v3789 = vld [vmem:[#allocation13 + $0x148] sm:$0xff]
    %v3790 = vld [vmem:[#allocation13 + $0x150] sm:$0xff]
    %v3791 = vld [vmem:[#allocation13 + $0x158] sm:$0xff]
    %v3792 = vld [vmem:[#allocation13 + $0x160] sm:$0xff]
    %v3793 = vld [vmem:[#allocation13 + $0x168] sm:$0xff]
    %v3794 = vld [vmem:[#allocation13 + $0x170] sm:$0xff]
    %v3795 = vld [vmem:[#allocation13 + $0x178] sm:$0xff]
    %v3796 = vld [vmem:[#allocation13 + $0x180] sm:$0xff]
    %v3797 = vld [vmem:[#allocation13 + $0x188] sm:$0xff]
    %v3798 = vld [vmem:[#allocation13 + $0x190] sm:$0xff]
    %v3799 = vld [vmem:[#allocation13 + $0x198] sm:$0xff]
    %v3800 = vld [vmem:[#allocation13 + $0x1a0] sm:$0xff]
    %v3801 = vld [vmem:[#allocation13 + $0x1a8] sm:$0xff]
    %v3802 = vld [vmem:[#allocation13 + $0x1b0] sm:$0xff]
    %v3803 = vld [vmem:[#allocation13 + $0x1b8] sm:$0xff]
    %v3804 = vld [vmem:[#allocation13 + $0x1c0] sm:$0xff]
    %v3805 = vld [vmem:[#allocation13 + $0x1c8] sm:$0xff]
    %v3806 = vld [vmem:[#allocation13 + $0x1d0] sm:$0xff]
    %v3807 = vld [vmem:[#allocation13 + $0x1d8] sm:$0xff]
    %v3808 = vld [vmem:[#allocation13 + $0x1e0] sm:$0xff]
    %v3809 = vld [vmem:[#allocation13 + $0x1e8] sm:$0xff]
    %v3810 = vld [vmem:[#allocation13 + $0x1f0] sm:$0xff]
    %v3811 = vld [vmem:[#allocation13 + $0x1f8] sm:$0xff]
    %v3812 = vld [vmem:[#allocation13 + $0x200] sm:$0xff]
    %v3813 = vld [vmem:[#allocation13 + $0x208] sm:$0xff]
    %v3814 = vld [vmem:[#allocation13 + $0x210] sm:$0xff]
    %v3815 = vld [vmem:[#allocation13 + $0x218] sm:$0xff]
    %v3816 = vld [vmem:[#allocation13 + $0x220] sm:$0xff]
    %v3817 = vld [vmem:[#allocation13 + $0x228] sm:$0xff]
    %v3818 = vld [vmem:[#allocation13 + $0x230] sm:$0xff]
    %v3819 = vld [vmem:[#allocation13 + $0x238] sm:$0xff]
    %v3820 = vld [vmem:[#allocation13 + $0x240] sm:$0xff]
    %v3821 = vld [vmem:[#allocation13 + $0x248] sm:$0xff]
    %v3822 = vld [vmem:[#allocation13 + $0x250] sm:$0xff]
    %v3823 = vld [vmem:[#allocation13 + $0x258] sm:$0xff]
    %v3824 = vld [vmem:[#allocation13 + $0x260] sm:$0xff]
    %v3825 = vld [vmem:[#allocation13 + $0x268] sm:$0xff]
    %v3826 = vld [vmem:[#allocation13 + $0x270] sm:$0xff]
    %v3827 = vld [vmem:[#allocation13 + $0x278] sm:$0xff]
    %v3828 = vld [vmem:[#allocation13 + $0x280] sm:$0xff]
    %v3829 = vld [vmem:[#allocation13 + $0x288] sm:$0xff]
    %v3830 = vld [vmem:[#allocation13 + $0x290] sm:$0xff]
    %v3831 = vld [vmem:[#allocation13 + $0x298] sm:$0xff]
    %v3832 = vld [vmem:[#allocation13 + $0x2a0] sm:$0xff]
    %v3833 = vld [vmem:[#allocation13 + $0x2a8] sm:$0xff]
    %v3834 = vld [vmem:[#allocation13 + $0x2b0] sm:$0xff]
    %v3835 = vld [vmem:[#allocation13 + $0x2b8] sm:$0xff]
    %v3836 = vld [vmem:[#allocation13 + $0x2c0] sm:$0xff]
    %v3837 = vld [vmem:[#allocation13 + $0x2c8] sm:$0xff]
    %v3838 = vld [vmem:[#allocation13 + $0x2d0] sm:$0xff]
    %v3839 = vld [vmem:[#allocation13 + $0x2d8] sm:$0xff]
    %v3840 = vld [vmem:[#allocation13 + $0x2e0] sm:$0xff]
    %v3841 = vld [vmem:[#allocation13 + $0x2e8] sm:$0xff]
    %v3842 = vld [vmem:[#allocation13 + $0x2f0] sm:$0xff]
    %v3843 = vld [vmem:[#allocation13 + $0x2f8] sm:$0xff]
    %v3844 = vld [vmem:[#allocation13 + $0x300] sm:$0xff]
    %v3845 = vld [vmem:[#allocation13 + $0x308] sm:$0xff]
    %v3846 = vld [vmem:[#allocation13 + $0x310] sm:$0xff]
    %v3847 = vld [vmem:[#allocation13 + $0x318] sm:$0xff]
    %v3848 = vld [vmem:[#allocation13 + $0x320] sm:$0xff]
    %v3849 = vld [vmem:[#allocation13 + $0x328] sm:$0xff]
    %v3850 = vld [vmem:[#allocation13 + $0x330] sm:$0xff]
    %v3851 = vld [vmem:[#allocation13 + $0x338] sm:$0xff]
    %v3852 = vld [vmem:[#allocation13 + $0x340] sm:$0xff]
    %v3853 = vld [vmem:[#allocation13 + $0x348] sm:$0xff]
    %v3854 = vld [vmem:[#allocation13 + $0x350] sm:$0xff]
    %v3855 = vld [vmem:[#allocation13 + $0x358] sm:$0xff]
    %v3856 = vld [vmem:[#allocation13 + $0x360] sm:$0xff]
    %v3857 = vld [vmem:[#allocation13 + $0x368] sm:$0xff]
    %v3858 = vld [vmem:[#allocation13 + $0x370] sm:$0xff]
    %v3859 = vld [vmem:[#allocation13 + $0x378] sm:$0xff]
    %v3860 = vld [vmem:[#allocation13 + $0x380] sm:$0xff]
    %v3861 = vld [vmem:[#allocation13 + $0x388] sm:$0xff]
    %v3862 = vld [vmem:[#allocation13 + $0x390] sm:$0xff]
    %v3863 = vld [vmem:[#allocation13 + $0x398] sm:$0xff]
    %v3864 = vld [vmem:[#allocation13 + $0x3a0] sm:$0xff]
    %v3865 = vld [vmem:[#allocation13 + $0x3a8] sm:$0xff]
    %v3866 = vld [vmem:[#allocation13 + $0x3b0] sm:$0xff]
    %v3867 = vld [vmem:[#allocation13 + $0x3b8] sm:$0xff]
    %v3868 = vld [vmem:[#allocation13 + $0x3c0] sm:$0xff]
    %v3869 = vld [vmem:[#allocation13 + $0x3c8] sm:$0xff]
    %v3870 = vld [vmem:[#allocation13 + $0x3d0] sm:$0xff]
    %v3871 = vld [vmem:[#allocation13 + $0x3d8] sm:$0xff]
    %v3872 = vld [vmem:[#allocation13 + $0x3e0] sm:$0xff]
    %v3873 = vld [vmem:[#allocation13 + $0x3e8] sm:$0xff]
    %v3874 = vld [vmem:[#allocation13 + $0x3f0] sm:$0xff]
    %v3875 = vld [vmem:[#allocation13 + $0x3f8] sm:$0xff]
    %v3876 = vld [vmem:[%s14] sm:$0xf]
    %v3878 = vlaneseq
    %v3879 = vshrl.u32 %v3878, 7
    %v3880 = vsub.s32 0, %v3879
    %v3881 = vrot.slane %v3876, %v3880
    %v3882 = vlaneseq
    %v3883 = vshrl.u32 %v3882, 7
    %v3884 = vsub.s32 1, %v3883
    %v3885 = vrot.slane %v3876, %v3884
    %v3886 = vlaneseq
    %v3887 = vshrl.u32 %v3886, 7
    %v3888 = vsub.s32 2, %v3887
    %v3889 = vrot.slane %v3876, %v3888
    %v3890 = vlaneseq
    %v3891 = vshrl.u32 %v3890, 7
    %v3892 = vsub.s32 3, %v3891
    %v3893 = vrot.slane %v3876, %v3892
    %v4026 = vunpack.c.l.b16 %v3748
    %v4027 = vunpack.c.h.b16 %v3748
    %v4028 = vunpack.c.l.b16 %v3749
    %v4029 = vunpack.c.h.b16 %v3749
    %v4030 = vunpack.c.l.b16 %v3750
    %v4031 = vunpack.c.h.b16 %v3750
    %v4032 = vunpack.c.l.b16 %v3751
    %v4033 = vunpack.c.h.b16 %v3751
    %v4034 = vunpack.c.l.b16 %v3752
    %v4035 = vunpack.c.h.b16 %v3752
    %v4036 = vunpack.c.l.b16 %v3753
    %v4037 = vunpack.c.h.b16 %v3753
    %v4038 = vunpack.c.l.b16 %v3754
    %v4039 = vunpack.c.h.b16 %v3754
    %v4040 = vunpack.c.l.b16 %v3755
    %v4041 = vunpack.c.h.b16 %v3755
    %v4042 = vunpack.c.l.b16 %v3756
    %v4043 = vunpack.c.h.b16 %v3756
    %v4044 = vunpack.c.l.b16 %v3757
    %v4045 = vunpack.c.h.b16 %v3757
    %v4046 = vunpack.c.l.b16 %v3758
    %v4047 = vunpack.c.h.b16 %v3758
    %v4048 = vunpack.c.l.b16 %v3759
    %v4049 = vunpack.c.h.b16 %v3759
    %v4050 = vunpack.c.l.b16 %v3760
    %v4051 = vunpack.c.h.b16 %v3760
    %v4052 = vunpack.c.l.b16 %v3761
    %v4053 = vunpack.c.h.b16 %v3761
    %v4054 = vunpack.c.l.b16 %v3762
    %v4055 = vunpack.c.h.b16 %v3762
    %v4056 = vunpack.c.l.b16 %v3763
    %v4057 = vunpack.c.h.b16 %v3763
    %v4058 = vunpack.c.l.b16 %v3764
    %v4059 = vunpack.c.h.b16 %v3764
    %v4060 = vunpack.c.l.b16 %v3765
    %v4061 = vunpack.c.h.b16 %v3765
    %v4062 = vunpack.c.l.b16 %v3766
    %v4063 = vunpack.c.h.b16 %v3766
    %v4064 = vunpack.c.l.b16 %v3767
    %v4065 = vunpack.c.h.b16 %v3767
    %v4066 = vunpack.c.l.b16 %v3768
    %v4067 = vunpack.c.h.b16 %v3768
    %v4068 = vunpack.c.l.b16 %v3769
    %v4069 = vunpack.c.h.b16 %v3769
    %v4070 = vunpack.c.l.b16 %v3770
    %v4071 = vunpack.c.h.b16 %v3770
    %v4072 = vunpack.c.l.b16 %v3771
    %v4073 = vunpack.c.h.b16 %v3771
    %v4074 = vunpack.c.l.b16 %v3772
    %v4075 = vunpack.c.h.b16 %v3772
    %v4076 = vunpack.c.l.b16 %v3773
    %v4077 = vunpack.c.h.b16 %v3773
    %v4078 = vunpack.c.l.b16 %v3774
    %v4079 = vunpack.c.h.b16 %v3774
    %v4080 = vunpack.c.l.b16 %v3775
    %v4081 = vunpack.c.h.b16 %v3775
    %v4082 = vunpack.c.l.b16 %v3776
    %v4083 = vunpack.c.h.b16 %v3776
    %v4084 = vunpack.c.l.b16 %v3777
    %v4085 = vunpack.c.h.b16 %v3777
    %v4086 = vunpack.c.l.b16 %v3778
    %v4087 = vunpack.c.h.b16 %v3778
    %v4088 = vunpack.c.l.b16 %v3779
    %v4089 = vunpack.c.h.b16 %v3779
    %v4090 = vunpack.c.l.b16 %v3780
    %v4091 = vunpack.c.h.b16 %v3780
    %v4092 = vunpack.c.l.b16 %v3781
    %v4093 = vunpack.c.h.b16 %v3781
    %v4094 = vunpack.c.l.b16 %v3782
    %v4095 = vunpack.c.h.b16 %v3782
    %v4096 = vunpack.c.l.b16 %v3783
    %v4097 = vunpack.c.h.b16 %v3783
    %v4098 = vunpack.c.l.b16 %v3784
    %v4099 = vunpack.c.h.b16 %v3784
    %v4100 = vunpack.c.l.b16 %v3785
    %v4101 = vunpack.c.h.b16 %v3785
    %v4102 = vunpack.c.l.b16 %v3786
    %v4103 = vunpack.c.h.b16 %v3786
    %v4104 = vunpack.c.l.b16 %v3787
    %v4105 = vunpack.c.h.b16 %v3787
    %v4106 = vunpack.c.l.b16 %v3788
    %v4107 = vunpack.c.h.b16 %v3788
    %v4108 = vunpack.c.l.b16 %v3789
    %v4109 = vunpack.c.h.b16 %v3789
    %v4110 = vunpack.c.l.b16 %v3790
    %v4111 = vunpack.c.h.b16 %v3790
    %v4112 = vunpack.c.l.b16 %v3791
    %v4113 = vunpack.c.h.b16 %v3791
    %v4114 = vunpack.c.l.b16 %v3792
    %v4115 = vunpack.c.h.b16 %v3792
    %v4116 = vunpack.c.l.b16 %v3793
    %v4117 = vunpack.c.h.b16 %v3793
    %v4118 = vunpack.c.l.b16 %v3794
    %v4119 = vunpack.c.h.b16 %v3794
    %v4120 = vunpack.c.l.b16 %v3795
    %v4121 = vunpack.c.h.b16 %v3795
    %v4122 = vunpack.c.l.b16 %v3796
    %v4123 = vunpack.c.h.b16 %v3796
    %v4124 = vunpack.c.l.b16 %v3797
    %v4125 = vunpack.c.h.b16 %v3797
    %v4126 = vunpack.c.l.b16 %v3798
    %v4127 = vunpack.c.h.b16 %v3798
    %v4128 = vunpack.c.l.b16 %v3799
    %v4129 = vunpack.c.h.b16 %v3799
    %v4130 = vunpack.c.l.b16 %v3800
    %v4131 = vunpack.c.h.b16 %v3800
    %v4132 = vunpack.c.l.b16 %v3801
    %v4133 = vunpack.c.h.b16 %v3801
    %v4134 = vunpack.c.l.b16 %v3802
    %v4135 = vunpack.c.h.b16 %v3802
    %v4136 = vunpack.c.l.b16 %v3803
    %v4137 = vunpack.c.h.b16 %v3803
    %v4138 = vunpack.c.l.b16 %v3804
    %v4139 = vunpack.c.h.b16 %v3804
    %v4140 = vunpack.c.l.b16 %v3805
    %v4141 = vunpack.c.h.b16 %v3805
    %v4142 = vunpack.c.l.b16 %v3806
    %v4143 = vunpack.c.h.b16 %v3806
    %v4144 = vunpack.c.l.b16 %v3807
    %v4145 = vunpack.c.h.b16 %v3807
    %v4146 = vunpack.c.l.b16 %v3808
    %v4147 = vunpack.c.h.b16 %v3808
    %v4148 = vunpack.c.l.b16 %v3809
    %v4149 = vunpack.c.h.b16 %v3809
    %v4150 = vunpack.c.l.b16 %v3810
    %v4151 = vunpack.c.h.b16 %v3810
    %v4152 = vunpack.c.l.b16 %v3811
    %v4153 = vunpack.c.h.b16 %v3811
    %v4154 = vunpack.c.l.b16 %v3812
    %v4155 = vunpack.c.h.b16 %v3812
    %v4156 = vunpack.c.l.b16 %v3813
    %v4157 = vunpack.c.h.b16 %v3813
    %v4158 = vunpack.c.l.b16 %v3814
    %v4159 = vunpack.c.h.b16 %v3814
    %v4160 = vunpack.c.l.b16 %v3815
    %v4161 = vunpack.c.h.b16 %v3815
    %v4162 = vunpack.c.l.b16 %v3816
    %v4163 = vunpack.c.h.b16 %v3816
    %v4164 = vunpack.c.l.b16 %v3817
    %v4165 = vunpack.c.h.b16 %v3817
    %v4166 = vunpack.c.l.b16 %v3818
    %v4167 = vunpack.c.h.b16 %v3818
    %v4168 = vunpack.c.l.b16 %v3819
    %v4169 = vunpack.c.h.b16 %v3819
    %v4170 = vunpack.c.l.b16 %v3820
    %v4171 = vunpack.c.h.b16 %v3820
    %v4172 = vunpack.c.l.b16 %v3821
    %v4173 = vunpack.c.h.b16 %v3821
    %v4174 = vunpack.c.l.b16 %v3822
    %v4175 = vunpack.c.h.b16 %v3822
    %v4176 = vunpack.c.l.b16 %v3823
    %v4177 = vunpack.c.h.b16 %v3823
    %v4178 = vunpack.c.l.b16 %v3824
    %v4179 = vunpack.c.h.b16 %v3824
    %v4180 = vunpack.c.l.b16 %v3825
    %v4181 = vunpack.c.h.b16 %v3825
    %v4182 = vunpack.c.l.b16 %v3826
    %v4183 = vunpack.c.h.b16 %v3826
    %v4184 = vunpack.c.l.b16 %v3827
    %v4185 = vunpack.c.h.b16 %v3827
    %v4186 = vunpack.c.l.b16 %v3828
    %v4187 = vunpack.c.h.b16 %v3828
    %v4188 = vunpack.c.l.b16 %v3829
    %v4189 = vunpack.c.h.b16 %v3829
    %v4190 = vunpack.c.l.b16 %v3830
    %v4191 = vunpack.c.h.b16 %v3830
    %v4192 = vunpack.c.l.b16 %v3831
    %v4193 = vunpack.c.h.b16 %v3831
    %v4194 = vunpack.c.l.b16 %v3832
    %v4195 = vunpack.c.h.b16 %v3832
    %v4196 = vunpack.c.l.b16 %v3833
    %v4197 = vunpack.c.h.b16 %v3833
    %v4198 = vunpack.c.l.b16 %v3834
    %v4199 = vunpack.c.h.b16 %v3834
    %v4200 = vunpack.c.l.b16 %v3835
    %v4201 = vunpack.c.h.b16 %v3835
    %v4202 = vunpack.c.l.b16 %v3836
    %v4203 = vunpack.c.h.b16 %v3836
    %v4204 = vunpack.c.l.b16 %v3837
    %v4205 = vunpack.c.h.b16 %v3837
    %v4206 = vunpack.c.l.b16 %v3838
    %v4207 = vunpack.c.h.b16 %v3838
    %v4208 = vunpack.c.l.b16 %v3839
    %v4209 = vunpack.c.h.b16 %v3839
    %v4210 = vunpack.c.l.b16 %v3840
    %v4211 = vunpack.c.h.b16 %v3840
    %v4212 = vunpack.c.l.b16 %v3841
    %v4213 = vunpack.c.h.b16 %v3841
    %v4214 = vunpack.c.l.b16 %v3842
    %v4215 = vunpack.c.h.b16 %v3842
    %v4216 = vunpack.c.l.b16 %v3843
    %v4217 = vunpack.c.h.b16 %v3843
    %v4218 = vunpack.c.l.b16 %v3844
    %v4219 = vunpack.c.h.b16 %v3844
    %v4220 = vunpack.c.l.b16 %v3845
    %v4221 = vunpack.c.h.b16 %v3845
    %v4222 = vunpack.c.l.b16 %v3846
    %v4223 = vunpack.c.h.b16 %v3846
    %v4224 = vunpack.c.l.b16 %v3847
    %v4225 = vunpack.c.h.b16 %v3847
    %v4226 = vunpack.c.l.b16 %v3848
    %v4227 = vunpack.c.h.b16 %v3848
    %v4228 = vunpack.c.l.b16 %v3849
    %v4229 = vunpack.c.h.b16 %v3849
    %v4230 = vunpack.c.l.b16 %v3850
    %v4231 = vunpack.c.h.b16 %v3850
    %v4232 = vunpack.c.l.b16 %v3851
    %v4233 = vunpack.c.h.b16 %v3851
    %v4234 = vunpack.c.l.b16 %v3852
    %v4235 = vunpack.c.h.b16 %v3852
    %v4236 = vunpack.c.l.b16 %v3853
    %v4237 = vunpack.c.h.b16 %v3853
    %v4238 = vunpack.c.l.b16 %v3854
    %v4239 = vunpack.c.h.b16 %v3854
    %v4240 = vunpack.c.l.b16 %v3855
    %v4241 = vunpack.c.h.b16 %v3855
    %v4242 = vunpack.c.l.b16 %v3856
    %v4243 = vunpack.c.h.b16 %v3856
    %v4244 = vunpack.c.l.b16 %v3857
    %v4245 = vunpack.c.h.b16 %v3857
    %v4246 = vunpack.c.l.b16 %v3858
    %v4247 = vunpack.c.h.b16 %v3858
    %v4248 = vunpack.c.l.b16 %v3859
    %v4249 = vunpack.c.h.b16 %v3859
    %v4250 = vunpack.c.l.b16 %v3860
    %v4251 = vunpack.c.h.b16 %v3860
    %v4252 = vunpack.c.l.b16 %v3861
    %v4253 = vunpack.c.h.b16 %v3861
    %v4254 = vunpack.c.l.b16 %v3862
    %v4255 = vunpack.c.h.b16 %v3862
    %v4256 = vunpack.c.l.b16 %v3863
    %v4257 = vunpack.c.h.b16 %v3863
    %v4258 = vunpack.c.l.b16 %v3864
    %v4259 = vunpack.c.h.b16 %v3864
    %v4260 = vunpack.c.l.b16 %v3865
    %v4261 = vunpack.c.h.b16 %v3865
    %v4262 = vunpack.c.l.b16 %v3866
    %v4263 = vunpack.c.h.b16 %v3866
    %v4264 = vunpack.c.l.b16 %v3867
    %v4265 = vunpack.c.h.b16 %v3867
    %v4266 = vunpack.c.l.b16 %v3868
    %v4267 = vunpack.c.h.b16 %v3868
    %v4268 = vunpack.c.l.b16 %v3869
    %v4269 = vunpack.c.h.b16 %v3869
    %v4270 = vunpack.c.l.b16 %v3870
    %v4271 = vunpack.c.h.b16 %v3870
    %v4272 = vunpack.c.l.b16 %v3871
    %v4273 = vunpack.c.h.b16 %v3871
    %v4274 = vunpack.c.l.b16 %v3872
    %v4275 = vunpack.c.h.b16 %v3872
    %v4276 = vunpack.c.l.b16 %v3873
    %v4277 = vunpack.c.h.b16 %v3873
    %v4278 = vunpack.c.l.b16 %v3874
    %v4279 = vunpack.c.h.b16 %v3874
    %v4280 = vunpack.c.l.b16 %v3875
    %v4281 = vunpack.c.h.b16 %v3875
    %v4282 = vpack.c.b16 %v4030, %v4026
    %v4283 = vpack.c.b16 %v4031, %v4027
    %v4284 = vpack.c.b16 %v4032, %v4028
    %v4285 = vpack.c.b16 %v4033, %v4029
    %v4286 = vpack.c.b16 %v4038, %v4034
    %v4287 = vpack.c.b16 %v4039, %v4035
    %v4288 = vpack.c.b16 %v4040, %v4036
    %v4289 = vpack.c.b16 %v4041, %v4037
    %v4290 = vpack.c.b16 %v4046, %v4042
    %v4291 = vpack.c.b16 %v4047, %v4043
    %v4292 = vpack.c.b16 %v4048, %v4044
    %v4293 = vpack.c.b16 %v4049, %v4045
    %v4294 = vpack.c.b16 %v4054, %v4050
    %v4295 = vpack.c.b16 %v4055, %v4051
    %v4296 = vpack.c.b16 %v4056, %v4052
    %v4297 = vpack.c.b16 %v4057, %v4053
    %v4298 = vpack.c.b16 %v4062, %v4058
    %v4299 = vpack.c.b16 %v4063, %v4059
    %v4300 = vpack.c.b16 %v4064, %v4060
    %v4301 = vpack.c.b16 %v4065, %v4061
    %v4302 = vpack.c.b16 %v4070, %v4066
    %v4303 = vpack.c.b16 %v4071, %v4067
    %v4304 = vpack.c.b16 %v4072, %v4068
    %v4305 = vpack.c.b16 %v4073, %v4069
    %v4306 = vpack.c.b16 %v4078, %v4074
    %v4307 = vpack.c.b16 %v4079, %v4075
    %v4308 = vpack.c.b16 %v4080, %v4076
    %v4309 = vpack.c.b16 %v4081, %v4077
    %v4310 = vpack.c.b16 %v4086, %v4082
    %v4311 = vpack.c.b16 %v4087, %v4083
    %v4312 = vpack.c.b16 %v4088, %v4084
    %v4313 = vpack.c.b16 %v4089, %v4085
    %v4314 = vpack.c.b16 %v4094, %v4090
    %v4315 = vpack.c.b16 %v4095, %v4091
    %v4316 = vpack.c.b16 %v4096, %v4092
    %v4317 = vpack.c.b16 %v4097, %v4093
    %v4318 = vpack.c.b16 %v4102, %v4098
    %v4319 = vpack.c.b16 %v4103, %v4099
    %v4320 = vpack.c.b16 %v4104, %v4100
    %v4321 = vpack.c.b16 %v4105, %v4101
    %v4322 = vpack.c.b16 %v4110, %v4106
    %v4323 = vpack.c.b16 %v4111, %v4107
    %v4324 = vpack.c.b16 %v4112, %v4108
    %v4325 = vpack.c.b16 %v4113, %v4109
    %v4326 = vpack.c.b16 %v4118, %v4114
    %v4327 = vpack.c.b16 %v4119, %v4115
    %v4328 = vpack.c.b16 %v4120, %v4116
    %v4329 = vpack.c.b16 %v4121, %v4117
    %v4330 = vpack.c.b16 %v4126, %v4122
    %v4331 = vpack.c.b16 %v4127, %v4123
    %v4332 = vpack.c.b16 %v4128, %v4124
    %v4333 = vpack.c.b16 %v4129, %v4125
    %v4334 = vpack.c.b16 %v4134, %v4130
    %v4335 = vpack.c.b16 %v4135, %v4131
    %v4336 = vpack.c.b16 %v4136, %v4132
    %v4337 = vpack.c.b16 %v4137, %v4133
    %v4338 = vpack.c.b16 %v4142, %v4138
    %v4339 = vpack.c.b16 %v4143, %v4139
    %v4340 = vpack.c.b16 %v4144, %v4140
    %v4341 = vpack.c.b16 %v4145, %v4141
    %v4342 = vpack.c.b16 %v4150, %v4146
    %v4343 = vpack.c.b16 %v4151, %v4147
    %v4344 = vpack.c.b16 %v4152, %v4148
    %v4345 = vpack.c.b16 %v4153, %v4149
    %v4346 = vpack.c.b16 %v4158, %v4154
    %v4347 = vpack.c.b16 %v4159, %v4155
    %v4348 = vpack.c.b16 %v4160, %v4156
    %v4349 = vpack.c.b16 %v4161, %v4157
    %v4350 = vpack.c.b16 %v4166, %v4162
    %v4351 = vpack.c.b16 %v4167, %v4163
    %v4352 = vpack.c.b16 %v4168, %v4164
    %v4353 = vpack.c.b16 %v4169, %v4165
    %v4354 = vpack.c.b16 %v4174, %v4170
    %v4355 = vpack.c.b16 %v4175, %v4171
    %v4356 = vpack.c.b16 %v4176, %v4172
    %v4357 = vpack.c.b16 %v4177, %v4173
    %v4358 = vpack.c.b16 %v4182, %v4178
    %v4359 = vpack.c.b16 %v4183, %v4179
    %v4360 = vpack.c.b16 %v4184, %v4180
    %v4361 = vpack.c.b16 %v4185, %v4181
    %v4362 = vpack.c.b16 %v4190, %v4186
    %v4363 = vpack.c.b16 %v4191, %v4187
    %v4364 = vpack.c.b16 %v4192, %v4188
    %v4365 = vpack.c.b16 %v4193, %v4189
    %v4366 = vpack.c.b16 %v4198, %v4194
    %v4367 = vpack.c.b16 %v4199, %v4195
    %v4368 = vpack.c.b16 %v4200, %v4196
    %v4369 = vpack.c.b16 %v4201, %v4197
    %v4370 = vpack.c.b16 %v4206, %v4202
    %v4371 = vpack.c.b16 %v4207, %v4203
    %v4372 = vpack.c.b16 %v4208, %v4204
    %v4373 = vpack.c.b16 %v4209, %v4205
    %v4374 = vpack.c.b16 %v4214, %v4210
    %v4375 = vpack.c.b16 %v4215, %v4211
    %v4376 = vpack.c.b16 %v4216, %v4212
    %v4377 = vpack.c.b16 %v4217, %v4213
    %v4378 = vpack.c.b16 %v4222, %v4218
    %v4379 = vpack.c.b16 %v4223, %v4219
    %v4380 = vpack.c.b16 %v4224, %v4220
    %v4381 = vpack.c.b16 %v4225, %v4221
    %v4382 = vpack.c.b16 %v4230, %v4226
    %v4383 = vpack.c.b16 %v4231, %v4227
    %v4384 = vpack.c.b16 %v4232, %v4228
    %v4385 = vpack.c.b16 %v4233, %v4229
    %v4386 = vpack.c.b16 %v4238, %v4234
    %v4387 = vpack.c.b16 %v4239, %v4235
    %v4388 = vpack.c.b16 %v4240, %v4236
    %v4389 = vpack.c.b16 %v4241, %v4237
    %v4390 = vpack.c.b16 %v4246, %v4242
    %v4391 = vpack.c.b16 %v4247, %v4243
    %v4392 = vpack.c.b16 %v4248, %v4244
    %v4393 = vpack.c.b16 %v4249, %v4245
    %v4394 = vpack.c.b16 %v4254, %v4250
    %v4395 = vpack.c.b16 %v4255, %v4251
    %v4396 = vpack.c.b16 %v4256, %v4252
    %v4397 = vpack.c.b16 %v4257, %v4253
    %v4398 = vpack.c.b16 %v4262, %v4258
    %v4399 = vpack.c.b16 %v4263, %v4259
    %v4400 = vpack.c.b16 %v4264, %v4260
    %v4401 = vpack.c.b16 %v4265, %v4261
    %v4402 = vpack.c.b16 %v4270, %v4266
    %v4403 = vpack.c.b16 %v4271, %v4267
    %v4404 = vpack.c.b16 %v4272, %v4268
    %v4405 = vpack.c.b16 %v4273, %v4269
    %v4406 = vpack.c.b16 %v4278, %v4274
    %v4407 = vpack.c.b16 %v4279, %v4275
    %v4408 = vpack.c.b16 %v4280, %v4276
    %v4409 = vpack.c.b16 %v4281, %v4277
    %4538 = vmatprep.subr.bf16.mxu0 %v4283
    %4539 = vmatpush1.bf16.msra.mxu0 %v4282
    %4540 = vmatprep.subr.bf16.mxu0 %v4287
    %4541 = vmatpush1.bf16.msra.mxu0 %v4286
    %4542 = vmatprep.subr.bf16.mxu0 %v4291
    %4543 = vmatpush1.bf16.msra.mxu0 %v4290
    %4544 = vmatprep.subr.bf16.mxu0 %v4295
    %4545 = vmatpush1.bf16.msra.mxu0 %v4294
    %4546 = vmatprep.subr.bf16.mxu0 %v4299
    %4547 = vmatpush1.bf16.msra.mxu0 %v4298
    %4548 = vmatprep.subr.bf16.mxu0 %v4303
    %4549 = vmatpush1.bf16.msra.mxu0 %v4302
    %4550 = vmatprep.subr.bf16.mxu0 %v4307
    %4551 = vmatpush1.bf16.msra.mxu0 %v4306
    %4552 = vmatprep.subr.bf16.mxu0 %v4311
    %4553 = vmatpush1.bf16.msra.mxu0 %v4310
    %4554 = vmatprep.subr.bf16.mxu0 %v4315
    %4555 = vmatpush1.bf16.msra.mxu0 %v4314
    %4556 = vmatprep.subr.bf16.mxu0 %v4319
    %4557 = vmatpush1.bf16.msra.mxu0 %v4318
    %4558 = vmatprep.subr.bf16.mxu0 %v4323
    %4559 = vmatpush1.bf16.msra.mxu0 %v4322
    %4560 = vmatprep.subr.bf16.mxu0 %v4327
    %4561 = vmatpush1.bf16.msra.mxu0 %v4326
    %4562 = vmatprep.subr.bf16.mxu0 %v4331
    %4563 = vmatpush1.bf16.msra.mxu0 %v4330
    %4564 = vmatprep.subr.bf16.mxu0 %v4335
    %4565 = vmatpush1.bf16.msra.mxu0 %v4334
    %4566 = vmatprep.subr.bf16.mxu0 %v4339
    %4567 = vmatpush1.bf16.msra.mxu0 %v4338
    %4568 = vmatprep.subr.bf16.mxu0 %v4343
    %4569 = vmatpush1.bf16.msra.mxu0 %v4342
    %4570 = vmatprep.mubr.bf16.mxu0 %v3741
    %4571 = vmatmul.mubr.bf16.gmra.mrb[0].mxu0 %v3740
    %v4572 = vpop.f32.mrb[0].mxu0
    %v4573 = vadd.f32 %v3881, %v4572
    %v4574 = vpop.f32.mrb[0].mxu0
    %v4575 = vadd.f32 %v3885, %v4574
    %v4576 = vpop.f32.mrb[0].mxu0
    %v4577 = vpop.f32.mrb[0].mxu0
    %4578 = vdwg.mxu0
    %4579 = vmatprep.subr.bf16.mxu0 %v4347
    %4580 = vmatpush1.bf16.msra.mxu0 %v4346
    %4581 = vmatprep.subr.bf16.mxu0 %v4351
    %4582 = vmatpush1.bf16.msra.mxu0 %v4350
    %4583 = vmatprep.subr.bf16.mxu0 %v4355
    %4584 = vmatpush1.bf16.msra.mxu0 %v4354
    %4585 = vmatprep.subr.bf16.mxu0 %v4359
    %4586 = vmatpush1.bf16.msra.mxu0 %v4358
    %4587 = vmatprep.subr.bf16.mxu0 %v4363
    %4588 = vmatpush1.bf16.msra.mxu0 %v4362
    %4589 = vmatprep.subr.bf16.mxu0 %v4367
    %4590 = vmatpush1.bf16.msra.mxu0 %v4366
    %4591 = vmatprep.subr.bf16.mxu0 %v4371
    %4592 = vmatpush1.bf16.msra.mxu0 %v4370
    %4593 = vmatprep.subr.bf16.mxu0 %v4375
    %4594 = vmatpush1.bf16.msra.mxu0 %v4374
    %4595 = vmatprep.subr.bf16.mxu0 %v4379
    %4596 = vmatpush1.bf16.msra.mxu0 %v4378
    %4597 = vmatprep.subr.bf16.mxu0 %v4383
    %4598 = vmatpush1.bf16.msra.mxu0 %v4382
    %4599 = vmatprep.subr.bf16.mxu0 %v4387
    %4600 = vmatpush1.bf16.msra.mxu0 %v4386
    %4601 = vmatprep.subr.bf16.mxu0 %v4391
    %4602 = vmatpush1.bf16.msra.mxu0 %v4390
    %4603 = vmatprep.subr.bf16.mxu0 %v4395
    %4604 = vmatpush1.bf16.msra.mxu0 %v4394
    %4605 = vmatprep.subr.bf16.mxu0 %v4399
    %4606 = vmatpush1.bf16.msra.mxu0 %v4398
    %4607 = vmatprep.subr.bf16.mxu0 %v4403
    %4608 = vmatpush1.bf16.msra.mxu0 %v4402
    %4609 = vmatprep.subr.bf16.mxu0 %v4407
    %4610 = vmatpush1.bf16.msra.mxu0 %v4406
    %4611 = vmatprep.mubr.bf16.mxu0 %v3743
    %4612 = vmatmul.mubr.bf16.gmra.mrb[0].mxu0 %v3742
    %v4613 = vpop.f32.mrb[0].mxu0
    %v4614 = vadd.f32 %v4573, %v4613
    %v4615 = vpop.f32.mrb[0].mxu0
    %v4616 = vadd.f32 %v4575, %v4615
    %v4617 = vpop.f32.mrb[0].mxu0
    %v4618 = vpop.f32.mrb[0].mxu0
    %4619 = vdwg.mxu0
    %4620 = vmatprep.subr.bf16.mxu0 %v4285
    %4621 = vmatpush1.bf16.msra.mxu0 %v4284
    %4622 = vmatprep.subr.bf16.mxu0 %v4289
    %4623 = vmatpush1.bf16.msra.mxu0 %v4288
    %4624 = vmatprep.subr.bf16.mxu0 %v4293
    %4625 = vmatpush1.bf16.msra.mxu0 %v4292
    %4626 = vmatprep.subr.bf16.mxu0 %v4297
    %4627 = vmatpush1.bf16.msra.mxu0 %v4296
    %4628 = vmatprep.subr.bf16.mxu0 %v4301
    %4629 = vmatpush1.bf16.msra.mxu0 %v4300
    %4630 = vmatprep.subr.bf16.mxu0 %v4305
    %4631 = vmatpush1.bf16.msra.mxu0 %v4304
    %4632 = vmatprep.subr.bf16.mxu0 %v4309
    %4633 = vmatpush1.bf16.msra.mxu0 %v4308
    %4634 = vmatprep.subr.bf16.mxu0 %v4313
    %4635 = vmatpush1.bf16.msra.mxu0 %v4312
    %4636 = vmatprep.subr.bf16.mxu0 %v4317
    %4637 = vmatpush1.bf16.msra.mxu0 %v4316
    %4638 = vmatprep.subr.bf16.mxu0 %v4321
    %4639 = vmatpush1.bf16.msra.mxu0 %v4320
    %4640 = vmatprep.subr.bf16.mxu0 %v4325
    %4641 = vmatpush1.bf16.msra.mxu0 %v4324
    %4642 = vmatprep.subr.bf16.mxu0 %v4329
    %4643 = vmatpush1.bf16.msra.mxu0 %v4328
    %4644 = vmatprep.subr.bf16.mxu0 %v4333
    %4645 = vmatpush1.bf16.msra.mxu0 %v4332
    %4646 = vmatprep.subr.bf16.mxu0 %v4337
    %4647 = vmatpush1.bf16.msra.mxu0 %v4336
    %4648 = vmatprep.subr.bf16.mxu0 %v4341
    %4649 = vmatpush1.bf16.msra.mxu0 %v4340
    %4650 = vmatprep.subr.bf16.mxu0 %v4345
    %4651 = vmatpush1.bf16.msra.mxu0 %v4344
    %4652 = vmatprep.mubr.bf16.mxu0 %v3741
    %4653 = vmatmul.mubr.bf16.gmra.mrb[0].mxu0 %v3740
    %v4654 = vpop.f32.mrb[0].mxu0
    %v4655 = vadd.f32 %v3889, %v4654
    %v4656 = vpop.f32.mrb[0].mxu0
    %v4657 = vadd.f32 %v3893, %v4656
    %v4658 = vpop.f32.mrb[0].mxu0
    %v4659 = vpop.f32.mrb[0].mxu0
    %4660 = vdwg.mxu0
    %4661 = vmatprep.subr.bf16.mxu0 %v4349
    %4662 = vmatpush1.bf16.msra.mxu0 %v4348
    %4663 = vmatprep.subr.bf16.mxu0 %v4353
    %4664 = vmatpush1.bf16.msra.mxu0 %v4352
    %4665 = vmatprep.subr.bf16.mxu0 %v4357
    %4666 = vmatpush1.bf16.msra.mxu0 %v4356
    %4667 = vmatprep.subr.bf16.mxu0 %v4361
    %4668 = vmatpush1.bf16.msra.mxu0 %v4360
    %4669 = vmatprep.subr.bf16.mxu0 %v4365
    %4670 = vmatpush1.bf16.msra.mxu0 %v4364
    %4671 = vmatprep.subr.bf16.mxu0 %v4369
    %4672 = vmatpush1.bf16.msra.mxu0 %v4368
    %4673 = vmatprep.subr.bf16.mxu0 %v4373
    %4674 = vmatpush1.bf16.msra.mxu0 %v4372
    %4675 = vmatprep.subr.bf16.mxu0 %v4377
    %4676 = vmatpush1.bf16.msra.mxu0 %v4376
    %4677 = vmatprep.subr.bf16.mxu0 %v4381
    %4678 = vmatpush1.bf16.msra.mxu0 %v4380
    %4679 = vmatprep.subr.bf16.mxu0 %v4385
    %4680 = vmatpush1.bf16.msra.mxu0 %v4384
    %4681 = vmatprep.subr.bf16.mxu0 %v4389
    %4682 = vmatpush1.bf16.msra.mxu0 %v4388
    %4683 = vmatprep.subr.bf16.mxu0 %v4393
    %4684 = vmatpush1.bf16.msra.mxu0 %v4392
    %4685 = vmatprep.subr.bf16.mxu0 %v4397
    %4686 = vmatpush1.bf16.msra.mxu0 %v4396
    %4687 = vmatprep.subr.bf16.mxu0 %v4401
    %4688 = vmatpush1.bf16.msra.mxu0 %v4400
    %4689 = vmatprep.subr.bf16.mxu0 %v4405
    %4690 = vmatpush1.bf16.msra.mxu0 %v4404
    %4691 = vmatprep.subr.bf16.mxu0 %v4409
    %4692 = vmatpush1.bf16.msra.mxu0 %v4408
    %4693 = vmatprep.mubr.bf16.mxu0 %v3743
    %4694 = vmatmul.mubr.bf16.gmra.mrb[0].mxu0 %v3742
    %v4695 = vpop.f32.mrb[0].mxu0
    %v4696 = vadd.f32 %v4655, %v4695
    %v4697 = vpop.f32.mrb[0].mxu0
    %v4698 = vadd.f32 %v4657, %v4697
    %v4699 = vpop.f32.mrb[0].mxu0
    %v4700 = vpop.f32.mrb[0].mxu0
    %4701 = vdwg.mxu0
    %4702 = vst [vmem:[#allocation17] sm:$0xff] %v4614
    %4703 = vst [vmem:[#allocation17 + $0x8] sm:$0xff] %v4616
    %4704 = vst [vmem:[#allocation17 + $0x10] sm:$0xff] %v4696
    %4705 = vst [vmem:[#allocation17 + $0x18] sm:$0xff] %v4698
    %v4706 = vld [vmem:[#allocation14] sm:$0xf]
    %v4707 = vld [vmem:[#allocation14 + $0x4] sm:$0xf]
    %v4708 = vld [vmem:[#allocation14 + $0x8] sm:$0xf]
    %v4709 = vld [vmem:[#allocation14 + $0xc] sm:$0xf]
    %v4710 = vld [vmem:[#allocation14 + $0x10] sm:$0xf]
    %v4711 = vld [vmem:[#allocation14 + $0x14] sm:$0xf]
    %v4712 = vld [vmem:[#allocation14 + $0x18] sm:$0xf]
    %v4713 = vld [vmem:[#allocation14 + $0x1c] sm:$0xf]
    %v4714 = vld [vmem:[#allocation14 + $0x20] sm:$0xf]
    %v4715 = vld [vmem:[#allocation14 + $0x24] sm:$0xf]
    %v4716 = vld [vmem:[#allocation14 + $0x28] sm:$0xf]
    %v4717 = vld [vmem:[#allocation14 + $0x2c] sm:$0xf]
    %v4718 = vld [vmem:[#allocation14 + $0x30] sm:$0xf]
    %v4719 = vld [vmem:[#allocation14 + $0x34] sm:$0xf]
    %v4720 = vld [vmem:[#allocation14 + $0x38] sm:$0xf]
    %v4721 = vld [vmem:[#allocation14 + $0x3c] sm:$0xf]
    %v4722 = vld [vmem:[#allocation14 + $0x40] sm:$0xf]
    %v4723 = vld [vmem:[#allocation14 + $0x44] sm:$0xf]
    %v4724 = vld [vmem:[#allocation14 + $0x48] sm:$0xf]
    %v4725 = vld [vmem:[#allocation14 + $0x4c] sm:$0xf]
    %v4726 = vld [vmem:[#allocation14 + $0x50] sm:$0xf]
    %v4727 = vld [vmem:[#allocation14 + $0x54] sm:$0xf]
    %v4728 = vld [vmem:[#allocation14 + $0x58] sm:$0xf]
    %v4729 = vld [vmem:[#allocation14 + $0x5c] sm:$0xf]
    %v4730 = vld [vmem:[#allocation14 + $0x60] sm:$0xf]
    %v4731 = vld [vmem:[#allocation14 + $0x64] sm:$0xf]
    %v4732 = vld [vmem:[#allocation14 + $0x68] sm:$0xf]
    %v4733 = vld [vmem:[#allocation14 + $0x6c] sm:$0xf]
    %v4734 = vld [vmem:[#allocation14 + $0x70] sm:$0xf]
    %v4735 = vld [vmem:[#allocation14 + $0x74] sm:$0xf]
    %v4736 = vld [vmem:[#allocation14 + $0x78] sm:$0xf]
    %v4737 = vld [vmem:[#allocation14 + $0x7c] sm:$0xf]
    %v4738 = vld [vmem:[#allocation14 + $0x80] sm:$0xf]
    %v4739 = vld [vmem:[#allocation14 + $0x84] sm:$0xf]
    %v4740 = vld [vmem:[#allocation14 + $0x88] sm:$0xf]
    %v4741 = vld [vmem:[#allocation14 + $0x8c] sm:$0xf]
    %v4742 = vld [vmem:[#allocation14 + $0x90] sm:$0xf]
    %v4743 = vld [vmem:[#allocation14 + $0x94] sm:$0xf]
    %v4744 = vld [vmem:[#allocation14 + $0x98] sm:$0xf]
    %v4745 = vld [vmem:[#allocation14 + $0x9c] sm:$0xf]
    %v4746 = vld [vmem:[#allocation14 + $0xa0] sm:$0xf]
    %v4747 = vld [vmem:[#allocation14 + $0xa4] sm:$0xf]
    %v4748 = vld [vmem:[#allocation14 + $0xa8] sm:$0xf]
    %v4749 = vld [vmem:[#allocation14 + $0xac] sm:$0xf]
    %v4750 = vld [vmem:[#allocation14 + $0xb0] sm:$0xf]
    %v4751 = vld [vmem:[#allocation14 + $0xb4] sm:$0xf]
    %v4752 = vld [vmem:[#allocation14 + $0xb8] sm:$0xf]
    %v4753 = vld [vmem:[#allocation14 + $0xbc] sm:$0xf]
    %v4754 = vld [vmem:[#allocation14 + $0xc0] sm:$0xf]
    %v4755 = vld [vmem:[#allocation14 + $0xc4] sm:$0xf]
    %v4756 = vld [vmem:[#allocation14 + $0xc8] sm:$0xf]
    %v4757 = vld [vmem:[#allocation14 + $0xcc] sm:$0xf]
    %v4758 = vld [vmem:[#allocation14 + $0xd0] sm:$0xf]
    %v4759 = vld [vmem:[#allocation14 + $0xd4] sm:$0xf]
    %v4760 = vld [vmem:[#allocation14 + $0xd8] sm:$0xf]
    %v4761 = vld [vmem:[#allocation14 + $0xdc] sm:$0xf]
    %v4762 = vld [vmem:[#allocation14 + $0xe0] sm:$0xf]
    %v4763 = vld [vmem:[#allocation14 + $0xe4] sm:$0xf]
    %v4764 = vld [vmem:[#allocation14 + $0xe8] sm:$0xf]
    %v4765 = vld [vmem:[#allocation14 + $0xec] sm:$0xf]
    %v4766 = vld [vmem:[#allocation14 + $0xf0] sm:$0xf]
    %v4767 = vld [vmem:[#allocation14 + $0xf4] sm:$0xf]
    %v4768 = vld [vmem:[#allocation14 + $0xf8] sm:$0xf]
    %v4769 = vld [vmem:[#allocation14 + $0xfc] sm:$0xf]
    %v4770 = vld [vmem:[#allocation14 + $0x100] sm:$0xf]
    %v4771 = vld [vmem:[#allocation14 + $0x104] sm:$0xf]
    %v4772 = vld [vmem:[#allocation14 + $0x108] sm:$0xf]
    %v4773 = vld [vmem:[#allocation14 + $0x10c] sm:$0xf]
    %v4774 = vld [vmem:[#allocation14 + $0x110] sm:$0xf]
    %v4775 = vld [vmem:[#allocation14 + $0x114] sm:$0xf]
    %v4776 = vld [vmem:[#allocation14 + $0x118] sm:$0xf]
    %v4777 = vld [vmem:[#allocation14 + $0x11c] sm:$0xf]
    %v4778 = vld [vmem:[#allocation14 + $0x120] sm:$0xf]
    %v4779 = vld [vmem:[#allocation14 + $0x124] sm:$0xf]
    %v4780 = vld [vmem:[#allocation14 + $0x128] sm:$0xf]
    %v4781 = vld [vmem:[#allocation14 + $0x12c] sm:$0xf]
    %v4782 = vld [vmem:[#allocation14 + $0x130] sm:$0xf]
    %v4783 = vld [vmem:[#allocation14 + $0x134] sm:$0xf]
    %v4784 = vld [vmem:[#allocation14 + $0x138] sm:$0xf]
    %v4785 = vld [vmem:[#allocation14 + $0x13c] sm:$0xf]
    %v4786 = vld [vmem:[#allocation14 + $0x140] sm:$0xf]
    %v4787 = vld [vmem:[#allocation14 + $0x144] sm:$0xf]
    %v4788 = vld [vmem:[#allocation14 + $0x148] sm:$0xf]
    %v4789 = vld [vmem:[#allocation14 + $0x14c] sm:$0xf]
    %v4790 = vld [vmem:[#allocation14 + $0x150] sm:$0xf]
    %v4791 = vld [vmem:[#allocation14 + $0x154] sm:$0xf]
    %v4792 = vld [vmem:[#allocation14 + $0x158] sm:$0xf]
    %v4793 = vld [vmem:[#allocation14 + $0x15c] sm:$0xf]
    %v4794 = vld [vmem:[#allocation14 + $0x160] sm:$0xf]
    %v4795 = vld [vmem:[#allocation14 + $0x164] sm:$0xf]
    %v4796 = vld [vmem:[#allocation14 + $0x168] sm:$0xf]
    %v4797 = vld [vmem:[#allocation14 + $0x16c] sm:$0xf]
    %v4798 = vld [vmem:[#allocation14 + $0x170] sm:$0xf]
    %v4799 = vld [vmem:[#allocation14 + $0x174] sm:$0xf]
    %v4800 = vld [vmem:[#allocation14 + $0x178] sm:$0xf]
    %v4801 = vld [vmem:[#allocation14 + $0x17c] sm:$0xf]
    %v4802 = vld [vmem:[#allocation14 + $0x180] sm:$0xf]
    %v4803 = vld [vmem:[#allocation14 + $0x184] sm:$0xf]
    %v4804 = vld [vmem:[#allocation14 + $0x188] sm:$0xf]
    %v4805 = vld [vmem:[#allocation14 + $0x18c] sm:$0xf]
    %v4806 = vld [vmem:[#allocation14 + $0x190] sm:$0xf]
    %v4807 = vld [vmem:[#allocation14 + $0x194] sm:$0xf]
    %v4808 = vld [vmem:[#allocation14 + $0x198] sm:$0xf]
    %v4809 = vld [vmem:[#allocation14 + $0x19c] sm:$0xf]
    %v4810 = vld [vmem:[#allocation14 + $0x1a0] sm:$0xf]
    %v4811 = vld [vmem:[#allocation14 + $0x1a4] sm:$0xf]
    %v4812 = vld [vmem:[#allocation14 + $0x1a8] sm:$0xf]
    %v4813 = vld [vmem:[#allocation14 + $0x1ac] sm:$0xf]
    %v4814 = vld [vmem:[#allocation14 + $0x1b0] sm:$0xf]
    %v4815 = vld [vmem:[#allocation14 + $0x1b4] sm:$0xf]
    %v4816 = vld [vmem:[#allocation14 + $0x1b8] sm:$0xf]
    %v4817 = vld [vmem:[#allocation14 + $0x1bc] sm:$0xf]
    %v4818 = vld [vmem:[#allocation14 + $0x1c0] sm:$0xf]
    %v4819 = vld [vmem:[#allocation14 + $0x1c4] sm:$0xf]
    %v4820 = vld [vmem:[#allocation14 + $0x1c8] sm:$0xf]
    %v4821 = vld [vmem:[#allocation14 + $0x1cc] sm:$0xf]
    %v4822 = vld [vmem:[#allocation14 + $0x1d0] sm:$0xf]
    %v4823 = vld [vmem:[#allocation14 + $0x1d4] sm:$0xf]
    %v4824 = vld [vmem:[#allocation14 + $0x1d8] sm:$0xf]
    %v4825 = vld [vmem:[#allocation14 + $0x1dc] sm:$0xf]
    %v4826 = vld [vmem:[#allocation14 + $0x1e0] sm:$0xf]
    %v4827 = vld [vmem:[#allocation14 + $0x1e4] sm:$0xf]
    %v4828 = vld [vmem:[#allocation14 + $0x1e8] sm:$0xf]
    %v4829 = vld [vmem:[#allocation14 + $0x1ec] sm:$0xf]
    %v4830 = vld [vmem:[#allocation14 + $0x1f0] sm:$0xf]
    %v4831 = vld [vmem:[#allocation14 + $0x1f4] sm:$0xf]
    %v4832 = vld [vmem:[#allocation14 + $0x1f8] sm:$0xf]
    %v4833 = vld [vmem:[#allocation14 + $0x1fc] sm:$0xf]
    %v4834 = vld [vmem:[#allocation16] sm:$0x1]
    %v4836 = vlaneseq
    %v4837 = vshrl.u32 %v4836, 7
    %v4838 = vsub.s32 0, %v4837
    %v4839 = vrot.slane %v4834, %v4838
    %v4969 = vunpack.c.l.b16 %v4706
    %v4970 = vunpack.c.l.b16 %v4707
    %v4971 = vunpack.c.l.b16 %v4708
    %v4972 = vunpack.c.l.b16 %v4709
    %v4973 = vunpack.c.l.b16 %v4710
    %v4974 = vunpack.c.l.b16 %v4711
    %v4975 = vunpack.c.l.b16 %v4712
    %v4976 = vunpack.c.l.b16 %v4713
    %v4977 = vunpack.c.l.b16 %v4714
    %v4978 = vunpack.c.l.b16 %v4715
    %v4979 = vunpack.c.l.b16 %v4716
    %v4980 = vunpack.c.l.b16 %v4717
    %v4981 = vunpack.c.l.b16 %v4718
    %v4982 = vunpack.c.l.b16 %v4719
    %v4983 = vunpack.c.l.b16 %v4720
    %v4984 = vunpack.c.l.b16 %v4721
    %v4985 = vunpack.c.l.b16 %v4722
    %v4986 = vunpack.c.l.b16 %v4723
    %v4987 = vunpack.c.l.b16 %v4724
    %v4988 = vunpack.c.l.b16 %v4725
    %v4989 = vunpack.c.l.b16 %v4726
    %v4990 = vunpack.c.l.b16 %v4727
    %v4991 = vunpack.c.l.b16 %v4728
    %v4992 = vunpack.c.l.b16 %v4729
    %v4993 = vunpack.c.l.b16 %v4730
    %v4994 = vunpack.c.l.b16 %v4731
    %v4995 = vunpack.c.l.b16 %v4732
    %v4996 = vunpack.c.l.b16 %v4733
    %v4997 = vunpack.c.l.b16 %v4734
    %v4998 = vunpack.c.l.b16 %v4735
    %v4999 = vunpack.c.l.b16 %v4736
    %v5000 = vunpack.c.l.b16 %v4737
    %v5001 = vunpack.c.l.b16 %v4738
    %v5002 = vunpack.c.l.b16 %v4739
    %v5003 = vunpack.c.l.b16 %v4740
    %v5004 = vunpack.c.l.b16 %v4741
    %v5005 = vunpack.c.l.b16 %v4742
    %v5006 = vunpack.c.l.b16 %v4743
    %v5007 = vunpack.c.l.b16 %v4744
    %v5008 = vunpack.c.l.b16 %v4745
    %v5009 = vunpack.c.l.b16 %v4746
    %v5010 = vunpack.c.l.b16 %v4747
    %v5011 = vunpack.c.l.b16 %v4748
    %v5012 = vunpack.c.l.b16 %v4749
    %v5013 = vunpack.c.l.b16 %v4750
    %v5014 = vunpack.c.l.b16 %v4751
    %v5015 = vunpack.c.l.b16 %v4752
    %v5016 = vunpack.c.l.b16 %v4753
    %v5017 = vunpack.c.l.b16 %v4754
    %v5018 = vunpack.c.l.b16 %v4755
    %v5019 = vunpack.c.l.b16 %v4756
    %v5020 = vunpack.c.l.b16 %v4757
    %v5021 = vunpack.c.l.b16 %v4758
    %v5022 = vunpack.c.l.b16 %v4759
    %v5023 = vunpack.c.l.b16 %v4760
    %v5024 = vunpack.c.l.b16 %v4761
    %v5025 = vunpack.c.l.b16 %v4762
    %v5026 = vunpack.c.l.b16 %v4763
    %v5027 = vunpack.c.l.b16 %v4764
    %v5028 = vunpack.c.l.b16 %v4765
    %v5029 = vunpack.c.l.b16 %v4766
    %v5030 = vunpack.c.l.b16 %v4767
    %v5031 = vunpack.c.l.b16 %v4768
    %v5032 = vunpack.c.l.b16 %v4769
    %v5033 = vunpack.c.l.b16 %v4770
    %v5034 = vunpack.c.l.b16 %v4771
    %v5035 = vunpack.c.l.b16 %v4772
    %v5036 = vunpack.c.l.b16 %v4773
    %v5037 = vunpack.c.l.b16 %v4774
    %v5038 = vunpack.c.l.b16 %v4775
    %v5039 = vunpack.c.l.b16 %v4776
    %v5040 = vunpack.c.l.b16 %v4777
    %v5041 = vunpack.c.l.b16 %v4778
    %v5042 = vunpack.c.l.b16 %v4779
    %v5043 = vunpack.c.l.b16 %v4780
    %v5044 = vunpack.c.l.b16 %v4781
    %v5045 = vunpack.c.l.b16 %v4782
    %v5046 = vunpack.c.l.b16 %v4783
    %v5047 = vunpack.c.l.b16 %v4784
    %v5048 = vunpack.c.l.b16 %v4785
    %v5049 = vunpack.c.l.b16 %v4786
    %v5050 = vunpack.c.l.b16 %v4787
    %v5051 = vunpack.c.l.b16 %v4788
    %v5052 = vunpack.c.l.b16 %v4789
    %v5053 = vunpack.c.l.b16 %v4790
    %v5054 = vunpack.c.l.b16 %v4791
    %v5055 = vunpack.c.l.b16 %v4792
    %v5056 = vunpack.c.l.b16 %v4793
    %v5057 = vunpack.c.l.b16 %v4794
    %v5058 = vunpack.c.l.b16 %v4795
    %v5059 = vunpack.c.l.b16 %v4796
    %v5060 = vunpack.c.l.b16 %v4797
    %v5061 = vunpack.c.l.b16 %v4798
    %v5062 = vunpack.c.l.b16 %v4799
    %v5063 = vunpack.c.l.b16 %v4800
    %v5064 = vunpack.c.l.b16 %v4801
    %v5065 = vunpack.c.l.b16 %v4802
    %v5066 = vunpack.c.l.b16 %v4803
    %v5067 = vunpack.c.l.b16 %v4804
    %v5068 = vunpack.c.l.b16 %v4805
    %v5069 = vunpack.c.l.b16 %v4806
    %v5070 = vunpack.c.l.b16 %v4807
    %v5071 = vunpack.c.l.b16 %v4808
    %v5072 = vunpack.c.l.b16 %v4809
    %v5073 = vunpack.c.l.b16 %v4810
    %v5074 = vunpack.c.l.b16 %v4811
    %v5075 = vunpack.c.l.b16 %v4812
    %v5076 = vunpack.c.l.b16 %v4813
    %v5077 = vunpack.c.l.b16 %v4814
    %v5078 = vunpack.c.l.b16 %v4815
    %v5079 = vunpack.c.l.b16 %v4816
    %v5080 = vunpack.c.l.b16 %v4817
    %v5081 = vunpack.c.l.b16 %v4818
    %v5082 = vunpack.c.l.b16 %v4819
    %v5083 = vunpack.c.l.b16 %v4820
    %v5084 = vunpack.c.l.b16 %v4821
    %v5085 = vunpack.c.l.b16 %v4822
    %v5086 = vunpack.c.l.b16 %v4823
    %v5087 = vunpack.c.l.b16 %v4824
    %v5088 = vunpack.c.l.b16 %v4825
    %v5089 = vunpack.c.l.b16 %v4826
    %v5090 = vunpack.c.l.b16 %v4827
    %v5091 = vunpack.c.l.b16 %v4828
    %v5092 = vunpack.c.l.b16 %v4829
    %v5093 = vunpack.c.l.b16 %v4830
    %v5094 = vunpack.c.l.b16 %v4831
    %v5095 = vunpack.c.l.b16 %v4832
    %v5096 = vunpack.c.l.b16 %v4833
    %v5097 = vpack.c.b16 %v4970, %v4969
    %v5098 = vpack.c.b16 %v4972, %v4971
    %v5099 = vpack.c.b16 %v4974, %v4973
    %v5100 = vpack.c.b16 %v4976, %v4975
    %v5101 = vpack.c.b16 %v4978, %v4977
    %v5102 = vpack.c.b16 %v4980, %v4979
    %v5103 = vpack.c.b16 %v4982, %v4981
    %v5104 = vpack.c.b16 %v4984, %v4983
    %v5105 = vpack.c.b16 %v4986, %v4985
    %v5106 = vpack.c.b16 %v4988, %v4987
    %v5107 = vpack.c.b16 %v4990, %v4989
    %v5108 = vpack.c.b16 %v4992, %v4991
    %v5109 = vpack.c.b16 %v4994, %v4993
    %v5110 = vpack.c.b16 %v4996, %v4995
    %v5111 = vpack.c.b16 %v4998, %v4997
    %v5112 = vpack.c.b16 %v5000, %v4999
    %v5113 = vpack.c.b16 %v5002, %v5001
    %v5114 = vpack.c.b16 %v5004, %v5003
    %v5115 = vpack.c.b16 %v5006, %v5005
    %v5116 = vpack.c.b16 %v5008, %v5007
    %v5117 = vpack.c.b16 %v5010, %v5009
    %v5118 = vpack.c.b16 %v5012, %v5011
    %v5119 = vpack.c.b16 %v5014, %v5013
    %v5120 = vpack.c.b16 %v5016, %v5015
    %v5121 = vpack.c.b16 %v5018, %v5017
    %v5122 = vpack.c.b16 %v5020, %v5019
    %v5123 = vpack.c.b16 %v5022, %v5021
    %v5124 = vpack.c.b16 %v5024, %v5023
    %v5125 = vpack.c.b16 %v5026, %v5025
    %v5126 = vpack.c.b16 %v5028, %v5027
    %v5127 = vpack.c.b16 %v5030, %v5029
    %v5128 = vpack.c.b16 %v5032, %v5031
    %v5129 = vpack.c.b16 %v5034, %v5033
    %v5130 = vpack.c.b16 %v5036, %v5035
    %v5131 = vpack.c.b16 %v5038, %v5037
    %v5132 = vpack.c.b16 %v5040, %v5039
    %v5133 = vpack.c.b16 %v5042, %v5041
    %v5134 = vpack.c.b16 %v5044, %v5043
    %v5135 = vpack.c.b16 %v5046, %v5045
    %v5136 = vpack.c.b16 %v5048, %v5047
    %v5137 = vpack.c.b16 %v5050, %v5049
    %v5138 = vpack.c.b16 %v5052, %v5051
    %v5139 = vpack.c.b16 %v5054, %v5053
    %v5140 = vpack.c.b16 %v5056, %v5055
    %v5141 = vpack.c.b16 %v5058, %v5057
    %v5142 = vpack.c.b16 %v5060, %v5059
    %v5143 = vpack.c.b16 %v5062, %v5061
    %v5144 = vpack.c.b16 %v5064, %v5063
    %v5145 = vpack.c.b16 %v5066, %v5065
    %v5146 = vpack.c.b16 %v5068, %v5067
    %v5147 = vpack.c.b16 %v5070, %v5069
    %v5148 = vpack.c.b16 %v5072, %v5071
    %v5149 = vpack.c.b16 %v5074, %v5073
    %v5150 = vpack.c.b16 %v5076, %v5075
    %v5151 = vpack.c.b16 %v5078, %v5077
    %v5152 = vpack.c.b16 %v5080, %v5079
    %v5153 = vpack.c.b16 %v5082, %v5081
    %v5154 = vpack.c.b16 %v5084, %v5083
    %v5155 = vpack.c.b16 %v5086, %v5085
    %v5156 = vpack.c.b16 %v5088, %v5087
    %v5157 = vpack.c.b16 %v5090, %v5089
    %v5158 = vpack.c.b16 %v5092, %v5091
    %v5159 = vpack.c.b16 %v5094, %v5093
    %v5160 = vpack.c.b16 %v5096, %v5095
    %5225 = vmatprep.subr.bf16.mxu0 0
    %5226 = vmatpush1.bf16.msra.mxu0 %v5097
    %5227 = vmatprep.subr.bf16.mxu0 0
    %5228 = vmatpush1.bf16.msra.mxu0 %v5098
    %5229 = vmatprep.subr.bf16.mxu0 0
    %5230 = vmatpush1.bf16.msra.mxu0 %v5099
    %5231 = vmatprep.subr.bf16.mxu0 0
    %5232 = vmatpush1.bf16.msra.mxu0 %v5100
    %5233 = vmatprep.subr.bf16.mxu0 0
    %5234 = vmatpush1.bf16.msra.mxu0 %v5101
    %5235 = vmatprep.subr.bf16.mxu0 0
    %5236 = vmatpush1.bf16.msra.mxu0 %v5102
    %5237 = vmatprep.subr.bf16.mxu0 0
    %5238 = vmatpush1.bf16.msra.mxu0 %v5103
    %5239 = vmatprep.subr.bf16.mxu0 0
    %5240 = vmatpush1.bf16.msra.mxu0 %v5104
    %5241 = vmatprep.subr.bf16.mxu0 0
    %5242 = vmatpush1.bf16.msra.mxu0 %v5105
    %5243 = vmatprep.subr.bf16.mxu0 0
    %5244 = vmatpush1.bf16.msra.mxu0 %v5106
    %5245 = vmatprep.subr.bf16.mxu0 0
    %5246 = vmatpush1.bf16.msra.mxu0 %v5107
    %5247 = vmatprep.subr.bf16.mxu0 0
    %5248 = vmatpush1.bf16.msra.mxu0 %v5108
    %5249 = vmatprep.subr.bf16.mxu0 0
    %5250 = vmatpush1.bf16.msra.mxu0 %v5109
    %5251 = vmatprep.subr.bf16.mxu0 0
    %5252 = vmatpush1.bf16.msra.mxu0 %v5110
    %5253 = vmatprep.subr.bf16.mxu0 0
    %5254 = vmatpush1.bf16.msra.mxu0 %v5111
    %5255 = vmatprep.subr.bf16.mxu0 0
    %5256 = vmatpush1.bf16.msra.mxu0 %v5112
    %5257 = vmatprep.mubr.bf16.mxu0 %v3741
    %5258 = vmatmul.mubr.bf16.gmra.mrb[0].mxu0 %v3740
    %v5259 = vpop.f32.mrb[0].mxu0
    %v5260 = vadd.f32 %v4839, %v5259
    %v5261 = vpop.f32.mrb[0].mxu0
    %v5262 = vpop.f32.mrb[0].mxu0
    %v5263 = vpop.f32.mrb[0].mxu0
    %5264 = vdwg.mxu0
    %5265 = vmatprep.subr.bf16.mxu0 0
    %5266 = vmatpush1.bf16.msra.mxu0 %v5113
    %5267 = vmatprep.subr.bf16.mxu0 0
    %5268 = vmatpush1.bf16.msra.mxu0 %v5114
    %5269 = vmatprep.subr.bf16.mxu0 0
    %5270 = vmatpush1.bf16.msra.mxu0 %v5115
    %5271 = vmatprep.subr.bf16.mxu0 0
    %5272 = vmatpush1.bf16.msra.mxu0 %v5116
    %5273 = vmatprep.subr.bf16.mxu0 0
    %5274 = vmatpush1.bf16.msra.mxu0 %v5117
    %5275 = vmatprep.subr.bf16.mxu0 0
    %5276 = vmatpush1.bf16.msra.mxu0 %v5118
    %5277 = vmatprep.subr.bf16.mxu0 0
    %5278 = vmatpush1.bf16.msra.mxu0 %v5119
    %5279 = vmatprep.subr.bf16.mxu0 0
    %5280 = vmatpush1.bf16.msra.mxu0 %v5120
    %5281 = vmatprep.subr.bf16.mxu0 0
    %5282 = vmatpush1.bf16.msra.mxu0 %v5121
    %5283 = vmatprep.subr.bf16.mxu0 0
    %5284 = vmatpush1.bf16.msra.mxu0 %v5122
    %5285 = vmatprep.subr.bf16.mxu0 0
    %5286 = vmatpush1.bf16.msra.mxu0 %v5123
    %5287 = vmatprep.subr.bf16.mxu0 0
    %5288 = vmatpush1.bf16.msra.mxu0 %v5124
    %5289 = vmatprep.subr.bf16.mxu0 0
    %5290 = vmatpush1.bf16.msra.mxu0 %v5125
    %5291 = vmatprep.subr.bf16.mxu0 0
    %5292 = vmatpush1.bf16.msra.mxu0 %v5126
    %5293 = vmatprep.subr.bf16.mxu0 0
    %5294 = vmatpush1.bf16.msra.mxu0 %v5127
    %5295 = vmatprep.subr.bf16.mxu0 0
    %5296 = vmatpush1.bf16.msra.mxu0 %v5128
    %5297 = vmatprep.mubr.bf16.mxu0 %v3743
    %5298 = vmatmul.mubr.bf16.gmra.mrb[0].mxu0 %v3742
    %v5299 = vpop.f32.mrb[0].mxu0
    %v5300 = vadd.f32 %v5260, %v5299
    %v5301 = vpop.f32.mrb[0].mxu0
    %v5302 = vpop.f32.mrb[0].mxu0
    %v5303 = vpop.f32.mrb[0].mxu0
    %5304 = vdwg.mxu0
    %5305 = vmatprep.subr.bf16.mxu0 0
    %5306 = vmatpush1.bf16.msra.mxu0 %v5129
    %5307 = vmatprep.subr.bf16.mxu0 0
    %5308 = vmatpush1.bf16.msra.mxu0 %v5130
    %5309 = vmatprep.subr.bf16.mxu0 0
    %5310 = vmatpush1.bf16.msra.mxu0 %v5131
    %5311 = vmatprep.subr.bf16.mxu0 0
    %5312 = vmatpush1.bf16.msra.mxu0 %v5132
    %5313 = vmatprep.subr.bf16.mxu0 0
    %5314 = vmatpush1.bf16.msra.mxu0 %v5133
    %5315 = vmatprep.subr.bf16.mxu0 0
    %5316 = vmatpush1.bf16.msra.mxu0 %v5134
    %5317 = vmatprep.subr.bf16.mxu0 0
    %5318 = vmatpush1.bf16.msra.mxu0 %v5135
    %5319 = vmatprep.subr.bf16.mxu0 0
    %5320 = vmatpush1.bf16.msra.mxu0 %v5136
    %5321 = vmatprep.subr.bf16.mxu0 0
    %5322 = vmatpush1.bf16.msra.mxu0 %v5137
    %5323 = vmatprep.subr.bf16.mxu0 0
    %5324 = vmatpush1.bf16.msra.mxu0 %v5138
    %5325 = vmatprep.subr.bf16.mxu0 0
    %5326 = vmatpush1.bf16.msra.mxu0 %v5139
    %5327 = vmatprep.subr.bf16.mxu0 0
    %5328 = vmatpush1.bf16.msra.mxu0 %v5140
    %5329 = vmatprep.subr.bf16.mxu0 0
    %5330 = vmatpush1.bf16.msra.mxu0 %v5141
    %5331 = vmatprep.subr.bf16.mxu0 0
    %5332 = vmatpush1.bf16.msra.mxu0 %v5142
    %5333 = vmatprep.subr.bf16.mxu0 0
    %5334 = vmatpush1.bf16.msra.mxu0 %v5143
    %5335 = vmatprep.subr.bf16.mxu0 0
    %5336 = vmatpush1.bf16.msra.mxu0 %v5144
    %5337 = vmatprep.mubr.bf16.mxu0 %v3745
    %5338 = vmatmul.mubr.bf16.gmra.mrb[0].mxu0 %v3744
    %v5339 = vpop.f32.mrb[0].mxu0
    %v5340 = vadd.f32 %v5300, %v5339
    %v5341 = vpop.f32.mrb[0].mxu0
    %v5342 = vpop.f32.mrb[0].mxu0
    %v5343 = vpop.f32.mrb[0].mxu0
    %5344 = vdwg.mxu0
    %5345 = vmatprep.subr.bf16.mxu0 0
    %5346 = vmatpush1.bf16.msra.mxu0 %v5145
    %5347 = vmatprep.subr.bf16.mxu0 0
    %5348 = vmatpush1.bf16.msra.mxu0 %v5146
    %5349 = vmatprep.subr.bf16.mxu0 0
    %5350 = vmatpush1.bf16.msra.mxu0 %v5147
    %5351 = vmatprep.subr.bf16.mxu0 0
    %5352 = vmatpush1.bf16.msra.mxu0 %v5148
    %5353 = vmatprep.subr.bf16.mxu0 0
    %5354 = vmatpush1.bf16.msra.mxu0 %v5149
    %5355 = vmatprep.subr.bf16.mxu0 0
    %5356 = vmatpush1.bf16.msra.mxu0 %v5150
    %5357 = vmatprep.subr.bf16.mxu0 0
    %5358 = vmatpush1.bf16.msra.mxu0 %v5151
    %5359 = vmatprep.subr.bf16.mxu0 0
    %5360 = vmatpush1.bf16.msra.mxu0 %v5152
    %5361 = vmatprep.subr.bf16.mxu0 0
    %5362 = vmatpush1.bf16.msra.mxu0 %v5153
    %5363 = vmatprep.subr.bf16.mxu0 0
    %5364 = vmatpush1.bf16.msra.mxu0 %v5154
    %5365 = vmatprep.subr.bf16.mxu0 0
    %5366 = vmatpush1.bf16.msra.mxu0 %v5155
    %5367 = vmatprep.subr.bf16.mxu0 0
    %5368 = vmatpush1.bf16.msra.mxu0 %v5156
    %5369 = vmatprep.subr.bf16.mxu0 0
    %5370 = vmatpush1.bf16.msra.mxu0 %v5157
    %5371 = vmatprep.subr.bf16.mxu0 0
    %5372 = vmatpush1.bf16.msra.mxu0 %v5158
    %5373 = vmatprep.subr.bf16.mxu0 0
    %5374 = vmatpush1.bf16.msra.mxu0 %v5159
    %5375 = vmatprep.subr.bf16.mxu0 0
    %5376 = vmatpush1.bf16.msra.mxu0 %v5160
    %5377 = vmatprep.mubr.bf16.mxu0 %v3747
    %5378 = vmatmul.mubr.bf16.gmra.mrb[0].mxu0 %v3746
    %v5379 = vpop.f32.mrb[0].mxu0
    %v5380 = vadd.f32 %v5340, %v5379
    %v5381 = vpop.f32.mrb[0].mxu0
    %v5382 = vpop.f32.mrb[0].mxu0
    %v5383 = vpop.f32.mrb[0].mxu0
    %5384 = vdwg.mxu0
    %vm5385 = vcmp.eq.s32.totalorder %v322, 79
    %v5386 = vxor.u32 %v5380, 2147483648
    %v5387 = vmul.f32 %v5386, 1.442695
    %v5388 = vpow.pop %v5387
    %v5389 = vadd.f32 %v5388, 1.0
    %v5390 = vrcp.pop %v5389
    %v5391 = vmul.f32 1.0, %v5390
    %v5392 = vsel %vm5385, %v5391, %v5380
    %5393 = vst [vmem:[%s18] sm:$0xff] %v5392
    // Predicated region
    $region106: #{content_generator_forward.1} parent=1 // pred_check
      _
    $region107: #{content_generator_forward.1} parent=1 // pred_check_branch
      %5395 = sbr.rel (0) target = $region109
    $region108: #{content_generator_forward.1} parent=1 // pred_region
      %s5397 = ssub.s32 512, 512
      %5398 = vsyncadd [#allocation4], %s5397
      %s5400 = sshll.u32 [#allocation17], 4
      %s5401 = int_to_ptr.vmem [resolvable:$true] %s5400
      %5403 = dma.vmem_to_hbm [thread:$0]  %s5401, 512, %s17, [#allocation4]
    $region109: #{content_generator_forward.1} parent=1 // pred_fallthru
      _
    // Predicated region
    $region110: #{content_generator_forward.1} parent=1 // pred_check
      _
    $region111: #{content_generator_forward.1} parent=1 // pred_check_branch
      %5405 = sbr.rel (0) target = $region113
    $region112: #{content_generator_forward.1} parent=1 // pred_region
      _
    $region113: #{content_generator_forward.1} parent=1 // pred_fallthru
      _
    // Predicated region
    $region114: #{content_generator_forward.1} parent=1 // pred_check
      _
    $region115: #{content_generator_forward.1} parent=1 // pred_check_branch
      %5407 = sbr.rel (0) target = $region117
    $region116: #{content_generator_forward.1} parent=1 // pred_region
      %5408 = dma.done [#allocation4], 512
    $region117: #{content_generator_forward.1} parent=1 // pred_fallthru
      _
    // Predicated region
    $region118: #{content_generator_forward.1} parent=1 // pred_check
      _
    $region119: #{content_generator_forward.1} parent=1 // pred_check_branch
      %5410 = sbr.rel (0) target = $region121
    $region120: #{content_generator_forward.1} parent=1 // pred_region
      _
    $region121: #{content_generator_forward.1} parent=1 // pred_fallthru
      _
    %5411 = vsyncpa [#allocation3], 1
    %5412 = vsyncpa [#allocation6], 1
    %5413 = vsyncpa [#allocation9], 1
    %5414 = vsyncpa [#allocation12], 1
    %5415 = vsyncpa [#allocation15], 1
    %5416 = vsyncpa [#allocation4], 1

</llo_original>
